<compile_context>
chip_gen: v7x
topology: tpu7x:2x2x1
jax: 0.10.0
libtpu: 0.0.40
codegen_flags: <defaults>
</compile_context>

<pallas_src>
import jax
import jax.numpy as jnp
from jax.experimental import pallas as pl
from jax.experimental.pallas import tpu as pltpu

# ---------------- scaled-down albert-base-v2 config ----------------
VOCAB = 100
TYPE_VOCAB = 2
MAX_POS = 32
EMB = 16              # albert embedding_size (128 in the real model)
HID = 32              # hidden_size (768 in the real model)
HEADS = 4
HEAD_DIM = HID // HEADS
FFN = 64              # intermediate_size
LAYERS = 2            # depth (single shared layer applied LAYERS times)
N_CLASSES = 3
OUT_PAD = 128         # lane-dense padded classifier width (sliced to N_CLASSES outside)
LORA_R = 8            # (64 in the module) scaled to the small hidden size
LORA_ALPHA = 8
LORA_SCALE = LORA_ALPHA / (LORA_R ** 0.5)   # use_rslora=True scaling
LN_EPS = 1e-12
QKVL = 3 * HID + 2 * LORA_R                 # concatenated q|k|v|loraA_k|loraA_v width


# ---------------- fused Pallas kernel (one grid step == one batch element) ----
def _albert_fused_kernel(
    emb_ref, mask_ref, noise_ref,
    emb_ln_g, emb_ln_b, map_w, map_b,
    w_qkvl, b_qkvl, lora_kb, lora_vb,
    o_w, o_b, attn_ln_g, attn_ln_b,
    ffn_w, ffn_b, ffo_w, ffo_b,
    out_ln_g, out_ln_b,
    pool_w, pool_b, cls_w, cls_b,
    out_ref,
):
    f32 = jnp.float32
    bf16 = jnp.bfloat16

    def ln(x, g_ref, b_ref):                       # f32 layernorm (residual already added)
        mu = jnp.mean(x, axis=-1, keepdims=True)
        xc = x - mu
        var = jnp.mean(xc * xc, axis=-1, keepdims=True)
        return xc * jax.lax.rsqrt(var + LN_EPS) * g_ref[...] + b_ref[...]

    def mm(x, w_ref, b_ref=None):                  # bf16-in / f32-accumulate matmul
        acc = jnp.dot(x.astype(bf16), w_ref[...], preferred_element_type=f32)
        if b_ref is not None:
            acc = acc + b_ref[...]
        return acc

    # embeddings -> LayerNorm -> embedding_hidden_mapping_in
    x = ln(emb_ref[0].astype(f32), emb_ln_g, emb_ln_b)          # (S, EMB)
    h = mm(x, map_w, map_b)                                     # (S, HID) f32
    mask = mask_ref[0]                                          # (1, S) additive mask

    scale = 1.0 / (HEAD_DIM ** 0.5)
    nt = (((1,), (1,)), ((), ()))                               # contract last dims (q @ k^T)

    for _ in range(LAYERS):                                     # shared layer applied LAYERS times
        # fused q|k|v|loraA_k|loraA_v projection: one MXU matmul
        proj = mm(h, w_qkvl, b_qkvl)                            # (S, 3H+2R)
        q = proj[:, 0:HID]
        k = proj[:, HID:2 * HID]
        v = proj[:, 2 * HID:3 * HID]
        ka = proj[:, 3 * HID:3 * HID + LORA_R]
        va = proj[:, 3 * HID + LORA_R:]
        # rsLoRA adapters folded in-kernel (PEFT init: B = 0 -> zero contribution at init)
        k = k + LORA_SCALE * mm(ka, lora_kb)
        v = v + LORA_SCALE * mm(va, lora_vb)

        # attention, per head (static unrolled loop; stats in f32)
        ctx_parts = []
        for hd in range(HEADS):
            sl = slice(hd * HEAD_DIM, (hd + 1) * HEAD_DIM)
            s = jax.lax.dot_general(q[:, sl].astype(bf16), k[:, sl].astype(bf16),
                                    nt, preferred_element_type=f32)       # (S, S)
            s = s * scale + mask
            s = s - jnp.max(s, axis=-1, keepdims=True)
            p = jnp.exp(s)
            p = p * pl.reciprocal(jnp.sum(p, axis=-1, keepdims=True), approx=True)
            ctx_parts.append(jnp.dot(p.astype(bf16), v[:, sl].astype(bf16),
                                     preferred_element_type=f32))         # (S, D)
        ctx = jnp.concatenate(ctx_parts, axis=-1)               # (S, HID)

        # output dense + residual + LayerNorm (fused)
        h = ln(h + mm(ctx, o_w, o_b), attn_ln_g, attn_ln_b)

        # FFN (gelu_new) + residual + LayerNorm (fused)
        ff = mm(h, ffn_w, ffn_b)
        c = 0.7978845608028654  # sqrt(2/pi)
        ff = 0.5 * ff * (1.0 + jnp.tanh(c * (ff + 0.044715 * ff * ff * ff)))
        h = ln(h + mm(ff, ffo_w, ffo_b), out_ln_g, out_ln_b)

    # pooler on the CLS token == `bert_output`
    pooled = jnp.tanh(mm(h[0:1, :], pool_w, pool_b))            # (1, HID)
    pooled = pooled + noise_ref[0]                              # optional gaussian noise (zeros otherwise)
    # TODO(synk): torch.nn.Dropout(p=0.3) with the module's private torch RNG
    # stream is not reproducible in JAX; applied as identity (eval-mode behaviour).
    out_ref[0] = mm(pooled, cls_w, cls_b).astype(out_ref.dtype)  # lane-dense (1, OUT_PAD)


# ---------------- deterministic parameter init ----------------
def init_params(key):
    keys = iter(jax.random.split(key, 64))

    def nrm(shape, std=0.02):
        return (std * jax.random.normal(next(keys), shape)).astype(jnp.float32)

    p = {}
    # embeddings
    p["word_emb"] = nrm((VOCAB, EMB))
    p["pos_emb"] = nrm((MAX_POS, EMB))
    p["type_emb"] = nrm((TYPE_VOCAB, EMB))
    p["emb_ln_g"] = jnp.ones((EMB,), jnp.float32)
    p["emb_ln_b"] = jnp.zeros((EMB,), jnp.float32)
    p["map_w"] = nrm((EMB, HID)); p["map_b"] = jnp.zeros((HID,), jnp.float32)
    # single shared ALBERT layer
    for nm in ("q", "k", "v", "o"):
        p[f"{nm}_w"] = nrm((HID, HID)); p[f"{nm}_b"] = jnp.zeros((HID,), jnp.float32)
    p["attn_ln_g"] = jnp.ones((HID,), jnp.float32); p["attn_ln_b"] = jnp.zeros((HID,), jnp.float32)
    p["ffn_w"] = nrm((HID, FFN)); p["ffn_b"] = jnp.zeros((FFN,), jnp.float32)
    p["ffo_w"] = nrm((FFN, HID)); p["ffo_b"] = jnp.zeros((HID,), jnp.float32)
    p["out_ln_g"] = jnp.ones((HID,), jnp.float32); p["out_ln_b"] = jnp.zeros((HID,), jnp.float32)
    # LoRA adapters on key / value (PEFT default init: A random, B zero)
    for nm in ("k", "v"):
        p[f"lora_{nm}_a"] = nrm((HID, LORA_R), std=1.0 / LORA_R)
        p[f"lora_{nm}_b"] = jnp.zeros((LORA_R, HID), jnp.float32)
    # pooler + classification head
    p["pool_w"] = nrm((HID, HID)); p["pool_b"] = jnp.zeros((HID,), jnp.float32)
    p["cls_w"] = nrm((HID, N_CLASSES)); p["cls_b"] = jnp.zeros((N_CLASSES,), jnp.float32)
    return p


# ---------------- forward pass ----------------
def peft_albert_forward(params, input_ids, attention_mask, token_type_ids,
                        add_noise=None, noise_key=None):
    B, S = input_ids.shape
    pos = jnp.arange(S, dtype=jnp.int32)[None, :]

    # embedding gathers are glue (no clean Pallas gather benefit at this size)
    emb = (jnp.take(params["word_emb"], input_ids, axis=0)
           + jnp.take(params["pos_emb"], pos, axis=0)
           + jnp.take(params["type_emb"], token_type_ids, axis=0)).astype(jnp.float32)  # (B,S,EMB)

    mask_add = ((1.0 - attention_mask.astype(jnp.float32)) * (-1e9)).reshape(B, 1, S)

    if add_noise is not None:
        noise = (add_noise ** 0.5) * jax.random.normal(noise_key, (B, 1, HID), jnp.float32)
    else:
        noise = jnp.zeros((B, 1, HID), jnp.float32)

    bf = lambda w: w.astype(jnp.bfloat16)           # matmul weights travel as bf16
    r1 = lambda v: v.reshape(1, -1).astype(jnp.float32)

    # concatenated q|k|v|loraA_k|loraA_v projection weight (single MXU matmul in-kernel)
    w_qkvl = bf(jnp.concatenate(
        [params["q_w"], params["k_w"], params["v_w"],
         params["lora_k_a"], params["lora_v_a"]], axis=1))                  # (HID, QKVL)
    b_qkvl = r1(jnp.concatenate(
        [params["q_b"], params["k_b"], params["v_b"],
         jnp.zeros((2 * LORA_R,), jnp.float32)], axis=0))

    # lane-dense padded classifier weights
    cls_w = bf(jnp.zeros((HID, OUT_PAD), jnp.float32).at[:, :N_CLASSES].set(params["cls_w"]))
    cls_b = r1(jnp.zeros((OUT_PAD,), jnp.float32).at[:N_CLASSES].set(params["cls_b"]))

    weights = (
        r1(params["emb_ln_g"]), r1(params["emb_ln_b"]),
        bf(params["map_w"]), r1(params["map_b"]),
        w_qkvl, b_qkvl,
        bf(params["lora_k_b"]), bf(params["lora_v_b"]),
        bf(params["o_w"]), r1(params["o_b"]),
        r1(params["attn_ln_g"]), r1(params["attn_ln_b"]),
        bf(params["ffn_w"]), r1(params["ffn_b"]),
        bf(params["ffo_w"]), r1(params["ffo_b"]),
        r1(params["out_ln_g"]), r1(params["out_ln_b"]),
        bf(params["pool_w"]), r1(params["pool_b"]),
        cls_w, cls_b,
    )

    batched_specs = [
        pl.BlockSpec((1, S, EMB), lambda b: (b, 0, 0)),     # emb
        pl.BlockSpec((1, 1, S), lambda b: (b, 0, 0)),       # additive mask
        pl.BlockSpec((1, 1, HID), lambda b: (b, 0, 0)),     # pooled noise
    ]
    # shared weights: constant index maps -> DMA'd once, resident across grid steps
    weight_specs = [pl.BlockSpec(w.shape, lambda b: (0, 0)) for w in weights]

    out = pl.pallas_call(
        _albert_fused_kernel,
        out_shape=jax.ShapeDtypeStruct((B, 1, OUT_PAD), jnp.float32),
        grid=(B,),
        in_specs=batched_specs + weight_specs,
        out_specs=pl.BlockSpec((1, 1, OUT_PAD), lambda b: (b, 0, 0)),
        compiler_params=pltpu.CompilerParams(dimension_semantics=("parallel",)),
    )(emb, mask_add, noise, *weights)

    return out[:, 0, :N_CLASSES]                              # (B, n_classes) f32


if __name__ == "__main__":
    key = jax.random.PRNGKey(0)
    pkey, ikey = jax.random.split(key)
    params = init_params(pkey)

    B, S = 2, 8
    input_ids = jax.random.randint(ikey, (B, S), 0, VOCAB, dtype=jnp.int32)
    attention_mask = jnp.ones((B, S), jnp.int32).at[1, 6:].set(0)
    token_type_ids = jnp.zeros((B, S), jnp.int32)

    logits = peft_albert_forward(params, input_ids, attention_mask, token_type_ids)
    jax.block_until_ready(logits)
    assert logits.shape == (B, N_CLASSES) and logits.dtype == jnp.float32
    print("KERNEL_OK")
</pallas_src>

<mosaic_0001>
module attributes {stable_mosaic.version = 11 : i64} {
  func.func @_albert_fused_kernel(%arg0: i32, %arg1: memref<1x8x16xf32, #tpu.memory_space<vmem>>, %arg2: memref<1x1x8xf32, #tpu.memory_space<vmem>>, %arg3: memref<1x1x32xf32, #tpu.memory_space<vmem>>, %arg4: memref<1x16xf32, #tpu.memory_space<vmem>>, %arg5: memref<1x16xf32, #tpu.memory_space<vmem>>, %arg6: memref<16x32xbf16, #tpu.memory_space<vmem>>, %arg7: memref<1x32xf32, #tpu.memory_space<vmem>>, %arg8: memref<32x112xbf16, #tpu.memory_space<vmem>>, %arg9: memref<1x112xf32, #tpu.memory_space<vmem>>, %arg10: memref<8x32xbf16, #tpu.memory_space<vmem>>, %arg11: memref<8x32xbf16, #tpu.memory_space<vmem>>, %arg12: memref<32x32xbf16, #tpu.memory_space<vmem>>, %arg13: memref<1x32xf32, #tpu.memory_space<vmem>>, %arg14: memref<1x32xf32, #tpu.memory_space<vmem>>, %arg15: memref<1x32xf32, #tpu.memory_space<vmem>>, %arg16: memref<32x64xbf16, #tpu.memory_space<vmem>>, %arg17: memref<1x64xf32, #tpu.memory_space<vmem>>, %arg18: memref<64x32xbf16, #tpu.memory_space<vmem>>, %arg19: memref<1x32xf32, #tpu.memory_space<vmem>>, %arg20: memref<1x32xf32, #tpu.memory_space<vmem>>, %arg21: memref<1x32xf32, #tpu.memory_space<vmem>>, %arg22: memref<32x32xbf16, #tpu.memory_space<vmem>>, %arg23: memref<1x32xf32, #tpu.memory_space<vmem>>, %arg24: memref<32x128xbf16, #tpu.memory_space<vmem>>, %arg25: memref<1x128xf32, #tpu.memory_space<vmem>>, %arg26: memref<1x1x128xf32, #tpu.memory_space<vmem>>) attributes {dimension_semantics = [#tpu.dimension_semantics<parallel>], iteration_bounds = array<i64: 2>, scalar_prefetch = 0 : i64, scratch_operands = 0 : i64, tpu.core_type = #tpu.core_type<tc>, window_params = [{transform_indices = @transform_0, window_bounds = array<i64: 1, 8, 16>}, {transform_indices = @transform_1, window_bounds = array<i64: 1, 1, 8>}, {transform_indices = @transform_2, window_bounds = array<i64: 1, 1, 32>}, {pipeline_mode = #tpu.pipeline_mode<synchronous>, transform_indices = @transform_3, window_bounds = array<i64: 1, 16>}, {pipeline_mode = #tpu.pipeline_mode<synchronous>, transform_indices = @transform_4, window_bounds = array<i64: 1, 16>}, {pipeline_mode = #tpu.pipeline_mode<synchronous>, transform_indices = @transform_5, window_bounds = array<i64: 16, 32>}, {pipeline_mode = #tpu.pipeline_mode<synchronous>, transform_indices = @transform_6, window_bounds = array<i64: 1, 32>}, {pipeline_mode = #tpu.pipeline_mode<synchronous>, transform_indices = @transform_7, window_bounds = array<i64: 32, 112>}, {pipeline_mode = #tpu.pipeline_mode<synchronous>, transform_indices = @transform_8, window_bounds = array<i64: 1, 112>}, {pipeline_mode = #tpu.pipeline_mode<synchronous>, transform_indices = @transform_9, window_bounds = array<i64: 8, 32>}, {pipeline_mode = #tpu.pipeline_mode<synchronous>, transform_indices = @transform_10, window_bounds = array<i64: 8, 32>}, {pipeline_mode = #tpu.pipeline_mode<synchronous>, transform_indices = @transform_11, window_bounds = array<i64: 32, 32>}, {pipeline_mode = #tpu.pipeline_mode<synchronous>, transform_indices = @transform_12, window_bounds = array<i64: 1, 32>}, {pipeline_mode = #tpu.pipeline_mode<synchronous>, transform_indices = @transform_13, window_bounds = array<i64: 1, 32>}, {pipeline_mode = #tpu.pipeline_mode<synchronous>, transform_indices = @transform_14, window_bounds = array<i64: 1, 32>}, {pipeline_mode = #tpu.pipeline_mode<synchronous>, transform_indices = @transform_15, window_bounds = array<i64: 32, 64>}, {pipeline_mode = #tpu.pipeline_mode<synchronous>, transform_indices = @transform_16, window_bounds = array<i64: 1, 64>}, {pipeline_mode = #tpu.pipeline_mode<synchronous>, transform_indices = @transform_17, window_bounds = array<i64: 64, 32>}, {pipeline_mode = #tpu.pipeline_mode<synchronous>, transform_indices = @transform_18, window_bounds = array<i64: 1, 32>}, {pipeline_mode = #tpu.pipeline_mode<synchronous>, transform_indices = @transform_19, window_bounds = array<i64: 1, 32>}, {pipeline_mode = #tpu.pipeline_mode<synchronous>, transform_indices = @transform_20, window_bounds = array<i64: 1, 32>}, {pipeline_mode = #tpu.pipeline_mode<synchronous>, transform_indices = @transform_21, window_bounds = array<i64: 32, 32>}, {pipeline_mode = #tpu.pipeline_mode<synchronous>, transform_indices = @transform_22, window_bounds = array<i64: 1, 32>}, {pipeline_mode = #tpu.pipeline_mode<synchronous>, transform_indices = @transform_23, window_bounds = array<i64: 32, 128>}, {pipeline_mode = #tpu.pipeline_mode<synchronous>, transform_indices = @transform_24, window_bounds = array<i64: 1, 128>}, {transform_indices = @transform_25, window_bounds = array<i64: 1, 1, 128>}]} {
    %c0 = arith.constant 0 : index
    %c0_0 = arith.constant 0 : index
    %c0_1 = arith.constant 0 : index
    %0 = vector.load %arg1[%c0, %c0_0, %c0_1] : memref<1x8x16xf32, #tpu.memory_space<vmem>>, vector<1x8x16xf32>
    %1 = vector.shape_cast %0 : vector<1x8x16xf32> to vector<8x16xf32>
    %cst = arith.constant dense<0.000000e+00> : vector<8xf32>
    %2 = vector.multi_reduction <add>, %1, %cst [1] : vector<8x16xf32> to vector<8xf32>
    %3 = vector.shape_cast %2 : vector<8xf32> to vector<8x1xf32>
    %cst_2 = arith.constant 1.600000e+01 : f32
    %4 = vector.broadcast %cst_2 : f32 to vector<8x1xf32>
    %5 = arith.divf %3, %4 : vector<8x1xf32>
    %6 = vector.broadcast %5 : vector<8x1xf32> to vector<8x16xf32>
    %7 = arith.subf %1, %6 : vector<8x16xf32>
    %8 = arith.mulf %7, %7 : vector<8x16xf32>
    %cst_3 = arith.constant dense<0.000000e+00> : vector<8xf32>
    %9 = vector.multi_reduction <add>, %8, %cst_3 [1] : vector<8x16xf32> to vector<8xf32>
    %10 = vector.shape_cast %9 : vector<8xf32> to vector<8x1xf32>
    %cst_4 = arith.constant 1.600000e+01 : f32
    %11 = vector.broadcast %cst_4 : f32 to vector<8x1xf32>
    %12 = arith.divf %10, %11 : vector<8x1xf32>
    %cst_5 = arith.constant 9.99999996E-13 : f32
    %13 = vector.broadcast %cst_5 : f32 to vector<8x1xf32>
    %14 = arith.addf %12, %13 : vector<8x1xf32>
    %15 = math.rsqrt %14 : vector<8x1xf32>
    %16 = vector.broadcast %15 : vector<8x1xf32> to vector<8x16xf32>
    %17 = arith.mulf %7, %16 : vector<8x16xf32>
    %c0_6 = arith.constant 0 : index
    %c0_7 = arith.constant 0 : index
    %18 = vector.load %arg4[%c0_6, %c0_7] : memref<1x16xf32, #tpu.memory_space<vmem>>, vector<1x16xf32>
    %19 = vector.broadcast %18 : vector<1x16xf32> to vector<8x16xf32>
    %20 = arith.mulf %17, %19 : vector<8x16xf32>
    %c0_8 = arith.constant 0 : index
    %c0_9 = arith.constant 0 : index
    %21 = vector.load %arg5[%c0_8, %c0_9] : memref<1x16xf32, #tpu.memory_space<vmem>>, vector<1x16xf32>
    %22 = vector.broadcast %21 : vector<1x16xf32> to vector<8x16xf32>
    %23 = arith.addf %20, %22 : vector<8x16xf32>
    %24 = arith.truncf %23 : vector<8x16xf32> to vector<8x16xbf16>
    %c0_10 = arith.constant 0 : index
    %c0_11 = arith.constant 0 : index
    %25 = vector.load %arg6[%c0_10, %c0_11] : memref<16x32xbf16, #tpu.memory_space<vmem>>, vector<16x32xbf16>
    %cst_12 = arith.constant dense<0.000000e+00> : vector<8x32xf32>
    %26 = tpu.matmul %24, %25, %cst_12 {dimension_numbers = #tpu.dot_dimension_numbers<[1], [0], [0], [1], [0, 0, 1, 1], [], []>} : vector<8x16xbf16>, vector<16x32xbf16>, vector<8x32xf32> -> vector<8x32xf32>
    %c0_13 = arith.constant 0 : index
    %c0_14 = arith.constant 0 : index
    %27 = vector.load %arg7[%c0_13, %c0_14] : memref<1x32xf32, #tpu.memory_space<vmem>>, vector<1x32xf32>
    %28 = vector.broadcast %27 : vector<1x32xf32> to vector<8x32xf32>
    %29 = arith.addf %26, %28 : vector<8x32xf32>
    %c0_15 = arith.constant 0 : index
    %c0_16 = arith.constant 0 : index
    %c0_17 = arith.constant 0 : index
    %30 = vector.load %arg2[%c0_15, %c0_16, %c0_17] : memref<1x1x8xf32, #tpu.memory_space<vmem>>, vector<1x1x8xf32>
    %31 = vector.shape_cast %30 : vector<1x1x8xf32> to vector<1x8xf32>
    %32 = arith.truncf %29 : vector<8x32xf32> to vector<8x32xbf16>
    %c0_18 = arith.constant 0 : index
    %c0_19 = arith.constant 0 : index
    %33 = vector.load %arg8[%c0_18, %c0_19] : memref<32x112xbf16, #tpu.memory_space<vmem>>, vector<32x112xbf16>
    %cst_20 = arith.constant dense<0.000000e+00> : vector<8x112xf32>
    %34 = tpu.matmul %32, %33, %cst_20 {dimension_numbers = #tpu.dot_dimension_numbers<[1], [0], [0], [1], [0, 0, 1, 1], [], []>} : vector<8x32xbf16>, vector<32x112xbf16>, vector<8x112xf32> -> vector<8x112xf32>
    %c0_21 = arith.constant 0 : index
    %c0_22 = arith.constant 0 : index
    %35 = vector.load %arg9[%c0_21, %c0_22] : memref<1x112xf32, #tpu.memory_space<vmem>>, vector<1x112xf32>
    %36 = vector.broadcast %35 : vector<1x112xf32> to vector<8x112xf32>
    %37 = arith.addf %34, %36 : vector<8x112xf32>
    %38 = vector.extract_strided_slice %37 {offsets = [0, 0], sizes = [8, 32], strides = [1, 1]} : vector<8x112xf32> to vector<8x32xf32>
    %39 = vector.extract_strided_slice %37 {offsets = [0, 32], sizes = [8, 32], strides = [1, 1]} : vector<8x112xf32> to vector<8x32xf32>
    %40 = vector.extract_strided_slice %37 {offsets = [0, 64], sizes = [8, 32], strides = [1, 1]} : vector<8x112xf32> to vector<8x32xf32>
    %41 = vector.extract_strided_slice %37 {offsets = [0, 96], sizes = [8, 8], strides = [1, 1]} : vector<8x112xf32> to vector<8x8xf32>
    %42 = vector.extract_strided_slice %37 {offsets = [0, 104], sizes = [8, 8], strides = [1, 1]} : vector<8x112xf32> to vector<8x8xf32>
    %43 = arith.truncf %41 : vector<8x8xf32> to vector<8x8xbf16>
    %c0_23 = arith.constant 0 : index
    %c0_24 = arith.constant 0 : index
    %44 = vector.load %arg10[%c0_23, %c0_24] : memref<8x32xbf16, #tpu.memory_space<vmem>>, vector<8x32xbf16>
    %cst_25 = arith.constant dense<0.000000e+00> : vector<8x32xf32>
    %45 = tpu.matmul %43, %44, %cst_25 {dimension_numbers = #tpu.dot_dimension_numbers<[1], [0], [0], [1], [0, 0, 1, 1], [], []>} : vector<8x8xbf16>, vector<8x32xbf16>, vector<8x32xf32> -> vector<8x32xf32>
    %cst_26 = arith.constant 2.82842708 : f32
    %46 = vector.broadcast %cst_26 : f32 to vector<8x32xf32>
    %47 = arith.mulf %46, %45 : vector<8x32xf32>
    %48 = arith.addf %39, %47 : vector<8x32xf32>
    %49 = arith.truncf %42 : vector<8x8xf32> to vector<8x8xbf16>
    %c0_27 = arith.constant 0 : index
    %c0_28 = arith.constant 0 : index
    %50 = vector.load %arg11[%c0_27, %c0_28] : memref<8x32xbf16, #tpu.memory_space<vmem>>, vector<8x32xbf16>
    %cst_29 = arith.constant dense<0.000000e+00> : vector<8x32xf32>
    %51 = tpu.matmul %49, %50, %cst_29 {dimension_numbers = #tpu.dot_dimension_numbers<[1], [0], [0], [1], [0, 0, 1, 1], [], []>} : vector<8x8xbf16>, vector<8x32xbf16>, vector<8x32xf32> -> vector<8x32xf32>
    %cst_30 = arith.constant 2.82842708 : f32
    %52 = vector.broadcast %cst_30 : f32 to vector<8x32xf32>
    %53 = arith.mulf %52, %51 : vector<8x32xf32>
    %54 = arith.addf %40, %53 : vector<8x32xf32>
    %55 = vector.extract_strided_slice %38 {offsets = [0, 0], sizes = [8, 8], strides = [1, 1]} : vector<8x32xf32> to vector<8x8xf32>
    %56 = arith.truncf %55 : vector<8x8xf32> to vector<8x8xbf16>
    %57 = vector.extract_strided_slice %48 {offsets = [0, 0], sizes = [8, 8], strides = [1, 1]} : vector<8x32xf32> to vector<8x8xf32>
    %58 = arith.truncf %57 : vector<8x8xf32> to vector<8x8xbf16>
    %cst_31 = arith.constant dense<0.000000e+00> : vector<8x8xf32>
    %59 = tpu.matmul %56, %58, %cst_31 {dimension_numbers = #tpu.dot_dimension_numbers<[1], [1], [0], [0], [0, 0, 1, 0], [], []>} : vector<8x8xbf16>, vector<8x8xbf16>, vector<8x8xf32> -> vector<8x8xf32>
    %cst_32 = arith.constant 0.353553385 : f32
    %60 = vector.broadcast %cst_32 : f32 to vector<8x8xf32>
    %61 = arith.mulf %59, %60 : vector<8x8xf32>
    %62 = vector.broadcast %31 : vector<1x8xf32> to vector<8x8xf32>
    %63 = arith.addf %61, %62 : vector<8x8xf32>
    %cst_33 = arith.constant dense<0xFF800000> : vector<8xf32>
    %64 = vector.multi_reduction <maximumf>, %63, %cst_33 [1] : vector<8x8xf32> to vector<8xf32>
    %65 = vector.shape_cast %64 : vector<8xf32> to vector<8x1xf32>
    %66 = vector.broadcast %65 : vector<8x1xf32> to vector<8x8xf32>
    %67 = arith.subf %63, %66 : vector<8x8xf32>
    %68 = math.exp %67 : vector<8x8xf32>
    %cst_34 = arith.constant dense<0.000000e+00> : vector<8xf32>
    %69 = vector.multi_reduction <add>, %68, %cst_34 [1] : vector<8x8xf32> to vector<8xf32>
    %70 = vector.shape_cast %69 : vector<8xf32> to vector<8x1xf32>
    %71 = tpu.reciprocal %70 {approx = true} : vector<8x1xf32> -> vector<8x1xf32>
    %72 = vector.broadcast %71 : vector<8x1xf32> to vector<8x8xf32>
    %73 = arith.mulf %68, %72 : vector<8x8xf32>
    %74 = arith.truncf %73 : vector<8x8xf32> to vector<8x8xbf16>
    %75 = vector.extract_strided_slice %54 {offsets = [0, 0], sizes = [8, 8], strides = [1, 1]} : vector<8x32xf32> to vector<8x8xf32>
    %76 = arith.truncf %75 : vector<8x8xf32> to vector<8x8xbf16>
    %cst_35 = arith.constant dense<0.000000e+00> : vector<8x8xf32>
    %77 = tpu.matmul %74, %76, %cst_35 {dimension_numbers = #tpu.dot_dimension_numbers<[1], [0], [0], [1], [0, 0, 1, 1], [], []>} : vector<8x8xbf16>, vector<8x8xbf16>, vector<8x8xf32> -> vector<8x8xf32>
    %78 = vector.extract_strided_slice %38 {offsets = [0, 8], sizes = [8, 8], strides = [1, 1]} : vector<8x32xf32> to vector<8x8xf32>
    %79 = arith.truncf %78 : vector<8x8xf32> to vector<8x8xbf16>
    %80 = vector.extract_strided_slice %48 {offsets = [0, 8], sizes = [8, 8], strides = [1, 1]} : vector<8x32xf32> to vector<8x8xf32>
    %81 = arith.truncf %80 : vector<8x8xf32> to vector<8x8xbf16>
    %cst_36 = arith.constant dense<0.000000e+00> : vector<8x8xf32>
    %82 = tpu.matmul %79, %81, %cst_36 {dimension_numbers = #tpu.dot_dimension_numbers<[1], [1], [0], [0], [0, 0, 1, 0], [], []>} : vector<8x8xbf16>, vector<8x8xbf16>, vector<8x8xf32> -> vector<8x8xf32>
    %cst_37 = arith.constant 0.353553385 : f32
    %83 = vector.broadcast %cst_37 : f32 to vector<8x8xf32>
    %84 = arith.mulf %82, %83 : vector<8x8xf32>
    %85 = vector.broadcast %31 : vector<1x8xf32> to vector<8x8xf32>
    %86 = arith.addf %84, %85 : vector<8x8xf32>
    %cst_38 = arith.constant dense<0xFF800000> : vector<8xf32>
    %87 = vector.multi_reduction <maximumf>, %86, %cst_38 [1] : vector<8x8xf32> to vector<8xf32>
    %88 = vector.shape_cast %87 : vector<8xf32> to vector<8x1xf32>
    %89 = vector.broadcast %88 : vector<8x1xf32> to vector<8x8xf32>
    %90 = arith.subf %86, %89 : vector<8x8xf32>
    %91 = math.exp %90 : vector<8x8xf32>
    %cst_39 = arith.constant dense<0.000000e+00> : vector<8xf32>
    %92 = vector.multi_reduction <add>, %91, %cst_39 [1] : vector<8x8xf32> to vector<8xf32>
    %93 = vector.shape_cast %92 : vector<8xf32> to vector<8x1xf32>
    %94 = tpu.reciprocal %93 {approx = true} : vector<8x1xf32> -> vector<8x1xf32>
    %95 = vector.broadcast %94 : vector<8x1xf32> to vector<8x8xf32>
    %96 = arith.mulf %91, %95 : vector<8x8xf32>
    %97 = arith.truncf %96 : vector<8x8xf32> to vector<8x8xbf16>
    %98 = vector.extract_strided_slice %54 {offsets = [0, 8], sizes = [8, 8], strides = [1, 1]} : vector<8x32xf32> to vector<8x8xf32>
    %99 = arith.truncf %98 : vector<8x8xf32> to vector<8x8xbf16>
    %cst_40 = arith.constant dense<0.000000e+00> : vector<8x8xf32>
    %100 = tpu.matmul %97, %99, %cst_40 {dimension_numbers = #tpu.dot_dimension_numbers<[1], [0], [0], [1], [0, 0, 1, 1], [], []>} : vector<8x8xbf16>, vector<8x8xbf16>, vector<8x8xf32> -> vector<8x8xf32>
    %101 = vector.extract_strided_slice %38 {offsets = [0, 16], sizes = [8, 8], strides = [1, 1]} : vector<8x32xf32> to vector<8x8xf32>
    %102 = arith.truncf %101 : vector<8x8xf32> to vector<8x8xbf16>
    %103 = vector.extract_strided_slice %48 {offsets = [0, 16], sizes = [8, 8], strides = [1, 1]} : vector<8x32xf32> to vector<8x8xf32>
    %104 = arith.truncf %103 : vector<8x8xf32> to vector<8x8xbf16>
    %cst_41 = arith.constant dense<0.000000e+00> : vector<8x8xf32>
    %105 = tpu.matmul %102, %104, %cst_41 {dimension_numbers = #tpu.dot_dimension_numbers<[1], [1], [0], [0], [0, 0, 1, 0], [], []>} : vector<8x8xbf16>, vector<8x8xbf16>, vector<8x8xf32> -> vector<8x8xf32>
    %cst_42 = arith.constant 0.353553385 : f32
    %106 = vector.broadcast %cst_42 : f32 to vector<8x8xf32>
    %107 = arith.mulf %105, %106 : vector<8x8xf32>
    %108 = vector.broadcast %31 : vector<1x8xf32> to vector<8x8xf32>
    %109 = arith.addf %107, %108 : vector<8x8xf32>
    %cst_43 = arith.constant dense<0xFF800000> : vector<8xf32>
    %110 = vector.multi_reduction <maximumf>, %109, %cst_43 [1] : vector<8x8xf32> to vector<8xf32>
    %111 = vector.shape_cast %110 : vector<8xf32> to vector<8x1xf32>
    %112 = vector.broadcast %111 : vector<8x1xf32> to vector<8x8xf32>
    %113 = arith.subf %109, %112 : vector<8x8xf32>
    %114 = math.exp %113 : vector<8x8xf32>
    %cst_44 = arith.constant dense<0.000000e+00> : vector<8xf32>
    %115 = vector.multi_reduction <add>, %114, %cst_44 [1] : vector<8x8xf32> to vector<8xf32>
    %116 = vector.shape_cast %115 : vector<8xf32> to vector<8x1xf32>
    %117 = tpu.reciprocal %116 {approx = true} : vector<8x1xf32> -> vector<8x1xf32>
    %118 = vector.broadcast %117 : vector<8x1xf32> to vector<8x8xf32>
    %119 = arith.mulf %114, %118 : vector<8x8xf32>
    %120 = arith.truncf %119 : vector<8x8xf32> to vector<8x8xbf16>
    %121 = vector.extract_strided_slice %54 {offsets = [0, 16], sizes = [8, 8], strides = [1, 1]} : vector<8x32xf32> to vector<8x8xf32>
    %122 = arith.truncf %121 : vector<8x8xf32> to vector<8x8xbf16>
    %cst_45 = arith.constant dense<0.000000e+00> : vector<8x8xf32>
    %123 = tpu.matmul %120, %122, %cst_45 {dimension_numbers = #tpu.dot_dimension_numbers<[1], [0], [0], [1], [0, 0, 1, 1], [], []>} : vector<8x8xbf16>, vector<8x8xbf16>, vector<8x8xf32> -> vector<8x8xf32>
    %124 = vector.extract_strided_slice %38 {offsets = [0, 24], sizes = [8, 8], strides = [1, 1]} : vector<8x32xf32> to vector<8x8xf32>
    %125 = arith.truncf %124 : vector<8x8xf32> to vector<8x8xbf16>
    %126 = vector.extract_strided_slice %48 {offsets = [0, 24], sizes = [8, 8], strides = [1, 1]} : vector<8x32xf32> to vector<8x8xf32>
    %127 = arith.truncf %126 : vector<8x8xf32> to vector<8x8xbf16>
    %cst_46 = arith.constant dense<0.000000e+00> : vector<8x8xf32>
    %128 = tpu.matmul %125, %127, %cst_46 {dimension_numbers = #tpu.dot_dimension_numbers<[1], [1], [0], [0], [0, 0, 1, 0], [], []>} : vector<8x8xbf16>, vector<8x8xbf16>, vector<8x8xf32> -> vector<8x8xf32>
    %cst_47 = arith.constant 0.353553385 : f32
    %129 = vector.broadcast %cst_47 : f32 to vector<8x8xf32>
    %130 = arith.mulf %128, %129 : vector<8x8xf32>
    %131 = vector.broadcast %31 : vector<1x8xf32> to vector<8x8xf32>
    %132 = arith.addf %130, %131 : vector<8x8xf32>
    %cst_48 = arith.constant dense<0xFF800000> : vector<8xf32>
    %133 = vector.multi_reduction <maximumf>, %132, %cst_48 [1] : vector<8x8xf32> to vector<8xf32>
    %134 = vector.shape_cast %133 : vector<8xf32> to vector<8x1xf32>
    %135 = vector.broadcast %134 : vector<8x1xf32> to vector<8x8xf32>
    %136 = arith.subf %132, %135 : vector<8x8xf32>
    %137 = math.exp %136 : vector<8x8xf32>
    %cst_49 = arith.constant dense<0.000000e+00> : vector<8xf32>
    %138 = vector.multi_reduction <add>, %137, %cst_49 [1] : vector<8x8xf32> to vector<8xf32>
    %139 = vector.shape_cast %138 : vector<8xf32> to vector<8x1xf32>
    %140 = tpu.reciprocal %139 {approx = true} : vector<8x1xf32> -> vector<8x1xf32>
    %141 = vector.broadcast %140 : vector<8x1xf32> to vector<8x8xf32>
    %142 = arith.mulf %137, %141 : vector<8x8xf32>
    %143 = arith.truncf %142 : vector<8x8xf32> to vector<8x8xbf16>
    %144 = vector.extract_strided_slice %54 {offsets = [0, 24], sizes = [8, 8], strides = [1, 1]} : vector<8x32xf32> to vector<8x8xf32>
    %145 = arith.truncf %144 : vector<8x8xf32> to vector<8x8xbf16>
    %cst_50 = arith.constant dense<0.000000e+00> : vector<8x8xf32>
    %146 = tpu.matmul %143, %145, %cst_50 {dimension_numbers = #tpu.dot_dimension_numbers<[1], [0], [0], [1], [0, 0, 1, 1], [], []>} : vector<8x8xbf16>, vector<8x8xbf16>, vector<8x8xf32> -> vector<8x8xf32>
    %147 = tpu.concatenate %77, %100, %123, %146 in 1 : vector<8x8xf32>, vector<8x8xf32>, vector<8x8xf32>, vector<8x8xf32> -> vector<8x32xf32>
    %148 = arith.truncf %147 : vector<8x32xf32> to vector<8x32xbf16>
    %c0_51 = arith.constant 0 : index
    %c0_52 = arith.constant 0 : index
    %149 = vector.load %arg12[%c0_51, %c0_52] : memref<32x32xbf16, #tpu.memory_space<vmem>>, vector<32x32xbf16>
    %cst_53 = arith.constant dense<0.000000e+00> : vector<8x32xf32>
    %150 = tpu.matmul %148, %149, %cst_53 {dimension_numbers = #tpu.dot_dimension_numbers<[1], [0], [0], [1], [0, 0, 1, 1], [], []>} : vector<8x32xbf16>, vector<32x32xbf16>, vector<8x32xf32> -> vector<8x32xf32>
    %c0_54 = arith.constant 0 : index
    %c0_55 = arith.constant 0 : index
    %151 = vector.load %arg13[%c0_54, %c0_55] : memref<1x32xf32, #tpu.memory_space<vmem>>, vector<1x32xf32>
    %152 = vector.broadcast %151 : vector<1x32xf32> to vector<8x32xf32>
    %153 = arith.addf %150, %152 : vector<8x32xf32>
    %154 = arith.addf %29, %153 : vector<8x32xf32>
    %cst_56 = arith.constant dense<0.000000e+00> : vector<8xf32>
    %155 = vector.multi_reduction <add>, %154, %cst_56 [1] : vector<8x32xf32> to vector<8xf32>
    %156 = vector.shape_cast %155 : vector<8xf32> to vector<8x1xf32>
    %cst_57 = arith.constant 3.200000e+01 : f32
    %157 = vector.broadcast %cst_57 : f32 to vector<8x1xf32>
    %158 = arith.divf %156, %157 : vector<8x1xf32>
    %159 = vector.broadcast %158 : vector<8x1xf32> to vector<8x32xf32>
    %160 = arith.subf %154, %159 : vector<8x32xf32>
    %161 = arith.mulf %160, %160 : vector<8x32xf32>
    %cst_58 = arith.constant dense<0.000000e+00> : vector<8xf32>
    %162 = vector.multi_reduction <add>, %161, %cst_58 [1] : vector<8x32xf32> to vector<8xf32>
    %163 = vector.shape_cast %162 : vector<8xf32> to vector<8x1xf32>
    %cst_59 = arith.constant 3.200000e+01 : f32
    %164 = vector.broadcast %cst_59 : f32 to vector<8x1xf32>
    %165 = arith.divf %163, %164 : vector<8x1xf32>
    %cst_60 = arith.constant 9.99999996E-13 : f32
    %166 = vector.broadcast %cst_60 : f32 to vector<8x1xf32>
    %167 = arith.addf %165, %166 : vector<8x1xf32>
    %168 = math.rsqrt %167 : vector<8x1xf32>
    %169 = vector.broadcast %168 : vector<8x1xf32> to vector<8x32xf32>
    %170 = arith.mulf %160, %169 : vector<8x32xf32>
    %c0_61 = arith.constant 0 : index
    %c0_62 = arith.constant 0 : index
    %171 = vector.load %arg14[%c0_61, %c0_62] : memref<1x32xf32, #tpu.memory_space<vmem>>, vector<1x32xf32>
    %172 = vector.broadcast %171 : vector<1x32xf32> to vector<8x32xf32>
    %173 = arith.mulf %170, %172 : vector<8x32xf32>
    %c0_63 = arith.constant 0 : index
    %c0_64 = arith.constant 0 : index
    %174 = vector.load %arg15[%c0_63, %c0_64] : memref<1x32xf32, #tpu.memory_space<vmem>>, vector<1x32xf32>
    %175 = vector.broadcast %174 : vector<1x32xf32> to vector<8x32xf32>
    %176 = arith.addf %173, %175 : vector<8x32xf32>
    %177 = arith.truncf %176 : vector<8x32xf32> to vector<8x32xbf16>
    %c0_65 = arith.constant 0 : index
    %c0_66 = arith.constant 0 : index
    %178 = vector.load %arg16[%c0_65, %c0_66] : memref<32x64xbf16, #tpu.memory_space<vmem>>, vector<32x64xbf16>
    %cst_67 = arith.constant dense<0.000000e+00> : vector<8x64xf32>
    %179 = tpu.matmul %177, %178, %cst_67 {dimension_numbers = #tpu.dot_dimension_numbers<[1], [0], [0], [1], [0, 0, 1, 1], [], []>} : vector<8x32xbf16>, vector<32x64xbf16>, vector<8x64xf32> -> vector<8x64xf32>
    %c0_68 = arith.constant 0 : index
    %c0_69 = arith.constant 0 : index
    %180 = vector.load %arg17[%c0_68, %c0_69] : memref<1x64xf32, #tpu.memory_space<vmem>>, vector<1x64xf32>
    %181 = vector.broadcast %180 : vector<1x64xf32> to vector<8x64xf32>
    %182 = arith.addf %179, %181 : vector<8x64xf32>
    %cst_70 = arith.constant 5.000000e-01 : f32
    %183 = vector.broadcast %cst_70 : f32 to vector<8x64xf32>
    %184 = arith.mulf %183, %182 : vector<8x64xf32>
    %cst_71 = arith.constant 4.471500e-02 : f32
    %185 = vector.broadcast %cst_71 : f32 to vector<8x64xf32>
    %186 = arith.mulf %185, %182 : vector<8x64xf32>
    %187 = arith.mulf %186, %182 : vector<8x64xf32>
    %188 = arith.mulf %187, %182 : vector<8x64xf32>
    %189 = arith.addf %182, %188 : vector<8x64xf32>
    %cst_72 = arith.constant 0.797884583 : f32
    %190 = vector.broadcast %cst_72 : f32 to vector<8x64xf32>
    %191 = arith.mulf %190, %189 : vector<8x64xf32>
    %192 = math.tanh %191 : vector<8x64xf32>
    %cst_73 = arith.constant 1.000000e+00 : f32
    %193 = vector.broadcast %cst_73 : f32 to vector<8x64xf32>
    %194 = arith.addf %193, %192 : vector<8x64xf32>
    %195 = arith.mulf %184, %194 : vector<8x64xf32>
    %196 = arith.truncf %195 : vector<8x64xf32> to vector<8x64xbf16>
    %c0_74 = arith.constant 0 : index
    %c0_75 = arith.constant 0 : index
    %197 = vector.load %arg18[%c0_74, %c0_75] : memref<64x32xbf16, #tpu.memory_space<vmem>>, vector<64x32xbf16>
    %cst_76 = arith.constant dense<0.000000e+00> : vector<8x32xf32>
    %198 = tpu.matmul %196, %197, %cst_76 {dimension_numbers = #tpu.dot_dimension_numbers<[1], [0], [0], [1], [0, 0, 1, 1], [], []>} : vector<8x64xbf16>, vector<64x32xbf16>, vector<8x32xf32> -> vector<8x32xf32>
    %c0_77 = arith.constant 0 : index
    %c0_78 = arith.constant 0 : index
    %199 = vector.load %arg19[%c0_77, %c0_78] : memref<1x32xf32, #tpu.memory_space<vmem>>, vector<1x32xf32>
    %200 = vector.broadcast %199 : vector<1x32xf32> to vector<8x32xf32>
    %201 = arith.addf %198, %200 : vector<8x32xf32>
    %202 = arith.addf %176, %201 : vector<8x32xf32>
    %cst_79 = arith.constant dense<0.000000e+00> : vector<8xf32>
    %203 = vector.multi_reduction <add>, %202, %cst_79 [1] : vector<8x32xf32> to vector<8xf32>
    %204 = vector.shape_cast %203 : vector<8xf32> to vector<8x1xf32>
    %cst_80 = arith.constant 3.200000e+01 : f32
    %205 = vector.broadcast %cst_80 : f32 to vector<8x1xf32>
    %206 = arith.divf %204, %205 : vector<8x1xf32>
    %207 = vector.broadcast %206 : vector<8x1xf32> to vector<8x32xf32>
    %208 = arith.subf %202, %207 : vector<8x32xf32>
    %209 = arith.mulf %208, %208 : vector<8x32xf32>
    %cst_81 = arith.constant dense<0.000000e+00> : vector<8xf32>
    %210 = vector.multi_reduction <add>, %209, %cst_81 [1] : vector<8x32xf32> to vector<8xf32>
    %211 = vector.shape_cast %210 : vector<8xf32> to vector<8x1xf32>
    %cst_82 = arith.constant 3.200000e+01 : f32
    %212 = vector.broadcast %cst_82 : f32 to vector<8x1xf32>
    %213 = arith.divf %211, %212 : vector<8x1xf32>
    %cst_83 = arith.constant 9.99999996E-13 : f32
    %214 = vector.broadcast %cst_83 : f32 to vector<8x1xf32>
    %215 = arith.addf %213, %214 : vector<8x1xf32>
    %216 = math.rsqrt %215 : vector<8x1xf32>
    %217 = vector.broadcast %216 : vector<8x1xf32> to vector<8x32xf32>
    %218 = arith.mulf %208, %217 : vector<8x32xf32>
    %c0_84 = arith.constant 0 : index
    %c0_85 = arith.constant 0 : index
    %219 = vector.load %arg20[%c0_84, %c0_85] : memref<1x32xf32, #tpu.memory_space<vmem>>, vector<1x32xf32>
    %220 = vector.broadcast %219 : vector<1x32xf32> to vector<8x32xf32>
    %221 = arith.mulf %218, %220 : vector<8x32xf32>
    %c0_86 = arith.constant 0 : index
    %c0_87 = arith.constant 0 : index
    %222 = vector.load %arg21[%c0_86, %c0_87] : memref<1x32xf32, #tpu.memory_space<vmem>>, vector<1x32xf32>
    %223 = vector.broadcast %222 : vector<1x32xf32> to vector<8x32xf32>
    %224 = arith.addf %221, %223 : vector<8x32xf32>
    %225 = arith.truncf %224 : vector<8x32xf32> to vector<8x32xbf16>
    %c0_88 = arith.constant 0 : index
    %c0_89 = arith.constant 0 : index
    %226 = vector.load %arg8[%c0_88, %c0_89] : memref<32x112xbf16, #tpu.memory_space<vmem>>, vector<32x112xbf16>
    %cst_90 = arith.constant dense<0.000000e+00> : vector<8x112xf32>
    %227 = tpu.matmul %225, %226, %cst_90 {dimension_numbers = #tpu.dot_dimension_numbers<[1], [0], [0], [1], [0, 0, 1, 1], [], []>} : vector<8x32xbf16>, vector<32x112xbf16>, vector<8x112xf32> -> vector<8x112xf32>
    %c0_91 = arith.constant 0 : index
    %c0_92 = arith.constant 0 : index
    %228 = vector.load %arg9[%c0_91, %c0_92] : memref<1x112xf32, #tpu.memory_space<vmem>>, vector<1x112xf32>
    %229 = vector.broadcast %228 : vector<1x112xf32> to vector<8x112xf32>
    %230 = arith.addf %227, %229 : vector<8x112xf32>
    %231 = vector.extract_strided_slice %230 {offsets = [0, 0], sizes = [8, 32], strides = [1, 1]} : vector<8x112xf32> to vector<8x32xf32>
    %232 = vector.extract_strided_slice %230 {offsets = [0, 32], sizes = [8, 32], strides = [1, 1]} : vector<8x112xf32> to vector<8x32xf32>
    %233 = vector.extract_strided_slice %230 {offsets = [0, 64], sizes = [8, 32], strides = [1, 1]} : vector<8x112xf32> to vector<8x32xf32>
    %234 = vector.extract_strided_slice %230 {offsets = [0, 96], sizes = [8, 8], strides = [1, 1]} : vector<8x112xf32> to vector<8x8xf32>
    %235 = vector.extract_strided_slice %230 {offsets = [0, 104], sizes = [8, 8], strides = [1, 1]} : vector<8x112xf32> to vector<8x8xf32>
    %236 = arith.truncf %234 : vector<8x8xf32> to vector<8x8xbf16>
    %c0_93 = arith.constant 0 : index
    %c0_94 = arith.constant 0 : index
    %237 = vector.load %arg10[%c0_93, %c0_94] : memref<8x32xbf16, #tpu.memory_space<vmem>>, vector<8x32xbf16>
    %cst_95 = arith.constant dense<0.000000e+00> : vector<8x32xf32>
    %238 = tpu.matmul %236, %237, %cst_95 {dimension_numbers = #tpu.dot_dimension_numbers<[1], [0], [0], [1], [0, 0, 1, 1], [], []>} : vector<8x8xbf16>, vector<8x32xbf16>, vector<8x32xf32> -> vector<8x32xf32>
    %cst_96 = arith.constant 2.82842708 : f32
    %239 = vector.broadcast %cst_96 : f32 to vector<8x32xf32>
    %240 = arith.mulf %239, %238 : vector<8x32xf32>
    %241 = arith.addf %232, %240 : vector<8x32xf32>
    %242 = arith.truncf %235 : vector<8x8xf32> to vector<8x8xbf16>
    %c0_97 = arith.constant 0 : index
    %c0_98 = arith.constant 0 : index
    %243 = vector.load %arg11[%c0_97, %c0_98] : memref<8x32xbf16, #tpu.memory_space<vmem>>, vector<8x32xbf16>
    %cst_99 = arith.constant dense<0.000000e+00> : vector<8x32xf32>
    %244 = tpu.matmul %242, %243, %cst_99 {dimension_numbers = #tpu.dot_dimension_numbers<[1], [0], [0], [1], [0, 0, 1, 1], [], []>} : vector<8x8xbf16>, vector<8x32xbf16>, vector<8x32xf32> -> vector<8x32xf32>
    %cst_100 = arith.constant 2.82842708 : f32
    %245 = vector.broadcast %cst_100 : f32 to vector<8x32xf32>
    %246 = arith.mulf %245, %244 : vector<8x32xf32>
    %247 = arith.addf %233, %246 : vector<8x32xf32>
    %248 = vector.extract_strided_slice %231 {offsets = [0, 0], sizes = [8, 8], strides = [1, 1]} : vector<8x32xf32> to vector<8x8xf32>
    %249 = arith.truncf %248 : vector<8x8xf32> to vector<8x8xbf16>
    %250 = vector.extract_strided_slice %241 {offsets = [0, 0], sizes = [8, 8], strides = [1, 1]} : vector<8x32xf32> to vector<8x8xf32>
    %251 = arith.truncf %250 : vector<8x8xf32> to vector<8x8xbf16>
    %cst_101 = arith.constant dense<0.000000e+00> : vector<8x8xf32>
    %252 = tpu.matmul %249, %251, %cst_101 {dimension_numbers = #tpu.dot_dimension_numbers<[1], [1], [0], [0], [0, 0, 1, 0], [], []>} : vector<8x8xbf16>, vector<8x8xbf16>, vector<8x8xf32> -> vector<8x8xf32>
    %cst_102 = arith.constant 0.353553385 : f32
    %253 = vector.broadcast %cst_102 : f32 to vector<8x8xf32>
    %254 = arith.mulf %252, %253 : vector<8x8xf32>
    %255 = vector.broadcast %31 : vector<1x8xf32> to vector<8x8xf32>
    %256 = arith.addf %254, %255 : vector<8x8xf32>
    %cst_103 = arith.constant dense<0xFF800000> : vector<8xf32>
    %257 = vector.multi_reduction <maximumf>, %256, %cst_103 [1] : vector<8x8xf32> to vector<8xf32>
    %258 = vector.shape_cast %257 : vector<8xf32> to vector<8x1xf32>
    %259 = vector.broadcast %258 : vector<8x1xf32> to vector<8x8xf32>
    %260 = arith.subf %256, %259 : vector<8x8xf32>
    %261 = math.exp %260 : vector<8x8xf32>
    %cst_104 = arith.constant dense<0.000000e+00> : vector<8xf32>
    %262 = vector.multi_reduction <add>, %261, %cst_104 [1] : vector<8x8xf32> to vector<8xf32>
    %263 = vector.shape_cast %262 : vector<8xf32> to vector<8x1xf32>
    %264 = tpu.reciprocal %263 {approx = true} : vector<8x1xf32> -> vector<8x1xf32>
    %265 = vector.broadcast %264 : vector<8x1xf32> to vector<8x8xf32>
    %266 = arith.mulf %261, %265 : vector<8x8xf32>
    %267 = arith.truncf %266 : vector<8x8xf32> to vector<8x8xbf16>
    %268 = vector.extract_strided_slice %247 {offsets = [0, 0], sizes = [8, 8], strides = [1, 1]} : vector<8x32xf32> to vector<8x8xf32>
    %269 = arith.truncf %268 : vector<8x8xf32> to vector<8x8xbf16>
    %cst_105 = arith.constant dense<0.000000e+00> : vector<8x8xf32>
    %270 = tpu.matmul %267, %269, %cst_105 {dimension_numbers = #tpu.dot_dimension_numbers<[1], [0], [0], [1], [0, 0, 1, 1], [], []>} : vector<8x8xbf16>, vector<8x8xbf16>, vector<8x8xf32> -> vector<8x8xf32>
    %271 = vector.extract_strided_slice %231 {offsets = [0, 8], sizes = [8, 8], strides = [1, 1]} : vector<8x32xf32> to vector<8x8xf32>
    %272 = arith.truncf %271 : vector<8x8xf32> to vector<8x8xbf16>
    %273 = vector.extract_strided_slice %241 {offsets = [0, 8], sizes = [8, 8], strides = [1, 1]} : vector<8x32xf32> to vector<8x8xf32>
    %274 = arith.truncf %273 : vector<8x8xf32> to vector<8x8xbf16>
    %cst_106 = arith.constant dense<0.000000e+00> : vector<8x8xf32>
    %275 = tpu.matmul %272, %274, %cst_106 {dimension_numbers = #tpu.dot_dimension_numbers<[1], [1], [0], [0], [0, 0, 1, 0], [], []>} : vector<8x8xbf16>, vector<8x8xbf16>, vector<8x8xf32> -> vector<8x8xf32>
    %cst_107 = arith.constant 0.353553385 : f32
    %276 = vector.broadcast %cst_107 : f32 to vector<8x8xf32>
    %277 = arith.mulf %275, %276 : vector<8x8xf32>
    %278 = vector.broadcast %31 : vector<1x8xf32> to vector<8x8xf32>
    %279 = arith.addf %277, %278 : vector<8x8xf32>
    %cst_108 = arith.constant dense<0xFF800000> : vector<8xf32>
    %280 = vector.multi_reduction <maximumf>, %279, %cst_108 [1] : vector<8x8xf32> to vector<8xf32>
    %281 = vector.shape_cast %280 : vector<8xf32> to vector<8x1xf32>
    %282 = vector.broadcast %281 : vector<8x1xf32> to vector<8x8xf32>
    %283 = arith.subf %279, %282 : vector<8x8xf32>
    %284 = math.exp %283 : vector<8x8xf32>
    %cst_109 = arith.constant dense<0.000000e+00> : vector<8xf32>
    %285 = vector.multi_reduction <add>, %284, %cst_109 [1] : vector<8x8xf32> to vector<8xf32>
    %286 = vector.shape_cast %285 : vector<8xf32> to vector<8x1xf32>
    %287 = tpu.reciprocal %286 {approx = true} : vector<8x1xf32> -> vector<8x1xf32>
    %288 = vector.broadcast %287 : vector<8x1xf32> to vector<8x8xf32>
    %289 = arith.mulf %284, %288 : vector<8x8xf32>
    %290 = arith.truncf %289 : vector<8x8xf32> to vector<8x8xbf16>
    %291 = vector.extract_strided_slice %247 {offsets = [0, 8], sizes = [8, 8], strides = [1, 1]} : vector<8x32xf32> to vector<8x8xf32>
    %292 = arith.truncf %291 : vector<8x8xf32> to vector<8x8xbf16>
    %cst_110 = arith.constant dense<0.000000e+00> : vector<8x8xf32>
    %293 = tpu.matmul %290, %292, %cst_110 {dimension_numbers = #tpu.dot_dimension_numbers<[1], [0], [0], [1], [0, 0, 1, 1], [], []>} : vector<8x8xbf16>, vector<8x8xbf16>, vector<8x8xf32> -> vector<8x8xf32>
    %294 = vector.extract_strided_slice %231 {offsets = [0, 16], sizes = [8, 8], strides = [1, 1]} : vector<8x32xf32> to vector<8x8xf32>
    %295 = arith.truncf %294 : vector<8x8xf32> to vector<8x8xbf16>
    %296 = vector.extract_strided_slice %241 {offsets = [0, 16], sizes = [8, 8], strides = [1, 1]} : vector<8x32xf32> to vector<8x8xf32>
    %297 = arith.truncf %296 : vector<8x8xf32> to vector<8x8xbf16>
    %cst_111 = arith.constant dense<0.000000e+00> : vector<8x8xf32>
    %298 = tpu.matmul %295, %297, %cst_111 {dimension_numbers = #tpu.dot_dimension_numbers<[1], [1], [0], [0], [0, 0, 1, 0], [], []>} : vector<8x8xbf16>, vector<8x8xbf16>, vector<8x8xf32> -> vector<8x8xf32>
    %cst_112 = arith.constant 0.353553385 : f32
    %299 = vector.broadcast %cst_112 : f32 to vector<8x8xf32>
    %300 = arith.mulf %298, %299 : vector<8x8xf32>
    %301 = vector.broadcast %31 : vector<1x8xf32> to vector<8x8xf32>
    %302 = arith.addf %300, %301 : vector<8x8xf32>
    %cst_113 = arith.constant dense<0xFF800000> : vector<8xf32>
    %303 = vector.multi_reduction <maximumf>, %302, %cst_113 [1] : vector<8x8xf32> to vector<8xf32>
    %304 = vector.shape_cast %303 : vector<8xf32> to vector<8x1xf32>
    %305 = vector.broadcast %304 : vector<8x1xf32> to vector<8x8xf32>
    %306 = arith.subf %302, %305 : vector<8x8xf32>
    %307 = math.exp %306 : vector<8x8xf32>
    %cst_114 = arith.constant dense<0.000000e+00> : vector<8xf32>
    %308 = vector.multi_reduction <add>, %307, %cst_114 [1] : vector<8x8xf32> to vector<8xf32>
    %309 = vector.shape_cast %308 : vector<8xf32> to vector<8x1xf32>
    %310 = tpu.reciprocal %309 {approx = true} : vector<8x1xf32> -> vector<8x1xf32>
    %311 = vector.broadcast %310 : vector<8x1xf32> to vector<8x8xf32>
    %312 = arith.mulf %307, %311 : vector<8x8xf32>
    %313 = arith.truncf %312 : vector<8x8xf32> to vector<8x8xbf16>
    %314 = vector.extract_strided_slice %247 {offsets = [0, 16], sizes = [8, 8], strides = [1, 1]} : vector<8x32xf32> to vector<8x8xf32>
    %315 = arith.truncf %314 : vector<8x8xf32> to vector<8x8xbf16>
    %cst_115 = arith.constant dense<0.000000e+00> : vector<8x8xf32>
    %316 = tpu.matmul %313, %315, %cst_115 {dimension_numbers = #tpu.dot_dimension_numbers<[1], [0], [0], [1], [0, 0, 1, 1], [], []>} : vector<8x8xbf16>, vector<8x8xbf16>, vector<8x8xf32> -> vector<8x8xf32>
    %317 = vector.extract_strided_slice %231 {offsets = [0, 24], sizes = [8, 8], strides = [1, 1]} : vector<8x32xf32> to vector<8x8xf32>
    %318 = arith.truncf %317 : vector<8x8xf32> to vector<8x8xbf16>
    %319 = vector.extract_strided_slice %241 {offsets = [0, 24], sizes = [8, 8], strides = [1, 1]} : vector<8x32xf32> to vector<8x8xf32>
    %320 = arith.truncf %319 : vector<8x8xf32> to vector<8x8xbf16>
    %cst_116 = arith.constant dense<0.000000e+00> : vector<8x8xf32>
    %321 = tpu.matmul %318, %320, %cst_116 {dimension_numbers = #tpu.dot_dimension_numbers<[1], [1], [0], [0], [0, 0, 1, 0], [], []>} : vector<8x8xbf16>, vector<8x8xbf16>, vector<8x8xf32> -> vector<8x8xf32>
    %cst_117 = arith.constant 0.353553385 : f32
    %322 = vector.broadcast %cst_117 : f32 to vector<8x8xf32>
    %323 = arith.mulf %321, %322 : vector<8x8xf32>
    %324 = vector.broadcast %31 : vector<1x8xf32> to vector<8x8xf32>
    %325 = arith.addf %323, %324 : vector<8x8xf32>
    %cst_118 = arith.constant dense<0xFF800000> : vector<8xf32>
    %326 = vector.multi_reduction <maximumf>, %325, %cst_118 [1] : vector<8x8xf32> to vector<8xf32>
    %327 = vector.shape_cast %326 : vector<8xf32> to vector<8x1xf32>
    %328 = vector.broadcast %327 : vector<8x1xf32> to vector<8x8xf32>
    %329 = arith.subf %325, %328 : vector<8x8xf32>
    %330 = math.exp %329 : vector<8x8xf32>
    %cst_119 = arith.constant dense<0.000000e+00> : vector<8xf32>
    %331 = vector.multi_reduction <add>, %330, %cst_119 [1] : vector<8x8xf32> to vector<8xf32>
    %332 = vector.shape_cast %331 : vector<8xf32> to vector<8x1xf32>
    %333 = tpu.reciprocal %332 {approx = true} : vector<8x1xf32> -> vector<8x1xf32>
    %334 = vector.broadcast %333 : vector<8x1xf32> to vector<8x8xf32>
    %335 = arith.mulf %330, %334 : vector<8x8xf32>
    %336 = arith.truncf %335 : vector<8x8xf32> to vector<8x8xbf16>
    %337 = vector.extract_strided_slice %247 {offsets = [0, 24], sizes = [8, 8], strides = [1, 1]} : vector<8x32xf32> to vector<8x8xf32>
    %338 = arith.truncf %337 : vector<8x8xf32> to vector<8x8xbf16>
    %cst_120 = arith.constant dense<0.000000e+00> : vector<8x8xf32>
    %339 = tpu.matmul %336, %338, %cst_120 {dimension_numbers = #tpu.dot_dimension_numbers<[1], [0], [0], [1], [0, 0, 1, 1], [], []>} : vector<8x8xbf16>, vector<8x8xbf16>, vector<8x8xf32> -> vector<8x8xf32>
    %340 = tpu.concatenate %270, %293, %316, %339 in 1 : vector<8x8xf32>, vector<8x8xf32>, vector<8x8xf32>, vector<8x8xf32> -> vector<8x32xf32>
    %341 = arith.truncf %340 : vector<8x32xf32> to vector<8x32xbf16>
    %c0_121 = arith.constant 0 : index
    %c0_122 = arith.constant 0 : index
    %342 = vector.load %arg12[%c0_121, %c0_122] : memref<32x32xbf16, #tpu.memory_space<vmem>>, vector<32x32xbf16>
    %cst_123 = arith.constant dense<0.000000e+00> : vector<8x32xf32>
    %343 = tpu.matmul %341, %342, %cst_123 {dimension_numbers = #tpu.dot_dimension_numbers<[1], [0], [0], [1], [0, 0, 1, 1], [], []>} : vector<8x32xbf16>, vector<32x32xbf16>, vector<8x32xf32> -> vector<8x32xf32>
    %c0_124 = arith.constant 0 : index
    %c0_125 = arith.constant 0 : index
    %344 = vector.load %arg13[%c0_124, %c0_125] : memref<1x32xf32, #tpu.memory_space<vmem>>, vector<1x32xf32>
    %345 = vector.broadcast %344 : vector<1x32xf32> to vector<8x32xf32>
    %346 = arith.addf %343, %345 : vector<8x32xf32>
    %347 = arith.addf %224, %346 : vector<8x32xf32>
    %cst_126 = arith.constant dense<0.000000e+00> : vector<8xf32>
    %348 = vector.multi_reduction <add>, %347, %cst_126 [1] : vector<8x32xf32> to vector<8xf32>
    %349 = vector.shape_cast %348 : vector<8xf32> to vector<8x1xf32>
    %cst_127 = arith.constant 3.200000e+01 : f32
    %350 = vector.broadcast %cst_127 : f32 to vector<8x1xf32>
    %351 = arith.divf %349, %350 : vector<8x1xf32>
    %352 = vector.broadcast %351 : vector<8x1xf32> to vector<8x32xf32>
    %353 = arith.subf %347, %352 : vector<8x32xf32>
    %354 = arith.mulf %353, %353 : vector<8x32xf32>
    %cst_128 = arith.constant dense<0.000000e+00> : vector<8xf32>
    %355 = vector.multi_reduction <add>, %354, %cst_128 [1] : vector<8x32xf32> to vector<8xf32>
    %356 = vector.shape_cast %355 : vector<8xf32> to vector<8x1xf32>
    %cst_129 = arith.constant 3.200000e+01 : f32
    %357 = vector.broadcast %cst_129 : f32 to vector<8x1xf32>
    %358 = arith.divf %356, %357 : vector<8x1xf32>
    %cst_130 = arith.constant 9.99999996E-13 : f32
    %359 = vector.broadcast %cst_130 : f32 to vector<8x1xf32>
    %360 = arith.addf %358, %359 : vector<8x1xf32>
    %361 = math.rsqrt %360 : vector<8x1xf32>
    %362 = vector.broadcast %361 : vector<8x1xf32> to vector<8x32xf32>
    %363 = arith.mulf %353, %362 : vector<8x32xf32>
    %c0_131 = arith.constant 0 : index
    %c0_132 = arith.constant 0 : index
    %364 = vector.load %arg14[%c0_131, %c0_132] : memref<1x32xf32, #tpu.memory_space<vmem>>, vector<1x32xf32>
    %365 = vector.broadcast %364 : vector<1x32xf32> to vector<8x32xf32>
    %366 = arith.mulf %363, %365 : vector<8x32xf32>
    %c0_133 = arith.constant 0 : index
    %c0_134 = arith.constant 0 : index
    %367 = vector.load %arg15[%c0_133, %c0_134] : memref<1x32xf32, #tpu.memory_space<vmem>>, vector<1x32xf32>
    %368 = vector.broadcast %367 : vector<1x32xf32> to vector<8x32xf32>
    %369 = arith.addf %366, %368 : vector<8x32xf32>
    %370 = arith.truncf %369 : vector<8x32xf32> to vector<8x32xbf16>
    %c0_135 = arith.constant 0 : index
    %c0_136 = arith.constant 0 : index
    %371 = vector.load %arg16[%c0_135, %c0_136] : memref<32x64xbf16, #tpu.memory_space<vmem>>, vector<32x64xbf16>
    %cst_137 = arith.constant dense<0.000000e+00> : vector<8x64xf32>
    %372 = tpu.matmul %370, %371, %cst_137 {dimension_numbers = #tpu.dot_dimension_numbers<[1], [0], [0], [1], [0, 0, 1, 1], [], []>} : vector<8x32xbf16>, vector<32x64xbf16>, vector<8x64xf32> -> vector<8x64xf32>
    %c0_138 = arith.constant 0 : index
    %c0_139 = arith.constant 0 : index
    %373 = vector.load %arg17[%c0_138, %c0_139] : memref<1x64xf32, #tpu.memory_space<vmem>>, vector<1x64xf32>
    %374 = vector.broadcast %373 : vector<1x64xf32> to vector<8x64xf32>
    %375 = arith.addf %372, %374 : vector<8x64xf32>
    %cst_140 = arith.constant 5.000000e-01 : f32
    %376 = vector.broadcast %cst_140 : f32 to vector<8x64xf32>
    %377 = arith.mulf %376, %375 : vector<8x64xf32>
    %cst_141 = arith.constant 4.471500e-02 : f32
    %378 = vector.broadcast %cst_141 : f32 to vector<8x64xf32>
    %379 = arith.mulf %378, %375 : vector<8x64xf32>
    %380 = arith.mulf %379, %375 : vector<8x64xf32>
    %381 = arith.mulf %380, %375 : vector<8x64xf32>
    %382 = arith.addf %375, %381 : vector<8x64xf32>
    %cst_142 = arith.constant 0.797884583 : f32
    %383 = vector.broadcast %cst_142 : f32 to vector<8x64xf32>
    %384 = arith.mulf %383, %382 : vector<8x64xf32>
    %385 = math.tanh %384 : vector<8x64xf32>
    %cst_143 = arith.constant 1.000000e+00 : f32
    %386 = vector.broadcast %cst_143 : f32 to vector<8x64xf32>
    %387 = arith.addf %386, %385 : vector<8x64xf32>
    %388 = arith.mulf %377, %387 : vector<8x64xf32>
    %389 = arith.truncf %388 : vector<8x64xf32> to vector<8x64xbf16>
    %c0_144 = arith.constant 0 : index
    %c0_145 = arith.constant 0 : index
    %390 = vector.load %arg18[%c0_144, %c0_145] : memref<64x32xbf16, #tpu.memory_space<vmem>>, vector<64x32xbf16>
    %cst_146 = arith.constant dense<0.000000e+00> : vector<8x32xf32>
    %391 = tpu.matmul %389, %390, %cst_146 {dimension_numbers = #tpu.dot_dimension_numbers<[1], [0], [0], [1], [0, 0, 1, 1], [], []>} : vector<8x64xbf16>, vector<64x32xbf16>, vector<8x32xf32> -> vector<8x32xf32>
    %c0_147 = arith.constant 0 : index
    %c0_148 = arith.constant 0 : index
    %392 = vector.load %arg19[%c0_147, %c0_148] : memref<1x32xf32, #tpu.memory_space<vmem>>, vector<1x32xf32>
    %393 = vector.broadcast %392 : vector<1x32xf32> to vector<8x32xf32>
    %394 = arith.addf %391, %393 : vector<8x32xf32>
    %395 = arith.addf %369, %394 : vector<8x32xf32>
    %cst_149 = arith.constant dense<0.000000e+00> : vector<8xf32>
    %396 = vector.multi_reduction <add>, %395, %cst_149 [1] : vector<8x32xf32> to vector<8xf32>
    %397 = vector.shape_cast %396 : vector<8xf32> to vector<8x1xf32>
    %cst_150 = arith.constant 3.200000e+01 : f32
    %398 = vector.broadcast %cst_150 : f32 to vector<8x1xf32>
    %399 = arith.divf %397, %398 : vector<8x1xf32>
    %400 = vector.broadcast %399 : vector<8x1xf32> to vector<8x32xf32>
    %401 = arith.subf %395, %400 : vector<8x32xf32>
    %402 = arith.mulf %401, %401 : vector<8x32xf32>
    %cst_151 = arith.constant dense<0.000000e+00> : vector<8xf32>
    %403 = vector.multi_reduction <add>, %402, %cst_151 [1] : vector<8x32xf32> to vector<8xf32>
    %404 = vector.shape_cast %403 : vector<8xf32> to vector<8x1xf32>
    %cst_152 = arith.constant 3.200000e+01 : f32
    %405 = vector.broadcast %cst_152 : f32 to vector<8x1xf32>
    %406 = arith.divf %404, %405 : vector<8x1xf32>
    %cst_153 = arith.constant 9.99999996E-13 : f32
    %407 = vector.broadcast %cst_153 : f32 to vector<8x1xf32>
    %408 = arith.addf %406, %407 : vector<8x1xf32>
    %409 = math.rsqrt %408 : vector<8x1xf32>
    %410 = vector.broadcast %409 : vector<8x1xf32> to vector<8x32xf32>
    %411 = arith.mulf %401, %410 : vector<8x32xf32>
    %c0_154 = arith.constant 0 : index
    %c0_155 = arith.constant 0 : index
    %412 = vector.load %arg20[%c0_154, %c0_155] : memref<1x32xf32, #tpu.memory_space<vmem>>, vector<1x32xf32>
    %413 = vector.broadcast %412 : vector<1x32xf32> to vector<8x32xf32>
    %414 = arith.mulf %411, %413 : vector<8x32xf32>
    %c0_156 = arith.constant 0 : index
    %c0_157 = arith.constant 0 : index
    %415 = vector.load %arg21[%c0_156, %c0_157] : memref<1x32xf32, #tpu.memory_space<vmem>>, vector<1x32xf32>
    %416 = vector.broadcast %415 : vector<1x32xf32> to vector<8x32xf32>
    %417 = arith.addf %414, %416 : vector<8x32xf32>
    %418 = vector.extract_strided_slice %417 {offsets = [0, 0], sizes = [1, 32], strides = [1, 1]} : vector<8x32xf32> to vector<1x32xf32>
    %419 = arith.truncf %418 : vector<1x32xf32> to vector<1x32xbf16>
    %c0_158 = arith.constant 0 : index
    %c0_159 = arith.constant 0 : index
    %420 = vector.load %arg22[%c0_158, %c0_159] : memref<32x32xbf16, #tpu.memory_space<vmem>>, vector<32x32xbf16>
    %cst_160 = arith.constant dense<0.000000e+00> : vector<1x32xf32>
    %421 = tpu.matmul %419, %420, %cst_160 {dimension_numbers = #tpu.dot_dimension_numbers<[1], [0], [0], [1], [0, 0, 1, 1], [], []>} : vector<1x32xbf16>, vector<32x32xbf16>, vector<1x32xf32> -> vector<1x32xf32>
    %c0_161 = arith.constant 0 : index
    %c0_162 = arith.constant 0 : index
    %422 = vector.load %arg23[%c0_161, %c0_162] : memref<1x32xf32, #tpu.memory_space<vmem>>, vector<1x32xf32>
    %423 = arith.addf %421, %422 : vector<1x32xf32>
    %424 = math.tanh %423 : vector<1x32xf32>
    %c0_163 = arith.constant 0 : index
    %c0_164 = arith.constant 0 : index
    %c0_165 = arith.constant 0 : index
    %425 = vector.load %arg3[%c0_163, %c0_164, %c0_165] : memref<1x1x32xf32, #tpu.memory_space<vmem>>, vector<1x1x32xf32>
    %426 = vector.shape_cast %425 : vector<1x1x32xf32> to vector<1x32xf32>
    %427 = arith.addf %424, %426 : vector<1x32xf32>
    %428 = arith.truncf %427 : vector<1x32xf32> to vector<1x32xbf16>
    %c0_166 = arith.constant 0 : index
    %c0_167 = arith.constant 0 : index
    %429 = vector.load %arg24[%c0_166, %c0_167] : memref<32x128xbf16, #tpu.memory_space<vmem>>, vector<32x128xbf16>
    %cst_168 = arith.constant dense<0.000000e+00> : vector<1x128xf32>
    %430 = tpu.matmul %428, %429, %cst_168 {dimension_numbers = #tpu.dot_dimension_numbers<[1], [0], [0], [1], [0, 0, 1, 1], [], []>} : vector<1x32xbf16>, vector<32x128xbf16>, vector<1x128xf32> -> vector<1x128xf32>
    %c0_169 = arith.constant 0 : index
    %c0_170 = arith.constant 0 : index
    %431 = vector.load %arg25[%c0_169, %c0_170] : memref<1x128xf32, #tpu.memory_space<vmem>>, vector<1x128xf32>
    %432 = arith.addf %430, %431 : vector<1x128xf32>
    %c0_171 = arith.constant 0 : index
    %c0_172 = arith.constant 0 : index
    %c0_173 = arith.constant 0 : index
    %433 = vector.load %arg26[%c0_171, %c0_172, %c0_173] : memref<1x1x128xf32, #tpu.memory_space<vmem>>, vector<1x1x128xf32>
    %434 = vector.shape_cast %433 : vector<1x1x128xf32> to vector<1x128xf32>
    %435 = vector.shape_cast %432 : vector<1x128xf32> to vector<1x1x128xf32>
    tpu.vector_store %arg26[%c0_171, %c0_172, %c0_173], %435 {strides = array<i32>} : memref<1x1x128xf32, #tpu.memory_space<vmem>>, vector<1x1x128xf32>,
    return
  }
  func.func @transform_0(%arg0: i32) -> (i32, i32, i32) {
    %c0_i32 = arith.constant 0 : i32
    %c0_i32_0 = arith.constant 0 : i32
    %c0_i32_1 = arith.constant 0 : i32
    return %arg0, %c0_i32, %c0_i32_0 : i32, i32, i32
  }
  func.func @transform_1(%arg0: i32) -> (i32, i32, i32) {
    %c0_i32 = arith.constant 0 : i32
    %c0_i32_0 = arith.constant 0 : i32
    %c0_i32_1 = arith.constant 0 : i32
    return %arg0, %c0_i32, %c0_i32_0 : i32, i32, i32
  }
  func.func @transform_2(%arg0: i32) -> (i32, i32, i32) {
    %c0_i32 = arith.constant 0 : i32
    %c0_i32_0 = arith.constant 0 : i32
    %c0_i32_1 = arith.constant 0 : i32
    return %arg0, %c0_i32, %c0_i32_0 : i32, i32, i32
  }
  func.func @transform_3(%arg0: i32) -> (i32, i32) {
    %c0_i32 = arith.constant 0 : i32
    %c0_i32_0 = arith.constant 0 : i32
    %c0_i32_1 = arith.constant 0 : i32
    return %c0_i32, %c0_i32_0 : i32, i32
  }
  func.func @transform_4(%arg0: i32) -> (i32, i32) {
    %c0_i32 = arith.constant 0 : i32
    %c0_i32_0 = arith.constant 0 : i32
    %c0_i32_1 = arith.constant 0 : i32
    return %c0_i32, %c0_i32_0 : i32, i32
  }
  func.func @transform_5(%arg0: i32) -> (i32, i32) {
    %c0_i32 = arith.constant 0 : i32
    %c0_i32_0 = arith.constant 0 : i32
    %c0_i32_1 = arith.constant 0 : i32
    return %c0_i32, %c0_i32_0 : i32, i32
  }
  func.func @transform_6(%arg0: i32) -> (i32, i32) {
    %c0_i32 = arith.constant 0 : i32
    %c0_i32_0 = arith.constant 0 : i32
    %c0_i32_1 = arith.constant 0 : i32
    return %c0_i32, %c0_i32_0 : i32, i32
  }
  func.func @transform_7(%arg0: i32) -> (i32, i32) {
    %c0_i32 = arith.constant 0 : i32
    %c0_i32_0 = arith.constant 0 : i32
    %c0_i32_1 = arith.constant 0 : i32
    return %c0_i32, %c0_i32_0 : i32, i32
  }
  func.func @transform_8(%arg0: i32) -> (i32, i32) {
    %c0_i32 = arith.constant 0 : i32
    %c0_i32_0 = arith.constant 0 : i32
    %c0_i32_1 = arith.constant 0 : i32
    return %c0_i32, %c0_i32_0 : i32, i32
  }
  func.func @transform_9(%arg0: i32) -> (i32, i32) {
    %c0_i32 = arith.constant 0 : i32
    %c0_i32_0 = arith.constant 0 : i32
    %c0_i32_1 = arith.constant 0 : i32
    return %c0_i32, %c0_i32_0 : i32, i32
  }
  func.func @transform_10(%arg0: i32) -> (i32, i32) {
    %c0_i32 = arith.constant 0 : i32
    %c0_i32_0 = arith.constant 0 : i32
    %c0_i32_1 = arith.constant 0 : i32
    return %c0_i32, %c0_i32_0 : i32, i32
  }
  func.func @transform_11(%arg0: i32) -> (i32, i32) {
    %c0_i32 = arith.constant 0 : i32
    %c0_i32_0 = arith.constant 0 : i32
    %c0_i32_1 = arith.constant 0 : i32
    return %c0_i32, %c0_i32_0 : i32, i32
  }
  func.func @transform_12(%arg0: i32) -> (i32, i32) {
    %c0_i32 = arith.constant 0 : i32
    %c0_i32_0 = arith.constant 0 : i32
    %c0_i32_1 = arith.constant 0 : i32
    return %c0_i32, %c0_i32_0 : i32, i32
  }
  func.func @transform_13(%arg0: i32) -> (i32, i32) {
    %c0_i32 = arith.constant 0 : i32
    %c0_i32_0 = arith.constant 0 : i32
    %c0_i32_1 = arith.constant 0 : i32
    return %c0_i32, %c0_i32_0 : i32, i32
  }
  func.func @transform_14(%arg0: i32) -> (i32, i32) {
    %c0_i32 = arith.constant 0 : i32
    %c0_i32_0 = arith.constant 0 : i32
    %c0_i32_1 = arith.constant 0 : i32
    return %c0_i32, %c0_i32_0 : i32, i32
  }
  func.func @transform_15(%arg0: i32) -> (i32, i32) {
    %c0_i32 = arith.constant 0 : i32
    %c0_i32_0 = arith.constant 0 : i32
    %c0_i32_1 = arith.constant 0 : i32
    return %c0_i32, %c0_i32_0 : i32, i32
  }
  func.func @transform_16(%arg0: i32) -> (i32, i32) {
    %c0_i32 = arith.constant 0 : i32
    %c0_i32_0 = arith.constant 0 : i32
    %c0_i32_1 = arith.constant 0 : i32
    return %c0_i32, %c0_i32_0 : i32, i32
  }
  func.func @transform_17(%arg0: i32) -> (i32, i32) {
    %c0_i32 = arith.constant 0 : i32
    %c0_i32_0 = arith.constant 0 : i32
    %c0_i32_1 = arith.constant 0 : i32
    return %c0_i32, %c0_i32_0 : i32, i32
  }
  func.func @transform_18(%arg0: i32) -> (i32, i32) {
    %c0_i32 = arith.constant 0 : i32
    %c0_i32_0 = arith.constant 0 : i32
    %c0_i32_1 = arith.constant 0 : i32
    return %c0_i32, %c0_i32_0 : i32, i32
  }
  func.func @transform_19(%arg0: i32) -> (i32, i32) {
    %c0_i32 = arith.constant 0 : i32
    %c0_i32_0 = arith.constant 0 : i32
    %c0_i32_1 = arith.constant 0 : i32
    return %c0_i32, %c0_i32_0 : i32, i32
  }
  func.func @transform_20(%arg0: i32) -> (i32, i32) {
    %c0_i32 = arith.constant 0 : i32
    %c0_i32_0 = arith.constant 0 : i32
    %c0_i32_1 = arith.constant 0 : i32
    return %c0_i32, %c0_i32_0 : i32, i32
  }
  func.func @transform_21(%arg0: i32) -> (i32, i32) {
    %c0_i32 = arith.constant 0 : i32
    %c0_i32_0 = arith.constant 0 : i32
    %c0_i32_1 = arith.constant 0 : i32
    return %c0_i32, %c0_i32_0 : i32, i32
  }
  func.func @transform_22(%arg0: i32) -> (i32, i32) {
    %c0_i32 = arith.constant 0 : i32
    %c0_i32_0 = arith.constant 0 : i32
    %c0_i32_1 = arith.constant 0 : i32
    return %c0_i32, %c0_i32_0 : i32, i32
  }
  func.func @transform_23(%arg0: i32) -> (i32, i32) {
    %c0_i32 = arith.constant 0 : i32
    %c0_i32_0 = arith.constant 0 : i32
    %c0_i32_1 = arith.constant 0 : i32
    return %c0_i32, %c0_i32_0 : i32, i32
  }
  func.func @transform_24(%arg0: i32) -> (i32, i32) {
    %c0_i32 = arith.constant 0 : i32
    %c0_i32_0 = arith.constant 0 : i32
    %c0_i32_1 = arith.constant 0 : i32
    return %c0_i32, %c0_i32_0 : i32, i32
  }
  func.func @transform_25(%arg0: i32) -> (i32, i32, i32) {
    %c0_i32 = arith.constant 0 : i32
    %c0_i32_0 = arith.constant 0 : i32
    %c0_i32_1 = arith.constant 0 : i32
    return %arg0, %c0_i32, %c0_i32_0 : i32, i32, i32
  }
}

</mosaic_0001>

<llo_original>
// kernel: tpu_custom_call.1
$region0: #{tpu_custom_call.1}
  #allocation0 [shape = 'u32[]', space=smem, size = 0x4, offset = 0x4, fixed_abs, tag = 'smem constant byte address 0x4 - core index']
  #allocation1 [shape = 'u32[144,128]{1,0:T(1,128)}', space=vmem, size = 0x12000, scoped, tag = 'internal scratch']
  %s0 = inlined_call_operand.vmem [shape: f32[2,8,16], index: 0, kind: input, shape index: {}]
  %s1 = inlined_call_operand.hbm [shape: f32[2,1,8], index: 1, kind: input, shape index: {}]
  %s2 = inlined_call_operand.hbm [shape: f32[2,1,32], index: 2, kind: input, shape index: {}]
  %s3 = inlined_call_operand.hbm [shape: f32[1,16], index: 3, kind: input, shape index: {}]
  %s4 = inlined_call_operand.hbm [shape: f32[1,16], index: 4, kind: input, shape index: {}]
  %s5 = inlined_call_operand.hbm [shape: bf16[16,32], index: 5, kind: input, shape index: {}]
  %s6 = inlined_call_operand.hbm [shape: f32[1,32], index: 6, kind: input, shape index: {}]
  %s7 = inlined_call_operand.vmem [shape: bf16[32,112], index: 7, kind: input, shape index: {}]
  %s8 = inlined_call_operand.hbm [shape: f32[1,112], index: 8, kind: input, shape index: {}]
  %s9 = inlined_call_operand.hbm [shape: bf16[8,32], index: 9, kind: input, shape index: {}]
  %s10 = inlined_call_operand.hbm [shape: bf16[8,32], index: 10, kind: input, shape index: {}]
  %s11 = inlined_call_operand.vmem [shape: bf16[32,32], index: 11, kind: input, shape index: {}]
  %s12 = inlined_call_operand.hbm [shape: f32[1,32], index: 12, kind: input, shape index: {}]
  %s13 = inlined_call_operand.hbm [shape: f32[1,32], index: 13, kind: input, shape index: {}]
  %s14 = inlined_call_operand.hbm [shape: f32[1,32], index: 14, kind: input, shape index: {}]
  %s15 = inlined_call_operand.vmem [shape: bf16[32,64], index: 15, kind: input, shape index: {}]
  %s16 = inlined_call_operand.hbm [shape: f32[1,64], index: 16, kind: input, shape index: {}]
  %s17 = inlined_call_operand.vmem [shape: bf16[64,32], index: 17, kind: input, shape index: {}]
  %s18 = inlined_call_operand.vmem [shape: f32[1,32], index: 18, kind: input, shape index: {}]
  %s19 = inlined_call_operand.vmem [shape: f32[1,32], index: 19, kind: input, shape index: {}]
  %s20 = inlined_call_operand.vmem [shape: f32[1,32], index: 20, kind: input, shape index: {}]
  %s21 = inlined_call_operand.vmem [shape: bf16[32,32], index: 21, kind: input, shape index: {}]
  %s22 = inlined_call_operand.vmem [shape: f32[1,32], index: 22, kind: input, shape index: {}]
  %s23 = inlined_call_operand.vmem [shape: bf16[32,128], index: 23, kind: input, shape index: {}]
  %s24 = inlined_call_operand.vmem [shape: f32[1,128], index: 24, kind: input, shape index: {}]
  %s25 = inlined_call_operand.hbm [shape: f32[2,1,128], index: 25, kind: output, shape index: {}]
  %s26 = sld [smem:[#allocation0]]
  $region185: #{tpu_custom_call.1} parent=0
    _
  %s28 = ssub.s32 1, %s26
  %s29 = scalar_select 0, %s28, %s26
  $region1: #{tpu_custom_call.1} parent=0
    #allocation2 [shape = 'u8[1024]{0}', space=vmem, size = 0x400, scoped, tag = 'input window, operand 1']
    #allocation3 [shape = 's32[2]{0}', space=sflag, size = 0x8, scoped, tag = 'scoped memory for tpu_custom_call.1']
    #allocation4 [shape = 's32[2]{0}', space=sflag, size = 0x8, scoped, tag = 'scoped memory for tpu_custom_call.1']
    #allocation5 [shape = 'u8[1024]{0}', space=vmem, size = 0x400, scoped, tag = 'input window, operand 2']
    #allocation6 [shape = 's32[2]{0}', space=sflag, size = 0x8, scoped, tag = 'scoped memory for tpu_custom_call.1']
    #allocation7 [shape = 'u8[512]{0}', space=vmem, size = 0x400, scoped, tag = 'input window, operand 3, single buffered']
    #allocation8 [shape = 'u8[512]{0}', space=vmem, size = 0x400, scoped, tag = 'input window, operand 4, single buffered']
    #allocation9 [shape = 's32[1]{0}', space=sflag, size = 0x4, scoped, tag = 'scoped memory for tpu_custom_call.1']
    #allocation10 [shape = 'u8[4096]{0}', space=vmem, size = 0x1000, scoped, tag = 'input window, operand 5, single buffered']
    #allocation11 [shape = 'u8[512]{0}', space=vmem, size = 0x400, scoped, tag = 'input window, operand 6, single buffered']
    #allocation12 [shape = 's32[1]{0}', space=sflag, size = 0x4, scoped, tag = 'scoped memory for tpu_custom_call.1']
    #allocation13 [shape = 'u8[512]{0}', space=vmem, size = 0x400, scoped, tag = 'input window, operand 8, single buffered']
    #allocation14 [shape = 'u8[2048]{0}', space=vmem, size = 0x800, scoped, tag = 'input window, operand 9, single buffered']
    #allocation15 [shape = 's32[1]{0}', space=sflag, size = 0x4, scoped, tag = 'scoped memory for tpu_custom_call.1']
    #allocation16 [shape = 'u8[2048]{0}', space=vmem, size = 0x800, scoped, tag = 'input window, operand 10, single buffered']
    #allocation17 [shape = 'u8[512]{0}', space=vmem, size = 0x400, scoped, tag = 'input window, operand 12, single buffered']
    #allocation18 [shape = 's32[1]{0}', space=sflag, size = 0x4, scoped, tag = 'scoped memory for tpu_custom_call.1']
    #allocation19 [shape = 'u8[512]{0}', space=vmem, size = 0x400, scoped, tag = 'input window, operand 13, single buffered']
    #allocation20 [shape = 'u8[512]{0}', space=vmem, size = 0x400, scoped, tag = 'input window, operand 14, single buffered']
    #allocation21 [shape = 's32[1]{0}', space=sflag, size = 0x4, scoped, tag = 'scoped memory for tpu_custom_call.1']
    #allocation22 [shape = 'u8[512]{0}', space=vmem, size = 0x400, scoped, tag = 'input window, operand 16, single buffered']
    #allocation23 [shape = 'u8[1024]{0}', space=vmem, size = 0x400, scoped, tag = 'output window, operand 0']
    %30 = vsyncpa [#allocation3], 0
    %s31 = scalar_lea.sflag [#allocation3], 1
    %32 = vsyncpa %s31, 0
    %33 = vsyncpa [#allocation6], 0
    %s34 = scalar_lea.sflag [#allocation6], 1
    %35 = vsyncpa %s34, 0
    %36 = vsyncpa [#allocation9], 0
    %37 = vsyncpa [#allocation12], 0
    %38 = vsyncpa [#allocation15], 0
    %39 = vsyncpa [#allocation18], 0
    %40 = vsyncpa [#allocation21], 0
    %41 = vsyncpa [#allocation4], 0
    %s42 = scalar_lea.sflag [#allocation4], 1
    %43 = vsyncpa %s42, 0
    loop: start=0, step=1, limit=4
    $region2: #{tpu_custom_call.1} parent=1 // loop_pre_header
      _
    $region3: #{tpu_custom_call.1} parent=1 // loop_header
      %s45 = sphi 0, %s49
      %p46 = scmp.ge.s32.totalorder %s45, 4
      %s55 = sphi 0, %s57
      %s58 = sphi 0, %s55
      %s59 = sphi 0, %s58
      %s75 = sphi 0, %s59
      %s81 = sphi 0, %s83
      %s84 = sphi 0, %s81
      %s85 = sphi 0, %s84
      %s101 = sphi 0, %s85
      %s107 = sphi 0, %s109
      %s110 = sphi 0, %s107
      %s111 = sphi 0, %s110
      %s127 = sphi 0, %s111
      %s131 = sphi 0, %s131
      %s133 = sphi 0, %s131
      %s134 = sphi 0, %s133
      %s148 = sphi 0, %s134
      %s152 = sphi 0, %s152
      %s154 = sphi 0, %s152
      %s155 = sphi 0, %s154
      %s169 = sphi 0, %s155
      %s173 = sphi 0, %s173
      %s175 = sphi 0, %s173
      %s176 = sphi 0, %s175
      %s190 = sphi 0, %s176
      %s194 = sphi 0, %s194
      %s196 = sphi 0, %s194
      %s197 = sphi 0, %s196
      %s211 = sphi 0, %s197
      %s215 = sphi 0, %s215
      %s217 = sphi 0, %s215
      %s218 = sphi 0, %s217
      %s232 = sphi 0, %s218
      %s236 = sphi 0, %s236
      %s238 = sphi 0, %s236
      %s239 = sphi 0, %s238
      %s253 = sphi 0, %s239
      %s257 = sphi 0, %s257
      %s259 = sphi 0, %s257
      %s260 = sphi 0, %s259
      %s274 = sphi 0, %s260
      %s278 = sphi 0, %s278
      %s280 = sphi 0, %s278
      %s281 = sphi 0, %s280
      %s295 = sphi 0, %s281
      %s299 = sphi 0, %s299
      %s301 = sphi 0, %s299
      %s302 = sphi 0, %s301
      %s316 = sphi 0, %s302
      %s320 = sphi 0, %s320
      %s322 = sphi 0, %s320
      %s323 = sphi 0, %s322
      %s337 = sphi 0, %s323
      %s341 = sphi 0, %s341
      %s343 = sphi 0, %s341
      %s344 = sphi 0, %s343
      %s358 = sphi 0, %s344
      %s362 = sphi 0, %s362
      %s364 = sphi 0, %s362
      %s365 = sphi 0, %s364
      %s379 = sphi 0, %s365
      %s383 = sphi 0, %s383
      %s385 = sphi 0, %s383
      %s386 = sphi 0, %s385
      %s400 = sphi 0, %s386
      %s404 = sphi 0, %s404
      %s406 = sphi 0, %s404
      %s407 = sphi 0, %s406
      %s421 = sphi 0, %s407
      %s425 = sphi 0, %s425
      %s427 = sphi 0, %s425
      %s428 = sphi 0, %s427
      %s442 = sphi 0, %s428
      %s446 = sphi 0, %s446
      %s448 = sphi 0, %s446
      %s449 = sphi 0, %s448
      %s463 = sphi 0, %s449
      %s467 = sphi 0, %s467
      %s469 = sphi 0, %s467
      %s470 = sphi 0, %s469
      %s484 = sphi 0, %s470
      %s488 = sphi 0, %s488
      %s490 = sphi 0, %s488
      %s491 = sphi 0, %s490
      %s505 = sphi 0, %s491
      %s509 = sphi 0, %s509
      %s511 = sphi 0, %s509
      %s512 = sphi 0, %s511
      %s526 = sphi 0, %s512
      %s530 = sphi 0, %s530
      %s532 = sphi 0, %s530
      %s533 = sphi 0, %s532
      %s547 = sphi 0, %s533
      %s551 = sphi 0, %s551
      %s553 = sphi 0, %s551
      %s554 = sphi 0, %s553
      %s568 = sphi 0, %s554
      %s572 = sphi 0, %s572
      %s574 = sphi 0, %s572
      %s575 = sphi 0, %s574
      %s589 = sphi 0, %s575
      %s595 = sphi 0, %s597
      %s598 = sphi 0, %s595
      %s599 = sphi 0, %s598
      %s615 = sphi 0, %s599
    $region4: #{tpu_custom_call.1} parent=1 // loop_header_branch
      %48 = sbr.rel (%p46) target = $region8
    $region5: #{tpu_custom_call.1} parent=1 // loop_body
      %s50 = ssub.s32 %s45, 1
      %s51 = ssub.s32 %s45, 2
      %s52 = sadd.s32 %s45, 1
      %s53 = ssub.s32 %s45, %s52
      %p54 = scmp.eq.s32.totalorder %s53, 0
      %s56 = sadd.s32 %s55, 1
      %s57 = scalar_select %p54, %s55, %s56
      %p60 = pneg %p54
      %p61 = scmp.eq.s32.totalorder %s45, 1
      %p62 = por %p60, %p61
      %p63 = scmp.ne.s32.totalorder %s55, %s58
      %p64 = scmp.eq.s32.totalorder %s45, 0
      %p65 = por %p63, %p64
      %p66 = scmp.ne.s32.totalorder %s55, %s58
      %p67 = scmp.eq.s32.totalorder %s50, 1
      %p68 = por %p66, %p67
      %p69 = scmp.ne.s32.totalorder %s58, %s59
      %p70 = scmp.eq.s32.totalorder %s50, 0
      %p71 = por %p69, %p70
      %p72 = scmp.ne.s32.totalorder %s58, %s59
      %p73 = scmp.eq.s32.totalorder %s51, 1
      %p74 = por %p72, %p73
      %p76 = scmp.ne.s32.totalorder %s59, %s75
      %p77 = scmp.eq.s32.totalorder %s51, 0
      %p78 = por %p76, %p77
      %s79 = ssub.s32 %s45, %s52
      %p80 = scmp.eq.s32.totalorder %s79, 0
      %s82 = sadd.s32 %s81, 1
      %s83 = scalar_select %p80, %s81, %s82
      %p86 = pneg %p80
      %p87 = scmp.eq.s32.totalorder %s45, 1
      %p88 = por %p86, %p87
      %p89 = scmp.ne.s32.totalorder %s81, %s84
      %p90 = scmp.eq.s32.totalorder %s45, 0
      %p91 = por %p89, %p90
      %p92 = scmp.ne.s32.totalorder %s81, %s84
      %p93 = scmp.eq.s32.totalorder %s50, 1
      %p94 = por %p92, %p93
      %p95 = scmp.ne.s32.totalorder %s84, %s85
      %p96 = scmp.eq.s32.totalorder %s50, 0
      %p97 = por %p95, %p96
      %p98 = scmp.ne.s32.totalorder %s84, %s85
      %p99 = scmp.eq.s32.totalorder %s51, 1
      %p100 = por %p98, %p99
      %p102 = scmp.ne.s32.totalorder %s85, %s101
      %p103 = scmp.eq.s32.totalorder %s51, 0
      %p104 = por %p102, %p103
      %s105 = ssub.s32 %s45, %s52
      %p106 = scmp.eq.s32.totalorder %s105, 0
      %s108 = sadd.s32 %s107, 1
      %s109 = scalar_select %p106, %s107, %s108
      %p112 = pneg %p106
      %p113 = scmp.eq.s32.totalorder %s45, 1
      %p114 = por %p112, %p113
      %p115 = scmp.ne.s32.totalorder %s107, %s110
      %p116 = scmp.eq.s32.totalorder %s45, 0
      %p117 = por %p115, %p116
      %p118 = scmp.ne.s32.totalorder %s107, %s110
      %p119 = scmp.eq.s32.totalorder %s50, 1
      %p120 = por %p118, %p119
      %p121 = scmp.ne.s32.totalorder %s110, %s111
      %p122 = scmp.eq.s32.totalorder %s50, 0
      %p123 = por %p121, %p122
      %p124 = scmp.ne.s32.totalorder %s110, %s111
      %p125 = scmp.eq.s32.totalorder %s51, 1
      %p126 = por %p124, %p125
      %p128 = scmp.ne.s32.totalorder %s111, %s127
      %p129 = scmp.eq.s32.totalorder %s51, 0
      %p130 = por %p128, %p129
      %s132 = sadd.s32 %s131, 1
      %p135 = scmp.eq.s32.totalorder %s45, 1
      %p136 = scmp.ne.s32.totalorder %s131, %s133
      %p137 = scmp.eq.s32.totalorder %s45, 0
      %p138 = por %p136, %p137
      %p139 = scmp.ne.s32.totalorder %s131, %s133
      %p140 = scmp.eq.s32.totalorder %s50, 1
      %p141 = por %p139, %p140
      %p142 = scmp.ne.s32.totalorder %s133, %s134
      %p143 = scmp.eq.s32.totalorder %s50, 0
      %p144 = por %p142, %p143
      %p145 = scmp.ne.s32.totalorder %s133, %s134
      %p146 = scmp.eq.s32.totalorder %s51, 1
      %p147 = por %p145, %p146
      %p149 = scmp.ne.s32.totalorder %s134, %s148
      %p150 = scmp.eq.s32.totalorder %s51, 0
      %p151 = por %p149, %p150
      %s153 = sadd.s32 %s152, 1
      %p156 = scmp.eq.s32.totalorder %s45, 1
      %p157 = scmp.ne.s32.totalorder %s152, %s154
      %p158 = scmp.eq.s32.totalorder %s45, 0
      %p159 = por %p157, %p158
      %p160 = scmp.ne.s32.totalorder %s152, %s154
      %p161 = scmp.eq.s32.totalorder %s50, 1
      %p162 = por %p160, %p161
      %p163 = scmp.ne.s32.totalorder %s154, %s155
      %p164 = scmp.eq.s32.totalorder %s50, 0
      %p165 = por %p163, %p164
      %p166 = scmp.ne.s32.totalorder %s154, %s155
      %p167 = scmp.eq.s32.totalorder %s51, 1
      %p168 = por %p166, %p167
      %p170 = scmp.ne.s32.totalorder %s155, %s169
      %p171 = scmp.eq.s32.totalorder %s51, 0
      %p172 = por %p170, %p171
      %s174 = sadd.s32 %s173, 1
      %p177 = scmp.eq.s32.totalorder %s45, 1
      %p178 = scmp.ne.s32.totalorder %s173, %s175
      %p179 = scmp.eq.s32.totalorder %s45, 0
      %p180 = por %p178, %p179
      %p181 = scmp.ne.s32.totalorder %s173, %s175
      %p182 = scmp.eq.s32.totalorder %s50, 1
      %p183 = por %p181, %p182
      %p184 = scmp.ne.s32.totalorder %s175, %s176
      %p185 = scmp.eq.s32.totalorder %s50, 0
      %p186 = por %p184, %p185
      %p187 = scmp.ne.s32.totalorder %s175, %s176
      %p188 = scmp.eq.s32.totalorder %s51, 1
      %p189 = por %p187, %p188
      %p191 = scmp.ne.s32.totalorder %s176, %s190
      %p192 = scmp.eq.s32.totalorder %s51, 0
      %p193 = por %p191, %p192
      %s195 = sadd.s32 %s194, 1
      %p198 = scmp.eq.s32.totalorder %s45, 1
      %p199 = scmp.ne.s32.totalorder %s194, %s196
      %p200 = scmp.eq.s32.totalorder %s45, 0
      %p201 = por %p199, %p200
      %p202 = scmp.ne.s32.totalorder %s194, %s196
      %p203 = scmp.eq.s32.totalorder %s50, 1
      %p204 = por %p202, %p203
      %p205 = scmp.ne.s32.totalorder %s196, %s197
      %p206 = scmp.eq.s32.totalorder %s50, 0
      %p207 = por %p205, %p206
      %p208 = scmp.ne.s32.totalorder %s196, %s197
      %p209 = scmp.eq.s32.totalorder %s51, 1
      %p210 = por %p208, %p209
      %p212 = scmp.ne.s32.totalorder %s197, %s211
      %p213 = scmp.eq.s32.totalorder %s51, 0
      %p214 = por %p212, %p213
      %s216 = sadd.s32 %s215, 1
      %p219 = scmp.eq.s32.totalorder %s45, 1
      %p220 = scmp.ne.s32.totalorder %s215, %s217
      %p221 = scmp.eq.s32.totalorder %s45, 0
      %p222 = por %p220, %p221
      %p223 = scmp.ne.s32.totalorder %s215, %s217
      %p224 = scmp.eq.s32.totalorder %s50, 1
      %p225 = por %p223, %p224
      %p226 = scmp.ne.s32.totalorder %s217, %s218
      %p227 = scmp.eq.s32.totalorder %s50, 0
      %p228 = por %p226, %p227
      %p229 = scmp.ne.s32.totalorder %s217, %s218
      %p230 = scmp.eq.s32.totalorder %s51, 1
      %p231 = por %p229, %p230
      %p233 = scmp.ne.s32.totalorder %s218, %s232
      %p234 = scmp.eq.s32.totalorder %s51, 0
      %p235 = por %p233, %p234
      %s237 = sadd.s32 %s236, 1
      %p240 = scmp.eq.s32.totalorder %s45, 1
      %p241 = scmp.ne.s32.totalorder %s236, %s238
      %p242 = scmp.eq.s32.totalorder %s45, 0
      %p243 = por %p241, %p242
      %p244 = scmp.ne.s32.totalorder %s236, %s238
      %p245 = scmp.eq.s32.totalorder %s50, 1
      %p246 = por %p244, %p245
      %p247 = scmp.ne.s32.totalorder %s238, %s239
      %p248 = scmp.eq.s32.totalorder %s50, 0
      %p249 = por %p247, %p248
      %p250 = scmp.ne.s32.totalorder %s238, %s239
      %p251 = scmp.eq.s32.totalorder %s51, 1
      %p252 = por %p250, %p251
      %p254 = scmp.ne.s32.totalorder %s239, %s253
      %p255 = scmp.eq.s32.totalorder %s51, 0
      %p256 = por %p254, %p255
      %s258 = sadd.s32 %s257, 1
      %p261 = scmp.eq.s32.totalorder %s45, 1
      %p262 = scmp.ne.s32.totalorder %s257, %s259
      %p263 = scmp.eq.s32.totalorder %s45, 0
      %p264 = por %p262, %p263
      %p265 = scmp.ne.s32.totalorder %s257, %s259
      %p266 = scmp.eq.s32.totalorder %s50, 1
      %p267 = por %p265, %p266
      %p268 = scmp.ne.s32.totalorder %s259, %s260
      %p269 = scmp.eq.s32.totalorder %s50, 0
      %p270 = por %p268, %p269
      %p271 = scmp.ne.s32.totalorder %s259, %s260
      %p272 = scmp.eq.s32.totalorder %s51, 1
      %p273 = por %p271, %p272
      %p275 = scmp.ne.s32.totalorder %s260, %s274
      %p276 = scmp.eq.s32.totalorder %s51, 0
      %p277 = por %p275, %p276
      %s279 = sadd.s32 %s278, 1
      %p282 = scmp.eq.s32.totalorder %s45, 1
      %p283 = scmp.ne.s32.totalorder %s278, %s280
      %p284 = scmp.eq.s32.totalorder %s45, 0
      %p285 = por %p283, %p284
      %p286 = scmp.ne.s32.totalorder %s278, %s280
      %p287 = scmp.eq.s32.totalorder %s50, 1
      %p288 = por %p286, %p287
      %p289 = scmp.ne.s32.totalorder %s280, %s281
      %p290 = scmp.eq.s32.totalorder %s50, 0
      %p291 = por %p289, %p290
      %p292 = scmp.ne.s32.totalorder %s280, %s281
      %p293 = scmp.eq.s32.totalorder %s51, 1
      %p294 = por %p292, %p293
      %p296 = scmp.ne.s32.totalorder %s281, %s295
      %p297 = scmp.eq.s32.totalorder %s51, 0
      %p298 = por %p296, %p297
      %s300 = sadd.s32 %s299, 1
      %p303 = scmp.eq.s32.totalorder %s45, 1
      %p304 = scmp.ne.s32.totalorder %s299, %s301
      %p305 = scmp.eq.s32.totalorder %s45, 0
      %p306 = por %p304, %p305
      %p307 = scmp.ne.s32.totalorder %s299, %s301
      %p308 = scmp.eq.s32.totalorder %s50, 1
      %p309 = por %p307, %p308
      %p310 = scmp.ne.s32.totalorder %s301, %s302
      %p311 = scmp.eq.s32.totalorder %s50, 0
      %p312 = por %p310, %p311
      %p313 = scmp.ne.s32.totalorder %s301, %s302
      %p314 = scmp.eq.s32.totalorder %s51, 1
      %p315 = por %p313, %p314
      %p317 = scmp.ne.s32.totalorder %s302, %s316
      %p318 = scmp.eq.s32.totalorder %s51, 0
      %p319 = por %p317, %p318
      %s321 = sadd.s32 %s320, 1
      %p324 = scmp.eq.s32.totalorder %s45, 1
      %p325 = scmp.ne.s32.totalorder %s320, %s322
      %p326 = scmp.eq.s32.totalorder %s45, 0
      %p327 = por %p325, %p326
      %p328 = scmp.ne.s32.totalorder %s320, %s322
      %p329 = scmp.eq.s32.totalorder %s50, 1
      %p330 = por %p328, %p329
      %p331 = scmp.ne.s32.totalorder %s322, %s323
      %p332 = scmp.eq.s32.totalorder %s50, 0
      %p333 = por %p331, %p332
      %p334 = scmp.ne.s32.totalorder %s322, %s323
      %p335 = scmp.eq.s32.totalorder %s51, 1
      %p336 = por %p334, %p335
      %p338 = scmp.ne.s32.totalorder %s323, %s337
      %p339 = scmp.eq.s32.totalorder %s51, 0
      %p340 = por %p338, %p339
      %s342 = sadd.s32 %s341, 1
      %p345 = scmp.eq.s32.totalorder %s45, 1
      %p346 = scmp.ne.s32.totalorder %s341, %s343
      %p347 = scmp.eq.s32.totalorder %s45, 0
      %p348 = por %p346, %p347
      %p349 = scmp.ne.s32.totalorder %s341, %s343
      %p350 = scmp.eq.s32.totalorder %s50, 1
      %p351 = por %p349, %p350
      %p352 = scmp.ne.s32.totalorder %s343, %s344
      %p353 = scmp.eq.s32.totalorder %s50, 0
      %p354 = por %p352, %p353
      %p355 = scmp.ne.s32.totalorder %s343, %s344
      %p356 = scmp.eq.s32.totalorder %s51, 1
      %p357 = por %p355, %p356
      %p359 = scmp.ne.s32.totalorder %s344, %s358
      %p360 = scmp.eq.s32.totalorder %s51, 0
      %p361 = por %p359, %p360
      %s363 = sadd.s32 %s362, 1
      %p366 = scmp.eq.s32.totalorder %s45, 1
      %p367 = scmp.ne.s32.totalorder %s362, %s364
      %p368 = scmp.eq.s32.totalorder %s45, 0
      %p369 = por %p367, %p368
      %p370 = scmp.ne.s32.totalorder %s362, %s364
      %p371 = scmp.eq.s32.totalorder %s50, 1
      %p372 = por %p370, %p371
      %p373 = scmp.ne.s32.totalorder %s364, %s365
      %p374 = scmp.eq.s32.totalorder %s50, 0
      %p375 = por %p373, %p374
      %p376 = scmp.ne.s32.totalorder %s364, %s365
      %p377 = scmp.eq.s32.totalorder %s51, 1
      %p378 = por %p376, %p377
      %p380 = scmp.ne.s32.totalorder %s365, %s379
      %p381 = scmp.eq.s32.totalorder %s51, 0
      %p382 = por %p380, %p381
      %s384 = sadd.s32 %s383, 1
      %p387 = scmp.eq.s32.totalorder %s45, 1
      %p388 = scmp.ne.s32.totalorder %s383, %s385
      %p389 = scmp.eq.s32.totalorder %s45, 0
      %p390 = por %p388, %p389
      %p391 = scmp.ne.s32.totalorder %s383, %s385
      %p392 = scmp.eq.s32.totalorder %s50, 1
      %p393 = por %p391, %p392
      %p394 = scmp.ne.s32.totalorder %s385, %s386
      %p395 = scmp.eq.s32.totalorder %s50, 0
      %p396 = por %p394, %p395
      %p397 = scmp.ne.s32.totalorder %s385, %s386
      %p398 = scmp.eq.s32.totalorder %s51, 1
      %p399 = por %p397, %p398
      %p401 = scmp.ne.s32.totalorder %s386, %s400
      %p402 = scmp.eq.s32.totalorder %s51, 0
      %p403 = por %p401, %p402
      %s405 = sadd.s32 %s404, 1
      %p408 = scmp.eq.s32.totalorder %s45, 1
      %p409 = scmp.ne.s32.totalorder %s404, %s406
      %p410 = scmp.eq.s32.totalorder %s45, 0
      %p411 = por %p409, %p410
      %p412 = scmp.ne.s32.totalorder %s404, %s406
      %p413 = scmp.eq.s32.totalorder %s50, 1
      %p414 = por %p412, %p413
      %p415 = scmp.ne.s32.totalorder %s406, %s407
      %p416 = scmp.eq.s32.totalorder %s50, 0
      %p417 = por %p415, %p416
      %p418 = scmp.ne.s32.totalorder %s406, %s407
      %p419 = scmp.eq.s32.totalorder %s51, 1
      %p420 = por %p418, %p419
      %p422 = scmp.ne.s32.totalorder %s407, %s421
      %p423 = scmp.eq.s32.totalorder %s51, 0
      %p424 = por %p422, %p423
      %s426 = sadd.s32 %s425, 1
      %p429 = scmp.eq.s32.totalorder %s45, 1
      %p430 = scmp.ne.s32.totalorder %s425, %s427
      %p431 = scmp.eq.s32.totalorder %s45, 0
      %p432 = por %p430, %p431
      %p433 = scmp.ne.s32.totalorder %s425, %s427
      %p434 = scmp.eq.s32.totalorder %s50, 1
      %p435 = por %p433, %p434
      %p436 = scmp.ne.s32.totalorder %s427, %s428
      %p437 = scmp.eq.s32.totalorder %s50, 0
      %p438 = por %p436, %p437
      %p439 = scmp.ne.s32.totalorder %s427, %s428
      %p440 = scmp.eq.s32.totalorder %s51, 1
      %p441 = por %p439, %p440
      %p443 = scmp.ne.s32.totalorder %s428, %s442
      %p444 = scmp.eq.s32.totalorder %s51, 0
      %p445 = por %p443, %p444
      %s447 = sadd.s32 %s446, 1
      %p450 = scmp.eq.s32.totalorder %s45, 1
      %p451 = scmp.ne.s32.totalorder %s446, %s448
      %p452 = scmp.eq.s32.totalorder %s45, 0
      %p453 = por %p451, %p452
      %p454 = scmp.ne.s32.totalorder %s446, %s448
      %p455 = scmp.eq.s32.totalorder %s50, 1
      %p456 = por %p454, %p455
      %p457 = scmp.ne.s32.totalorder %s448, %s449
      %p458 = scmp.eq.s32.totalorder %s50, 0
      %p459 = por %p457, %p458
      %p460 = scmp.ne.s32.totalorder %s448, %s449
      %p461 = scmp.eq.s32.totalorder %s51, 1
      %p462 = por %p460, %p461
      %p464 = scmp.ne.s32.totalorder %s449, %s463
      %p465 = scmp.eq.s32.totalorder %s51, 0
      %p466 = por %p464, %p465
      %s468 = sadd.s32 %s467, 1
      %p471 = scmp.eq.s32.totalorder %s45, 1
      %p472 = scmp.ne.s32.totalorder %s467, %s469
      %p473 = scmp.eq.s32.totalorder %s45, 0
      %p474 = por %p472, %p473
      %p475 = scmp.ne.s32.totalorder %s467, %s469
      %p476 = scmp.eq.s32.totalorder %s50, 1
      %p477 = por %p475, %p476
      %p478 = scmp.ne.s32.totalorder %s469, %s470
      %p479 = scmp.eq.s32.totalorder %s50, 0
      %p480 = por %p478, %p479
      %p481 = scmp.ne.s32.totalorder %s469, %s470
      %p482 = scmp.eq.s32.totalorder %s51, 1
      %p483 = por %p481, %p482
      %p485 = scmp.ne.s32.totalorder %s470, %s484
      %p486 = scmp.eq.s32.totalorder %s51, 0
      %p487 = por %p485, %p486
      %s489 = sadd.s32 %s488, 1
      %p492 = scmp.eq.s32.totalorder %s45, 1
      %p493 = scmp.ne.s32.totalorder %s488, %s490
      %p494 = scmp.eq.s32.totalorder %s45, 0
      %p495 = por %p493, %p494
      %p496 = scmp.ne.s32.totalorder %s488, %s490
      %p497 = scmp.eq.s32.totalorder %s50, 1
      %p498 = por %p496, %p497
      %p499 = scmp.ne.s32.totalorder %s490, %s491
      %p500 = scmp.eq.s32.totalorder %s50, 0
      %p501 = por %p499, %p500
      %p502 = scmp.ne.s32.totalorder %s490, %s491
      %p503 = scmp.eq.s32.totalorder %s51, 1
      %p504 = por %p502, %p503
      %p506 = scmp.ne.s32.totalorder %s491, %s505
      %p507 = scmp.eq.s32.totalorder %s51, 0
      %p508 = por %p506, %p507
      %s510 = sadd.s32 %s509, 1
      %p513 = scmp.eq.s32.totalorder %s45, 1
      %p514 = scmp.ne.s32.totalorder %s509, %s511
      %p515 = scmp.eq.s32.totalorder %s45, 0
      %p516 = por %p514, %p515
      %p517 = scmp.ne.s32.totalorder %s509, %s511
      %p518 = scmp.eq.s32.totalorder %s50, 1
      %p519 = por %p517, %p518
      %p520 = scmp.ne.s32.totalorder %s511, %s512
      %p521 = scmp.eq.s32.totalorder %s50, 0
      %p522 = por %p520, %p521
      %p523 = scmp.ne.s32.totalorder %s511, %s512
      %p524 = scmp.eq.s32.totalorder %s51, 1
      %p525 = por %p523, %p524
      %p527 = scmp.ne.s32.totalorder %s512, %s526
      %p528 = scmp.eq.s32.totalorder %s51, 0
      %p529 = por %p527, %p528
      %s531 = sadd.s32 %s530, 1
      %p534 = scmp.eq.s32.totalorder %s45, 1
      %p535 = scmp.ne.s32.totalorder %s530, %s532
      %p536 = scmp.eq.s32.totalorder %s45, 0
      %p537 = por %p535, %p536
      %p538 = scmp.ne.s32.totalorder %s530, %s532
      %p539 = scmp.eq.s32.totalorder %s50, 1
      %p540 = por %p538, %p539
      %p541 = scmp.ne.s32.totalorder %s532, %s533
      %p542 = scmp.eq.s32.totalorder %s50, 0
      %p543 = por %p541, %p542
      %p544 = scmp.ne.s32.totalorder %s532, %s533
      %p545 = scmp.eq.s32.totalorder %s51, 1
      %p546 = por %p544, %p545
      %p548 = scmp.ne.s32.totalorder %s533, %s547
      %p549 = scmp.eq.s32.totalorder %s51, 0
      %p550 = por %p548, %p549
      %s552 = sadd.s32 %s551, 1
      %p555 = scmp.eq.s32.totalorder %s45, 1
      %p556 = scmp.ne.s32.totalorder %s551, %s553
      %p557 = scmp.eq.s32.totalorder %s45, 0
      %p558 = por %p556, %p557
      %p559 = scmp.ne.s32.totalorder %s551, %s553
      %p560 = scmp.eq.s32.totalorder %s50, 1
      %p561 = por %p559, %p560
      %p562 = scmp.ne.s32.totalorder %s553, %s554
      %p563 = scmp.eq.s32.totalorder %s50, 0
      %p564 = por %p562, %p563
      %p565 = scmp.ne.s32.totalorder %s553, %s554
      %p566 = scmp.eq.s32.totalorder %s51, 1
      %p567 = por %p565, %p566
      %p569 = scmp.ne.s32.totalorder %s554, %s568
      %p570 = scmp.eq.s32.totalorder %s51, 0
      %p571 = por %p569, %p570
      %s573 = sadd.s32 %s572, 1
      %p576 = scmp.eq.s32.totalorder %s45, 1
      %p577 = scmp.ne.s32.totalorder %s572, %s574
      %p578 = scmp.eq.s32.totalorder %s45, 0
      %p579 = por %p577, %p578
      %p580 = scmp.ne.s32.totalorder %s572, %s574
      %p581 = scmp.eq.s32.totalorder %s50, 1
      %p582 = por %p580, %p581
      %p583 = scmp.ne.s32.totalorder %s574, %s575
      %p584 = scmp.eq.s32.totalorder %s50, 0
      %p585 = por %p583, %p584
      %p586 = scmp.ne.s32.totalorder %s574, %s575
      %p587 = scmp.eq.s32.totalorder %s51, 1
      %p588 = por %p586, %p587
      %p590 = scmp.ne.s32.totalorder %s575, %s589
      %p591 = scmp.eq.s32.totalorder %s51, 0
      %p592 = por %p590, %p591
      %s593 = ssub.s32 %s45, %s52
      %p594 = scmp.eq.s32.totalorder %s593, 0
      %s596 = sadd.s32 %s595, 1
      %s597 = scalar_select %p594, %s595, %s596
      %p600 = pneg %p594
      %p601 = scmp.eq.s32.totalorder %s45, 1
      %p602 = por %p600, %p601
      %p603 = scmp.ne.s32.totalorder %s595, %s598
      %p604 = scmp.eq.s32.totalorder %s45, 0
      %p605 = por %p603, %p604
      %p606 = scmp.ne.s32.totalorder %s595, %s598
      %p607 = scmp.eq.s32.totalorder %s50, 1
      %p608 = por %p606, %p607
      %p609 = scmp.ne.s32.totalorder %s598, %s599
      %p610 = scmp.eq.s32.totalorder %s50, 0
      %p611 = por %p609, %p610
      %p612 = scmp.ne.s32.totalorder %s598, %s599
      %p613 = scmp.eq.s32.totalorder %s51, 1
      %p614 = por %p612, %p613
      %p616 = scmp.ne.s32.totalorder %s599, %s615
      %p617 = scmp.eq.s32.totalorder %s51, 0
      %p618 = por %p616, %p617
      %p619 = scmp.le.s32.totalorder 1, %s45
      %p620 = scmp.lt.s32.totalorder %s45, 3
      %p621 = pnand %p619, %p620
      %p622 = pneg %p621
      // Predicated region
      $region9: #{tpu_custom_call.1} parent=5 // pred_check
        _
      $region10: #{tpu_custom_call.1} parent=5 // pred_check_branch
        %624 = sbr.rel (%p621) target = $region12
      $region11: #{tpu_custom_call.1} parent=5 // pred_region
        %s625 = ssub.s32 %s45, 1
        // Predicated region
        $region13: #{tpu_custom_call.1} parent=11 // pred_check
          %p626 = pneg %p144
        $region14: #{tpu_custom_call.1} parent=11 // pred_check_branch
          %628 = sbr.rel (%p626) target = $region16
        $region15: #{tpu_custom_call.1} parent=11 // pred_region
          %s630 = ssub.s32 16, 16
          %631 = vsyncadd [#allocation6], %s630
          %s633 = sshll.u32 [#allocation7], 4
          %s634 = int_to_ptr.vmem [resolvable:$true] %s633
          %636 = dma.hbm_to_vmem [thread:$0]  %s3, 16, %s634, [#allocation6]
        $region16: #{tpu_custom_call.1} parent=11 // pred_fallthru
          _
        // Predicated region
        $region17: #{tpu_custom_call.1} parent=11 // pred_check
          %p637 = pneg %p165
        $region18: #{tpu_custom_call.1} parent=11 // pred_check_branch
          %639 = sbr.rel (%p637) target = $region20
        $region19: #{tpu_custom_call.1} parent=11 // pred_region
          %s641 = ssub.s32 16, 16
          %642 = vsyncadd [#allocation9], %s641
          %s644 = sshll.u32 [#allocation8], 4
          %s645 = int_to_ptr.vmem [resolvable:$true] %s644
          %647 = dma.hbm_to_vmem [thread:$0]  %s4, 16, %s645, [#allocation9]
        $region20: #{tpu_custom_call.1} parent=11 // pred_fallthru
          _
        // Predicated region
        $region21: #{tpu_custom_call.1} parent=11 // pred_check
          %p648 = pneg %p186
        $region22: #{tpu_custom_call.1} parent=11 // pred_check_branch
          %650 = sbr.rel (%p648) target = $region24
        $region23: #{tpu_custom_call.1} parent=11 // pred_region
          %s652 = ssub.s32 128, 128
          %653 = vsyncadd [#allocation9], %s652
          %s654 = sshll.u32 [#allocation10], 4
          %s655 = int_to_ptr.vmem [resolvable:$true] %s654
          %660 = dma.hbm_to_vmem [thread:$0]  %s5, 128, %s655, [#allocation9], 64, 64, 4
        $region24: #{tpu_custom_call.1} parent=11 // pred_fallthru
          _
        // Predicated region
        $region25: #{tpu_custom_call.1} parent=11 // pred_check
          %p661 = pneg %p207
        $region26: #{tpu_custom_call.1} parent=11 // pred_check_branch
          %663 = sbr.rel (%p661) target = $region28
        $region27: #{tpu_custom_call.1} parent=11 // pred_region
          %s665 = ssub.s32 16, 16
          %666 = vsyncadd [#allocation12], %s665
          %s668 = sshll.u32 [#allocation11], 4
          %s669 = int_to_ptr.vmem [resolvable:$true] %s668
          %671 = dma.hbm_to_vmem [thread:$0]  %s6, 16, %s669, [#allocation12]
        $region28: #{tpu_custom_call.1} parent=11 // pred_fallthru
          _
        // Predicated region
        $region29: #{tpu_custom_call.1} parent=11 // pred_check
          %p672 = pneg %p228
        $region30: #{tpu_custom_call.1} parent=11 // pred_check_branch
          %674 = sbr.rel (%p672) target = $region32
        $region31: #{tpu_custom_call.1} parent=11 // pred_region
          _
        $region32: #{tpu_custom_call.1} parent=11 // pred_fallthru
          _
        // Predicated region
        $region33: #{tpu_custom_call.1} parent=11 // pred_check
          %p675 = pneg %p249
        $region34: #{tpu_custom_call.1} parent=11 // pred_check_branch
          %677 = sbr.rel (%p675) target = $region36
        $region35: #{tpu_custom_call.1} parent=11 // pred_region
          %s679 = ssub.s32 16, 16
          %680 = vsyncadd [#allocation12], %s679
          %s682 = sshll.u32 [#allocation13], 4
          %s683 = int_to_ptr.vmem [resolvable:$true] %s682
          %685 = dma.hbm_to_vmem [thread:$0]  %s8, 16, %s683, [#allocation12]
        $region36: #{tpu_custom_call.1} parent=11 // pred_fallthru
          _
        // Predicated region
        $region37: #{tpu_custom_call.1} parent=11 // pred_check
          %p686 = pneg %p270
        $region38: #{tpu_custom_call.1} parent=11 // pred_check_branch
          %688 = sbr.rel (%p686) target = $region40
        $region39: #{tpu_custom_call.1} parent=11 // pred_region
          %s690 = ssub.s32 64, 64
          %691 = vsyncadd [#allocation15], %s690
          %s693 = sshll.u32 [#allocation14], 4
          %s694 = int_to_ptr.vmem [resolvable:$true] %s693
          %696 = dma.hbm_to_vmem [thread:$0]  %s9, 64, %s694, [#allocation15]
        $region40: #{tpu_custom_call.1} parent=11 // pred_fallthru
          _
        // Predicated region
        $region41: #{tpu_custom_call.1} parent=11 // pred_check
          %p697 = pneg %p291
        $region42: #{tpu_custom_call.1} parent=11 // pred_check_branch
          %699 = sbr.rel (%p697) target = $region44
        $region43: #{tpu_custom_call.1} parent=11 // pred_region
          %s701 = ssub.s32 64, 64
          %702 = vsyncadd [#allocation15], %s701
          %s704 = sshll.u32 [#allocation16], 4
          %s705 = int_to_ptr.vmem [resolvable:$true] %s704
          %707 = dma.hbm_to_vmem [thread:$0]  %s10, 64, %s705, [#allocation15]
        $region44: #{tpu_custom_call.1} parent=11 // pred_fallthru
          _
        // Predicated region
        $region45: #{tpu_custom_call.1} parent=11 // pred_check
          %p708 = pneg %p312
        $region46: #{tpu_custom_call.1} parent=11 // pred_check_branch
          %710 = sbr.rel (%p708) target = $region48
        $region47: #{tpu_custom_call.1} parent=11 // pred_region
          _
        $region48: #{tpu_custom_call.1} parent=11 // pred_fallthru
          _
        // Predicated region
        $region49: #{tpu_custom_call.1} parent=11 // pred_check
          %p711 = pneg %p333
        $region50: #{tpu_custom_call.1} parent=11 // pred_check_branch
          %713 = sbr.rel (%p711) target = $region52
        $region51: #{tpu_custom_call.1} parent=11 // pred_region
          %s715 = ssub.s32 16, 16
          %716 = vsyncadd [#allocation18], %s715
          %s718 = sshll.u32 [#allocation17], 4
          %s719 = int_to_ptr.vmem [resolvable:$true] %s718
          %721 = dma.hbm_to_vmem [thread:$0]  %s12, 16, %s719, [#allocation18]
        $region52: #{tpu_custom_call.1} parent=11 // pred_fallthru
          _
        // Predicated region
        $region53: #{tpu_custom_call.1} parent=11 // pred_check
          %p722 = pneg %p354
        $region54: #{tpu_custom_call.1} parent=11 // pred_check_branch
          %724 = sbr.rel (%p722) target = $region56
        $region55: #{tpu_custom_call.1} parent=11 // pred_region
          %s726 = ssub.s32 16, 16
          %727 = vsyncadd [#allocation18], %s726
          %s729 = sshll.u32 [#allocation19], 4
          %s730 = int_to_ptr.vmem [resolvable:$true] %s729
          %732 = dma.hbm_to_vmem [thread:$0]  %s13, 16, %s730, [#allocation18]
        $region56: #{tpu_custom_call.1} parent=11 // pred_fallthru
          _
        // Predicated region
        $region57: #{tpu_custom_call.1} parent=11 // pred_check
          %p733 = pneg %p375
        $region58: #{tpu_custom_call.1} parent=11 // pred_check_branch
          %735 = sbr.rel (%p733) target = $region60
        $region59: #{tpu_custom_call.1} parent=11 // pred_region
          %s737 = ssub.s32 16, 16
          %738 = vsyncadd [#allocation21], %s737
          %s740 = sshll.u32 [#allocation20], 4
          %s741 = int_to_ptr.vmem [resolvable:$true] %s740
          %743 = dma.hbm_to_vmem [thread:$0]  %s14, 16, %s741, [#allocation21]
        $region60: #{tpu_custom_call.1} parent=11 // pred_fallthru
          _
        // Predicated region
        $region61: #{tpu_custom_call.1} parent=11 // pred_check
          %p744 = pneg %p396
        $region62: #{tpu_custom_call.1} parent=11 // pred_check_branch
          %746 = sbr.rel (%p744) target = $region64
        $region63: #{tpu_custom_call.1} parent=11 // pred_region
          _
        $region64: #{tpu_custom_call.1} parent=11 // pred_fallthru
          _
        // Predicated region
        $region65: #{tpu_custom_call.1} parent=11 // pred_check
          %p747 = pneg %p417
        $region66: #{tpu_custom_call.1} parent=11 // pred_check_branch
          %749 = sbr.rel (%p747) target = $region68
        $region67: #{tpu_custom_call.1} parent=11 // pred_region
          %s751 = ssub.s32 16, 16
          %752 = vsyncadd [#allocation21], %s751
          %s754 = sshll.u32 [#allocation22], 4
          %s755 = int_to_ptr.vmem [resolvable:$true] %s754
          %757 = dma.hbm_to_vmem [thread:$0]  %s16, 16, %s755, [#allocation21]
        $region68: #{tpu_custom_call.1} parent=11 // pred_fallthru
          _
        // Predicated region
        $region69: #{tpu_custom_call.1} parent=11 // pred_check
          %p758 = pneg %p438
        $region70: #{tpu_custom_call.1} parent=11 // pred_check_branch
          %760 = sbr.rel (%p758) target = $region72
        $region71: #{tpu_custom_call.1} parent=11 // pred_region
          _
        $region72: #{tpu_custom_call.1} parent=11 // pred_fallthru
          _
        // Predicated region
        $region73: #{tpu_custom_call.1} parent=11 // pred_check
          %p761 = pneg %p459
        $region74: #{tpu_custom_call.1} parent=11 // pred_check_branch
          %763 = sbr.rel (%p761) target = $region76
        $region75: #{tpu_custom_call.1} parent=11 // pred_region
          _
        $region76: #{tpu_custom_call.1} parent=11 // pred_fallthru
          _
        // Predicated region
        $region77: #{tpu_custom_call.1} parent=11 // pred_check
          %p764 = pneg %p480
        $region78: #{tpu_custom_call.1} parent=11 // pred_check_branch
          %766 = sbr.rel (%p764) target = $region80
        $region79: #{tpu_custom_call.1} parent=11 // pred_region
          _
        $region80: #{tpu_custom_call.1} parent=11 // pred_fallthru
          _
        // Predicated region
        $region81: #{tpu_custom_call.1} parent=11 // pred_check
          %p767 = pneg %p501
        $region82: #{tpu_custom_call.1} parent=11 // pred_check_branch
          %769 = sbr.rel (%p767) target = $region84
        $region83: #{tpu_custom_call.1} parent=11 // pred_region
          _
        $region84: #{tpu_custom_call.1} parent=11 // pred_fallthru
          _
        // Predicated region
        $region85: #{tpu_custom_call.1} parent=11 // pred_check
          %p770 = pneg %p522
        $region86: #{tpu_custom_call.1} parent=11 // pred_check_branch
          %772 = sbr.rel (%p770) target = $region88
        $region87: #{tpu_custom_call.1} parent=11 // pred_region
          _
        $region88: #{tpu_custom_call.1} parent=11 // pred_fallthru
          _
        // Predicated region
        $region89: #{tpu_custom_call.1} parent=11 // pred_check
          %p773 = pneg %p543
        $region90: #{tpu_custom_call.1} parent=11 // pred_check_branch
          %775 = sbr.rel (%p773) target = $region92
        $region91: #{tpu_custom_call.1} parent=11 // pred_region
          _
        $region92: #{tpu_custom_call.1} parent=11 // pred_fallthru
          _
        // Predicated region
        $region93: #{tpu_custom_call.1} parent=11 // pred_check
          %p776 = pneg %p564
        $region94: #{tpu_custom_call.1} parent=11 // pred_check_branch
          %778 = sbr.rel (%p776) target = $region96
        $region95: #{tpu_custom_call.1} parent=11 // pred_region
          _
        $region96: #{tpu_custom_call.1} parent=11 // pred_fallthru
          _
        // Predicated region
        $region97: #{tpu_custom_call.1} parent=11 // pred_check
          %p779 = pneg %p585
        $region98: #{tpu_custom_call.1} parent=11 // pred_check_branch
          %781 = sbr.rel (%p779) target = $region100
        $region99: #{tpu_custom_call.1} parent=11 // pred_region
          _
        $region100: #{tpu_custom_call.1} parent=11 // pred_fallthru
          _
      $region12: #{tpu_custom_call.1} parent=5 // pred_fallthru
        _
      %p782 = scmp.lt.s32.totalorder %s45, 2
      // Predicated region
      $region101: #{tpu_custom_call.1} parent=5 // pred_check
        %p783 = pneg %p782
      $region102: #{tpu_custom_call.1} parent=5 // pred_check_branch
        %785 = sbr.rel (%p783) target = $region104
      $region103: #{tpu_custom_call.1} parent=5 // pred_region
        // Predicated region
        $region105: #{tpu_custom_call.1} parent=103 // pred_check
          %p786 = pneg %p65
        $region106: #{tpu_custom_call.1} parent=103 // pred_check_branch
          %788 = sbr.rel (%p786) target = $region108
        $region107: #{tpu_custom_call.1} parent=103 // pred_region
          %p789 = scmp.lt.s32.totalorder %s45, 1
          %s790 = scalar_select %p789, %s45, 1
          %s791 = smul.addr %s790, 8
          %s792 = scalar_lea.vmem %s0, %s791
        $region108: #{tpu_custom_call.1} parent=103 // pred_fallthru
          _
        // Predicated region
        $region109: #{tpu_custom_call.1} parent=103 // pred_check
          %p793 = pneg %p91
        $region110: #{tpu_custom_call.1} parent=103 // pred_check_branch
          %795 = sbr.rel (%p793) target = $region112
        $region111: #{tpu_custom_call.1} parent=103 // pred_region
          %s796 = sand.u32 %s81, 1
          %s797 = scalar_lea.sflag [#allocation3], %s796
          %s798 = sand.u32 %s81, 1
          %s799 = scalar_lea.vmem [#allocation2], %s798
          %s801 = ssub.s32 16, 16
          %802 = vsyncadd %s797, %s801
          %s803 = smul.addr %s45, 16
          %s804 = scalar_lea.hbm %s1, %s803
          %s806 = sshll.u32 %s799, 4
          %s807 = int_to_ptr.vmem [resolvable:$true] %s806
          %809 = dma.hbm_to_vmem [thread:$0]  %s804, 16, %s807, %s797
        $region112: #{tpu_custom_call.1} parent=103 // pred_fallthru
          _
        // Predicated region
        $region113: #{tpu_custom_call.1} parent=103 // pred_check
          %p810 = pneg %p117
        $region114: #{tpu_custom_call.1} parent=103 // pred_check_branch
          %812 = sbr.rel (%p810) target = $region116
        $region115: #{tpu_custom_call.1} parent=103 // pred_region
          %s813 = sand.u32 %s45, 1
          %s814 = scalar_lea.sflag [#allocation6], %s813
          %s815 = sand.u32 %s107, 1
          %s816 = scalar_lea.vmem [#allocation5], %s815
          %s818 = ssub.s32 16, 16
          %819 = vsyncadd %s814, %s818
          %s820 = smul.addr %s45, 16
          %s821 = scalar_lea.hbm %s2, %s820
          %s823 = sshll.u32 %s816, 4
          %s824 = int_to_ptr.vmem [resolvable:$true] %s823
          %826 = dma.hbm_to_vmem [thread:$0]  %s821, 16, %s824, %s814
        $region116: #{tpu_custom_call.1} parent=103 // pred_fallthru
          _
      $region104: #{tpu_custom_call.1} parent=5 // pred_fallthru
        _
      %p827 = scmp.le.s32.totalorder 1, %s45
      %p828 = scmp.lt.s32.totalorder %s45, 3
      %p829 = pnand %p827, %p828
      %p830 = pneg %p829
      // Predicated region
      $region117: #{tpu_custom_call.1} parent=5 // pred_check
        _
      $region118: #{tpu_custom_call.1} parent=5 // pred_check_branch
        %832 = sbr.rel (%p829) target = $region120
      $region119: #{tpu_custom_call.1} parent=5 // pred_region
        %s833 = ssub.s32 %s45, 1
        %s834 = sand.u32 %s84, 1
        %s835 = scalar_lea.sflag [#allocation3], %s834
        %s836 = sand.u32 %s84, 1
        %s837 = scalar_lea.vmem [#allocation2], %s836
        // Predicated region
        $region121: #{tpu_custom_call.1} parent=119 // pred_check
          %p838 = pneg %p97
        $region122: #{tpu_custom_call.1} parent=119 // pred_check_branch
          %840 = sbr.rel (%p838) target = $region124
        $region123: #{tpu_custom_call.1} parent=119 // pred_region
          %841 = dma.done %s835, 16
        $region124: #{tpu_custom_call.1} parent=119 // pred_fallthru
          _
        %s842 = sand.u32 %s50, 1
        %s843 = scalar_lea.sflag [#allocation6], %s842
        %s844 = sand.u32 %s110, 1
        %s845 = scalar_lea.vmem [#allocation5], %s844
        // Predicated region
        $region125: #{tpu_custom_call.1} parent=119 // pred_check
          %p846 = pneg %p123
        $region126: #{tpu_custom_call.1} parent=119 // pred_check_branch
          %848 = sbr.rel (%p846) target = $region128
        $region127: #{tpu_custom_call.1} parent=119 // pred_region
          %849 = dma.done %s843, 16
        $region128: #{tpu_custom_call.1} parent=119 // pred_fallthru
          _
        // Predicated region
        $region129: #{tpu_custom_call.1} parent=119 // pred_check
          %p850 = pneg %p144
        $region130: #{tpu_custom_call.1} parent=119 // pred_check_branch
          %852 = sbr.rel (%p850) target = $region132
        $region131: #{tpu_custom_call.1} parent=119 // pred_region
          %853 = dma.done [#allocation6], 16
        $region132: #{tpu_custom_call.1} parent=119 // pred_fallthru
          _
        // Predicated region
        $region133: #{tpu_custom_call.1} parent=119 // pred_check
          %p854 = pneg %p165
        $region134: #{tpu_custom_call.1} parent=119 // pred_check_branch
          %856 = sbr.rel (%p854) target = $region136
        $region135: #{tpu_custom_call.1} parent=119 // pred_region
          %857 = dma.done [#allocation9], 16
        $region136: #{tpu_custom_call.1} parent=119 // pred_fallthru
          _
        // Predicated region
        $region137: #{tpu_custom_call.1} parent=119 // pred_check
          %p858 = pneg %p186
        $region138: #{tpu_custom_call.1} parent=119 // pred_check_branch
          %860 = sbr.rel (%p858) target = $region140
        $region139: #{tpu_custom_call.1} parent=119 // pred_region
          %861 = dma.done [#allocation9], 128
        $region140: #{tpu_custom_call.1} parent=119 // pred_fallthru
          _
        // Predicated region
        $region141: #{tpu_custom_call.1} parent=119 // pred_check
          %p862 = pneg %p207
        $region142: #{tpu_custom_call.1} parent=119 // pred_check_branch
          %864 = sbr.rel (%p862) target = $region144
        $region143: #{tpu_custom_call.1} parent=119 // pred_region
          %865 = dma.done [#allocation12], 16
        $region144: #{tpu_custom_call.1} parent=119 // pred_fallthru
          _
        // Predicated region
        $region145: #{tpu_custom_call.1} parent=119 // pred_check
          %p866 = pneg %p249
        $region146: #{tpu_custom_call.1} parent=119 // pred_check_branch
          %868 = sbr.rel (%p866) target = $region148
        $region147: #{tpu_custom_call.1} parent=119 // pred_region
          %869 = dma.done [#allocation12], 16
        $region148: #{tpu_custom_call.1} parent=119 // pred_fallthru
          _
        // Predicated region
        $region149: #{tpu_custom_call.1} parent=119 // pred_check
          %p870 = pneg %p270
        $region150: #{tpu_custom_call.1} parent=119 // pred_check_branch
          %872 = sbr.rel (%p870) target = $region152
        $region151: #{tpu_custom_call.1} parent=119 // pred_region
          %873 = dma.done [#allocation15], 64
        $region152: #{tpu_custom_call.1} parent=119 // pred_fallthru
          _
        // Predicated region
        $region153: #{tpu_custom_call.1} parent=119 // pred_check
          %p874 = pneg %p291
        $region154: #{tpu_custom_call.1} parent=119 // pred_check_branch
          %876 = sbr.rel (%p874) target = $region156
        $region155: #{tpu_custom_call.1} parent=119 // pred_region
          %877 = dma.done [#allocation15], 64
        $region156: #{tpu_custom_call.1} parent=119 // pred_fallthru
          _
        // Predicated region
        $region157: #{tpu_custom_call.1} parent=119 // pred_check
          %p878 = pneg %p333
        $region158: #{tpu_custom_call.1} parent=119 // pred_check_branch
          %880 = sbr.rel (%p878) target = $region160
        $region159: #{tpu_custom_call.1} parent=119 // pred_region
          %881 = dma.done [#allocation18], 16
        $region160: #{tpu_custom_call.1} parent=119 // pred_fallthru
          _
        // Predicated region
        $region161: #{tpu_custom_call.1} parent=119 // pred_check
          %p882 = pneg %p354
        $region162: #{tpu_custom_call.1} parent=119 // pred_check_branch
          %884 = sbr.rel (%p882) target = $region164
        $region163: #{tpu_custom_call.1} parent=119 // pred_region
          %885 = dma.done [#allocation18], 16
        $region164: #{tpu_custom_call.1} parent=119 // pred_fallthru
          _
        // Predicated region
        $region165: #{tpu_custom_call.1} parent=119 // pred_check
          %p886 = pneg %p375
        $region166: #{tpu_custom_call.1} parent=119 // pred_check_branch
          %888 = sbr.rel (%p886) target = $region168
        $region167: #{tpu_custom_call.1} parent=119 // pred_region
          %889 = dma.done [#allocation21], 16
        $region168: #{tpu_custom_call.1} parent=119 // pred_fallthru
          _
        // Predicated region
        $region169: #{tpu_custom_call.1} parent=119 // pred_check
          %p890 = pneg %p417
        $region170: #{tpu_custom_call.1} parent=119 // pred_check_branch
          %892 = sbr.rel (%p890) target = $region172
        $region171: #{tpu_custom_call.1} parent=119 // pred_region
          %893 = dma.done [#allocation21], 16
        $region172: #{tpu_custom_call.1} parent=119 // pred_fallthru
          _
        %p894 = scmp.lt.s32.totalorder %s50, 1
        %s895 = scalar_select %p894, %s50, 1
        %s896 = smul.addr %s895, 8
        %s897 = scalar_lea.vmem %s0, %s896
        %p898 = pneg %p71
        %p899 = pneg %p68
        %s900 = sand.u32 %s84, 1
        %s901 = scalar_lea.sflag [#allocation3], %s900
        %s902 = sand.u32 %s84, 1
        %s903 = scalar_lea.vmem [#allocation2], %s902
        %p904 = pneg %p97
        %p905 = pneg %p94
        %s906 = sand.u32 %s50, 1
        %s907 = scalar_lea.sflag [#allocation6], %s906
        %s908 = sand.u32 %s110, 1
        %s909 = scalar_lea.vmem [#allocation5], %s908
        %p910 = pneg %p123
        %p911 = pneg %p120
        %p912 = pneg %p144
        %p913 = pneg %p141
        %p914 = pneg %p165
        %p915 = pneg %p162
        %p916 = pneg %p186
        %p917 = pneg %p183
        %p918 = pneg %p207
        %p919 = pneg %p204
        %p920 = pneg %p228
        %p921 = pneg %p225
        %p922 = pneg %p249
        %p923 = pneg %p246
        %p924 = pneg %p270
        %p925 = pneg %p267
        %p926 = pneg %p291
        %p927 = pneg %p288
        %p928 = pneg %p312
        %p929 = pneg %p309
        %p930 = pneg %p333
        %p931 = pneg %p330
        %p932 = pneg %p354
        %p933 = pneg %p351
        %p934 = pneg %p375
        %p935 = pneg %p372
        %p936 = pneg %p396
        %p937 = pneg %p393
        %p938 = pneg %p417
        %p939 = pneg %p414
        %p940 = pneg %p438
        %p941 = pneg %p435
        %p942 = pneg %p459
        %p943 = pneg %p456
        %p944 = pneg %p480
        %p945 = pneg %p477
        %p946 = pneg %p501
        %p947 = pneg %p498
        %p948 = pneg %p522
        %p949 = pneg %p519
        %p950 = pneg %p543
        %p951 = pneg %p540
        %p952 = pneg %p564
        %p953 = pneg %p561
        %p954 = pneg %p585
        %p955 = pneg %p582
        %p956 = pneg %p611
        %p957 = pneg %p608
        %s958 = sand.u32 %s598, 1
        %s959 = scalar_lea.sflag [#allocation4], %s958
        %s960 = sand.u32 %s598, 1
        %s961 = scalar_lea.vmem [#allocation23], %s960
        %p962 = scmp.lt.s32.totalorder %s50, 1
        %s963 = scalar_select %p962, %s50, 1
        %s964 = smul.addr %s963, 8
        %s965 = scalar_lea.vmem %s0, %s964
        %v967 = vld [vmem:[%s965] sm:$0xff]
        %vm968 = vcmask 130048
        %v969 = vsel %vm968, %v967, 0.0
        %970 = vadd.xlane.f32.xlu0 %v969
        %v971 = vpop.xlane.xlu0 %970
        %v972 = vrcp.pop 16.0
        %v973 = vmul.f32 %v971, %v972
        %v974 = vsub.f32 %v967, %v973
        %v975 = vmul.f32 %v974, %v974
        %v976 = vsel %vm968, %v975, 0.0
        %977 = vadd.xlane.f32.xlu0 %v976
        %v978 = vpop.xlane.xlu0 %977
        %v979 = vmul.f32 %v978, %v972
        %v980 = vadd.f32 %v979, 1e-12
        %v981 = vrsqrt.pop %v980
        %v982 = vmul.f32 %v974, %v981
        %v983 = vld [vmem:[#allocation7] sm:$0x1]
        %v985 = vlaneseq
        %v986 = vshrl.u32 %v985, 7
        %v987 = vsub.s32 0, %v986
        %v988 = vrot.slane %v983, %v987
        %v990 = vmul.f32 %v982, %v988
        %v991 = vld [vmem:[#allocation8] sm:$0x1]
        %v993 = vlaneseq
        %v994 = vshrl.u32 %v993, 7
        %v995 = vsub.s32 0, %v994
        %v996 = vrot.slane %v991, %v995
        %v998 = vadd.f32 %v990, %v996
        %v999 = vpack.c.bf16 %v998, %v998
        %v1000 = vld [vmem:[#allocation10] sm:$0xf]
        %v1001 = vld [vmem:[#allocation10 + $0x4] sm:$0xf]
        %v1002 = vld [vmem:[#allocation11] sm:$0x1]
        %v1004 = vlaneseq
        %v1005 = vshrl.u32 %v1004, 7
        %v1006 = vsub.s32 0, %v1005
        %v1007 = vrot.slane %v1002, %v1006
        %v1011 = vunpack.c.l.b16 %v1000
        %v1012 = vunpack.c.l.b16 %v1001
        %v1013 = vpack.c.b16 %v1012, %v1011
        %v1016 = vsel %vm968, %v999, 0
        %1018 = vmatprep.subr.bf16.mxu0 0
        %1019 = vmatpush1.bf16.msra.mxu0 %v1013
        %1020 = vmatprep.subr.bf16.mxu0 0
        %1021 = vmatpush1.bf16.msra.mxu0 0
        %1022 = vmatprep.subr.bf16.mxu0 0
        %1023 = vmatpush1.bf16.msra.mxu0 0
        %1024 = vmatprep.subr.bf16.mxu0 0
        %1025 = vmatpush1.bf16.msra.mxu0 0
        %1026 = vmatprep.subr.bf16.mxu0 0
        %1027 = vmatpush1.bf16.msra.mxu0 0
        %1028 = vmatprep.subr.bf16.mxu0 0
        %1029 = vmatpush1.bf16.msra.mxu0 0
        %1030 = vmatprep.subr.bf16.mxu0 0
        %1031 = vmatpush1.bf16.msra.mxu0 0
        %1032 = vmatprep.subr.bf16.mxu0 0
        %1033 = vmatpush1.bf16.msra.mxu0 0
        %1034 = vmatprep.subr.bf16.mxu0 0
        %1035 = vmatpush1.bf16.msra.mxu0 0
        %1036 = vmatprep.subr.bf16.mxu0 0
        %1037 = vmatpush1.bf16.msra.mxu0 0
        %1038 = vmatprep.subr.bf16.mxu0 0
        %1039 = vmatpush1.bf16.msra.mxu0 0
        %1040 = vmatprep.subr.bf16.mxu0 0
        %1041 = vmatpush1.bf16.msra.mxu0 0
        %1042 = vmatprep.subr.bf16.mxu0 0
        %1043 = vmatpush1.bf16.msra.mxu0 0
        %1044 = vmatprep.subr.bf16.mxu0 0
        %1045 = vmatpush1.bf16.msra.mxu0 0
        %1046 = vmatprep.subr.bf16.mxu0 0
        %1047 = vmatpush1.bf16.msra.mxu0 0
        %1048 = vmatprep.subr.bf16.mxu0 0
        %1049 = vmatpush1.bf16.msra.mxu0 0
        %1050 = vmatprep.mubr.bf16.mxu0 0
        %1051 = vmatmul.mubr.bf16.gmra.mrb[0].mxu0 %v1016
        %v1052 = vpop.f32.mrb[0].mxu0
        %v1053 = vadd.f32 %v1007, %v1052
        %v1054 = vpop.f32.mrb[0].mxu0
        %v1055 = vpop.f32.mrb[0].mxu0
        %v1056 = vpop.f32.mrb[0].mxu0
        %1057 = vdwg.mxu0
        %v1058 = vld [vmem:[%s837] sm:$0x1]
        %v1059 = vpack.c.bf16 %v1053, %v1053
        %v1060 = vld [vmem:[%s7] sm:$0xf]
        %v1061 = vld [vmem:[%s7 + $0x4] sm:$0xf]
        %v1062 = vld [vmem:[%s7 + $0x8] sm:$0xf]
        %v1063 = vld [vmem:[%s7 + $0xc] sm:$0xf]
        %v1064 = vld [vmem:[#allocation13] sm:$0x1]
        %v1066 = vlaneseq
        %v1067 = vshrl.u32 %v1066, 7
        %v1068 = vsub.s32 0, %v1067
        %v1069 = vrot.slane %v1064, %v1068
        %v1075 = vunpack.c.l.b16 %v1060
        %v1076 = vunpack.c.l.b16 %v1061
        %v1077 = vunpack.c.l.b16 %v1062
        %v1078 = vunpack.c.l.b16 %v1063
        %v1079 = vpack.c.b16 %v1076, %v1075
        %v1080 = vpack.c.b16 %v1078, %v1077
        %vm1083 = vcmask 261120
        %v1085 = vsel %vm1083, %v1059, 0
        %1087 = vmatprep.subr.bf16.mxu0 0
        %1088 = vmatpush1.bf16.msra.mxu0 %v1079
        %1089 = vmatprep.subr.bf16.mxu0 0
        %1090 = vmatpush1.bf16.msra.mxu0 %v1080
        %1091 = vmatprep.subr.bf16.mxu0 0
        %1092 = vmatpush1.bf16.msra.mxu0 0
        %1093 = vmatprep.subr.bf16.mxu0 0
        %1094 = vmatpush1.bf16.msra.mxu0 0
        %1095 = vmatprep.subr.bf16.mxu0 0
        %1096 = vmatpush1.bf16.msra.mxu0 0
        %1097 = vmatprep.subr.bf16.mxu0 0
        %1098 = vmatpush1.bf16.msra.mxu0 0
        %1099 = vmatprep.subr.bf16.mxu0 0
        %1100 = vmatpush1.bf16.msra.mxu0 0
        %1101 = vmatprep.subr.bf16.mxu0 0
        %1102 = vmatpush1.bf16.msra.mxu0 0
        %1103 = vmatprep.subr.bf16.mxu0 0
        %1104 = vmatpush1.bf16.msra.mxu0 0
        %1105 = vmatprep.subr.bf16.mxu0 0
        %1106 = vmatpush1.bf16.msra.mxu0 0
        %1107 = vmatprep.subr.bf16.mxu0 0
        %1108 = vmatpush1.bf16.msra.mxu0 0
        %1109 = vmatprep.subr.bf16.mxu0 0
        %1110 = vmatpush1.bf16.msra.mxu0 0
        %1111 = vmatprep.subr.bf16.mxu0 0
        %1112 = vmatpush1.bf16.msra.mxu0 0
        %1113 = vmatprep.subr.bf16.mxu0 0
        %1114 = vmatpush1.bf16.msra.mxu0 0
        %1115 = vmatprep.subr.bf16.mxu0 0
        %1116 = vmatpush1.bf16.msra.mxu0 0
        %1117 = vmatprep.subr.bf16.mxu0 0
        %1118 = vmatpush1.bf16.msra.mxu0 0
        %1119 = vmatprep.mubr.bf16.mxu0 0
        %1120 = vmatmul.mubr.bf16.gmra.mrb[0].mxu0 %v1085
        %v1121 = vpop.f32.mrb[0].mxu0
        %v1122 = vadd.f32 %v1069, %v1121
        %v1123 = vpop.f32.mrb[0].mxu0
        %v1124 = vpop.f32.mrb[0].mxu0
        %v1125 = vpop.f32.mrb[0].mxu0
        %1126 = vdwg.mxu0
        %v1127 = vpack.c.bf16 %v1122, %v1122
        %v1128 = vld [vmem:[#allocation14] sm:$0xf]
        %1130 = vrot.lane.b32.xlu0 %v1127, 32
        %v1131 = vpop.permute.xlu0 %1130
        %vm1132 = vcmask 64512
        %v1134 = vsel %vm1132, %v1131, 0
        %vm1136 = vcmask 1043456
        %v1138 = vsel %vm1136, %v1128, 0
        %1140 = vmatprep.subr.bf16.mxu0 0
        %1141 = vmatpush1.bf16.msra.mxu0 %v1138
        %1142 = vmatprep.subr.bf16.mxu0 0
        %1143 = vmatpush1.bf16.msra.mxu0 0
        %1144 = vmatprep.subr.bf16.mxu0 0
        %1145 = vmatpush1.bf16.msra.mxu0 0
        %1146 = vmatprep.subr.bf16.mxu0 0
        %1147 = vmatpush1.bf16.msra.mxu0 0
        %1148 = vmatprep.subr.bf16.mxu0 0
        %1149 = vmatpush1.bf16.msra.mxu0 0
        %1150 = vmatprep.subr.bf16.mxu0 0
        %1151 = vmatpush1.bf16.msra.mxu0 0
        %1152 = vmatprep.subr.bf16.mxu0 0
        %1153 = vmatpush1.bf16.msra.mxu0 0
        %1154 = vmatprep.subr.bf16.mxu0 0
        %1155 = vmatpush1.bf16.msra.mxu0 0
        %1156 = vmatprep.subr.bf16.mxu0 0
        %1157 = vmatpush1.bf16.msra.mxu0 0
        %1158 = vmatprep.subr.bf16.mxu0 0
        %1159 = vmatpush1.bf16.msra.mxu0 0
        %1160 = vmatprep.subr.bf16.mxu0 0
        %1161 = vmatpush1.bf16.msra.mxu0 0
        %1162 = vmatprep.subr.bf16.mxu0 0
        %1163 = vmatpush1.bf16.msra.mxu0 0
        %1164 = vmatprep.subr.bf16.mxu0 0
        %1165 = vmatpush1.bf16.msra.mxu0 0
        %1166 = vmatprep.subr.bf16.mxu0 0
        %1167 = vmatpush1.bf16.msra.mxu0 0
        %1168 = vmatprep.subr.bf16.mxu0 0
        %1169 = vmatpush1.bf16.msra.mxu0 0
        %1170 = vmatprep.subr.bf16.mxu0 0
        %1171 = vmatpush1.bf16.msra.mxu0 0
        %1172 = vmatprep.mubr.bf16.mxu0 0
        %1173 = vmatmul.mubr.bf16.gmra.mrb[0].mxu0 %v1134
        %v1174 = vpop.f32.mrb[0].mxu0
        %v1175 = vadd.f32 0.0, %v1174
        %v1176 = vpop.f32.mrb[0].mxu0
        %v1177 = vpop.f32.mrb[0].mxu0
        %v1178 = vpop.f32.mrb[0].mxu0
        %1179 = vdwg.mxu0
        %v1180 = vmul.f32 %v1175, 2.828427
        %1182 = vrot.lane.b32.xlu0 %v1180, 32
        %v1183 = vpop.permute.xlu0 %1182
        %v1185 = vadd.f32 %v1122, %v1183
        %v1186 = vld [vmem:[#allocation16] sm:$0xf]
        %1187 = vrot.lane.b32.xlu0 %v1127, 24
        %v1188 = vpop.permute.xlu0 %1187
        %v1190 = vsel %vm1132, %v1188, 0
        %v1193 = vsel %vm1136, %v1186, 0
        %1195 = vmatprep.subr.bf16.mxu0 0
        %1196 = vmatpush1.bf16.msra.mxu0 %v1193
        %1197 = vmatprep.subr.bf16.mxu0 0
        %1198 = vmatpush1.bf16.msra.mxu0 0
        %1199 = vmatprep.subr.bf16.mxu0 0
        %1200 = vmatpush1.bf16.msra.mxu0 0
        %1201 = vmatprep.subr.bf16.mxu0 0
        %1202 = vmatpush1.bf16.msra.mxu0 0
        %1203 = vmatprep.subr.bf16.mxu0 0
        %1204 = vmatpush1.bf16.msra.mxu0 0
        %1205 = vmatprep.subr.bf16.mxu0 0
        %1206 = vmatpush1.bf16.msra.mxu0 0
        %1207 = vmatprep.subr.bf16.mxu0 0
        %1208 = vmatpush1.bf16.msra.mxu0 0
        %1209 = vmatprep.subr.bf16.mxu0 0
        %1210 = vmatpush1.bf16.msra.mxu0 0
        %1211 = vmatprep.subr.bf16.mxu0 0
        %1212 = vmatpush1.bf16.msra.mxu0 0
        %1213 = vmatprep.subr.bf16.mxu0 0
        %1214 = vmatpush1.bf16.msra.mxu0 0
        %1215 = vmatprep.subr.bf16.mxu0 0
        %1216 = vmatpush1.bf16.msra.mxu0 0
        %1217 = vmatprep.subr.bf16.mxu0 0
        %1218 = vmatpush1.bf16.msra.mxu0 0
        %1219 = vmatprep.subr.bf16.mxu0 0
        %1220 = vmatpush1.bf16.msra.mxu0 0
        %1221 = vmatprep.subr.bf16.mxu0 0
        %1222 = vmatpush1.bf16.msra.mxu0 0
        %1223 = vmatprep.subr.bf16.mxu0 0
        %1224 = vmatpush1.bf16.msra.mxu0 0
        %1225 = vmatprep.subr.bf16.mxu0 0
        %1226 = vmatpush1.bf16.msra.mxu0 0
        %1227 = vmatprep.mubr.bf16.mxu0 0
        %1228 = vmatmul.mubr.bf16.gmra.mrb[0].mxu0 %v1190
        %v1229 = vpop.f32.mrb[0].mxu0
        %v1230 = vadd.f32 0.0, %v1229
        %v1231 = vpop.f32.mrb[0].mxu0
        %v1232 = vpop.f32.mrb[0].mxu0
        %v1233 = vpop.f32.mrb[0].mxu0
        %1234 = vdwg.mxu0
        %v1235 = vmul.f32 %v1230, 2.828427
        %1237 = vrot.lane.b32.xlu0 %v1235, 64
        %v1238 = vpop.permute.xlu0 %1237
        %v1240 = vadd.f32 %v1122, %v1238
        %v1241 = vpack.c.bf16 %v1185, %v1185
        %1243 = vrot.lane.b32.xlu0 %v1241, 96
        %v1244 = vpop.permute.xlu0 %1243
        %v1246 = vsel %vm1132, %v1127, 0
        %v1249 = vsel %vm1132, %v1244, 0
        %1251 = vmatprep.subr.bf16.mxu0 0
        %1252 = vmatpush1.bf16.xpose.msra.mxu0 %v1249
        %1253 = vmatprep.subr.bf16.mxu0 0
        %1254 = vmatpush1.bf16.xpose.msra.mxu0 0
        %1255 = vmatprep.subr.bf16.mxu0 0
        %1256 = vmatpush1.bf16.xpose.msra.mxu0 0
        %1257 = vmatprep.subr.bf16.mxu0 0
        %1258 = vmatpush1.bf16.xpose.msra.mxu0 0
        %1259 = vmatprep.subr.bf16.mxu0 0
        %1260 = vmatpush1.bf16.xpose.msra.mxu0 0
        %1261 = vmatprep.subr.bf16.mxu0 0
        %1262 = vmatpush1.bf16.xpose.msra.mxu0 0
        %1263 = vmatprep.subr.bf16.mxu0 0
        %1264 = vmatpush1.bf16.xpose.msra.mxu0 0
        %1265 = vmatprep.subr.bf16.mxu0 0
        %1266 = vmatpush1.bf16.xpose.msra.mxu0 0
        %1267 = vmatprep.subr.bf16.mxu0 0
        %1268 = vmatpush1.bf16.xpose.msra.mxu0 0
        %1269 = vmatprep.subr.bf16.mxu0 0
        %1270 = vmatpush1.bf16.xpose.msra.mxu0 0
        %1271 = vmatprep.subr.bf16.mxu0 0
        %1272 = vmatpush1.bf16.xpose.msra.mxu0 0
        %1273 = vmatprep.subr.bf16.mxu0 0
        %1274 = vmatpush1.bf16.xpose.msra.mxu0 0
        %1275 = vmatprep.subr.bf16.mxu0 0
        %1276 = vmatpush1.bf16.xpose.msra.mxu0 0
        %1277 = vmatprep.subr.bf16.mxu0 0
        %1278 = vmatpush1.bf16.xpose.msra.mxu0 0
        %1279 = vmatprep.subr.bf16.mxu0 0
        %1280 = vmatpush1.bf16.xpose.msra.mxu0 0
        %1281 = vmatprep.subr.bf16.mxu0 0
        %1282 = vmatpush1.bf16.xpose.msra.mxu0 0
        %1283 = vmatprep.mubr.bf16.mxu0 0
        %1284 = vmatmul.mubr.bf16.gmra.mrb[0].mxu0 %v1246
        %v1285 = vpop.f32.mrb[0].mxu0
        %v1286 = vadd.f32 0.0, %v1285
        %v1287 = vpop.f32.mrb[0].mxu0
        %v1288 = vpop.f32.mrb[0].mxu0
        %v1289 = vpop.f32.mrb[0].mxu0
        %1290 = vdwg.mxu0
        %v1291 = vmul.f32 %v1286, 0.35355338
        %v1293 = vlaneseq
        %v1294 = vshrl.u32 %v1293, 7
        %v1295 = vsub.s32 0, %v1294
        %v1296 = vrot.slane %v1058, %v1295
        %v1298 = vadd.f32 %v1291, %v1296
        %v1299 = vsel %vm1132, %v1298, -inf
        %1300 = vmax.xlane.f32.xlu0 %v1299
        %v1301 = vpop.xlane.xlu0 %1300
        %v1302 = vsub.f32 %v1298, %v1301
        %v1303 = vmul.f32 %v1302, 1.442695
        %v1304 = vpow.pop %v1303
        %v1305 = vsel %vm1132, %v1304, 0.0
        %1306 = vadd.xlane.f32.xlu0 %v1305
        %v1307 = vpop.xlane.xlu0 %1306
        %v1308 = vrcp.pop %v1307
        %v1309 = vmul.f32 %v1304, %v1308
        %v1310 = vpack.c.bf16 %v1309, %v1309
        %v1311 = vpack.c.bf16 %v1240, %v1240
        %1313 = vrot.lane.b32.xlu0 %v1311, 64
        %v1314 = vpop.permute.xlu0 %1313
        %v1316 = vsel %vm1132, %v1310, 0
        %v1319 = vsel %vm1136, %v1314, 0
        %1321 = vmatprep.subr.bf16.mxu0 0
        %1322 = vmatpush1.bf16.msra.mxu0 %v1319
        %1323 = vmatprep.subr.bf16.mxu0 0
        %1324 = vmatpush1.bf16.msra.mxu0 0
        %1325 = vmatprep.subr.bf16.mxu0 0
        %1326 = vmatpush1.bf16.msra.mxu0 0
        %1327 = vmatprep.subr.bf16.mxu0 0
        %1328 = vmatpush1.bf16.msra.mxu0 0
        %1329 = vmatprep.subr.bf16.mxu0 0
        %1330 = vmatpush1.bf16.msra.mxu0 0
        %1331 = vmatprep.subr.bf16.mxu0 0
        %1332 = vmatpush1.bf16.msra.mxu0 0
        %1333 = vmatprep.subr.bf16.mxu0 0
        %1334 = vmatpush1.bf16.msra.mxu0 0
        %1335 = vmatprep.subr.bf16.mxu0 0
        %1336 = vmatpush1.bf16.msra.mxu0 0
        %1337 = vmatprep.subr.bf16.mxu0 0
        %1338 = vmatpush1.bf16.msra.mxu0 0
        %1339 = vmatprep.subr.bf16.mxu0 0
        %1340 = vmatpush1.bf16.msra.mxu0 0
        %1341 = vmatprep.subr.bf16.mxu0 0
        %1342 = vmatpush1.bf16.msra.mxu0 0
        %1343 = vmatprep.subr.bf16.mxu0 0
        %1344 = vmatpush1.bf16.msra.mxu0 0
        %1345 = vmatprep.subr.bf16.mxu0 0
        %1346 = vmatpush1.bf16.msra.mxu0 0
        %1347 = vmatprep.subr.bf16.mxu0 0
        %1348 = vmatpush1.bf16.msra.mxu0 0
        %1349 = vmatprep.subr.bf16.mxu0 0
        %1350 = vmatpush1.bf16.msra.mxu0 0
        %1351 = vmatprep.subr.bf16.mxu0 0
        %1352 = vmatpush1.bf16.msra.mxu0 0
        %1353 = vmatprep.mubr.bf16.mxu0 0
        %1354 = vmatmul.mubr.bf16.gmra.mrb[0].mxu0 %v1316
        %v1355 = vpop.f32.mrb[0].mxu0
        %v1356 = vadd.f32 0.0, %v1355
        %v1357 = vpop.f32.mrb[0].mxu0
        %v1358 = vpop.f32.mrb[0].mxu0
        %v1359 = vpop.f32.mrb[0].mxu0
        %1360 = vdwg.mxu0
        %1361 = vrot.lane.b32.xlu0 %v1127, 120
        %v1362 = vpop.permute.xlu0 %1361
        %1363 = vrot.lane.b32.xlu0 %v1241, 88
        %v1364 = vpop.permute.xlu0 %1363
        %v1366 = vsel %vm1132, %v1362, 0
        %v1369 = vsel %vm1132, %v1364, 0
        %1371 = vmatprep.subr.bf16.mxu0 0
        %1372 = vmatpush1.bf16.xpose.msra.mxu0 %v1369
        %1373 = vmatprep.subr.bf16.mxu0 0
        %1374 = vmatpush1.bf16.xpose.msra.mxu0 0
        %1375 = vmatprep.subr.bf16.mxu0 0
        %1376 = vmatpush1.bf16.xpose.msra.mxu0 0
        %1377 = vmatprep.subr.bf16.mxu0 0
        %1378 = vmatpush1.bf16.xpose.msra.mxu0 0
        %1379 = vmatprep.subr.bf16.mxu0 0
        %1380 = vmatpush1.bf16.xpose.msra.mxu0 0
        %1381 = vmatprep.subr.bf16.mxu0 0
        %1382 = vmatpush1.bf16.xpose.msra.mxu0 0
        %1383 = vmatprep.subr.bf16.mxu0 0
        %1384 = vmatpush1.bf16.xpose.msra.mxu0 0
        %1385 = vmatprep.subr.bf16.mxu0 0
        %1386 = vmatpush1.bf16.xpose.msra.mxu0 0
        %1387 = vmatprep.subr.bf16.mxu0 0
        %1388 = vmatpush1.bf16.xpose.msra.mxu0 0
        %1389 = vmatprep.subr.bf16.mxu0 0
        %1390 = vmatpush1.bf16.xpose.msra.mxu0 0
        %1391 = vmatprep.subr.bf16.mxu0 0
        %1392 = vmatpush1.bf16.xpose.msra.mxu0 0
        %1393 = vmatprep.subr.bf16.mxu0 0
        %1394 = vmatpush1.bf16.xpose.msra.mxu0 0
        %1395 = vmatprep.subr.bf16.mxu0 0
        %1396 = vmatpush1.bf16.xpose.msra.mxu0 0
        %1397 = vmatprep.subr.bf16.mxu0 0
        %1398 = vmatpush1.bf16.xpose.msra.mxu0 0
        %1399 = vmatprep.subr.bf16.mxu0 0
        %1400 = vmatpush1.bf16.xpose.msra.mxu0 0
        %1401 = vmatprep.subr.bf16.mxu0 0
        %1402 = vmatpush1.bf16.xpose.msra.mxu0 0
        %1403 = vmatprep.mubr.bf16.mxu0 0
        %1404 = vmatmul.mubr.bf16.gmra.mrb[0].mxu0 %v1366
        %v1405 = vpop.f32.mrb[0].mxu0
        %v1406 = vadd.f32 0.0, %v1405
        %v1407 = vpop.f32.mrb[0].mxu0
        %v1408 = vpop.f32.mrb[0].mxu0
        %v1409 = vpop.f32.mrb[0].mxu0
        %1410 = vdwg.mxu0
        %v1411 = vmul.f32 %v1406, 0.35355338
        %v1412 = vadd.f32 %v1411, %v1296
        %v1413 = vsel %vm1132, %v1412, -inf
        %1414 = vmax.xlane.f32.xlu0 %v1413
        %v1415 = vpop.xlane.xlu0 %1414
        %v1416 = vsub.f32 %v1412, %v1415
        %v1417 = vmul.f32 %v1416, 1.442695
        %v1418 = vpow.pop %v1417
        %v1419 = vsel %vm1132, %v1418, 0.0
        %1420 = vadd.xlane.f32.xlu0 %v1419
        %v1421 = vpop.xlane.xlu0 %1420
        %v1422 = vrcp.pop %v1421
        %v1423 = vmul.f32 %v1418, %v1422
        %v1424 = vpack.c.bf16 %v1423, %v1423
        %1425 = vrot.lane.b32.xlu0 %v1311, 56
        %v1426 = vpop.permute.xlu0 %1425
        %v1428 = vsel %vm1132, %v1424, 0
        %v1431 = vsel %vm1136, %v1426, 0
        %1433 = vmatprep.subr.bf16.mxu0 0
        %1434 = vmatpush1.bf16.msra.mxu0 %v1431
        %1435 = vmatprep.subr.bf16.mxu0 0
        %1436 = vmatpush1.bf16.msra.mxu0 0
        %1437 = vmatprep.subr.bf16.mxu0 0
        %1438 = vmatpush1.bf16.msra.mxu0 0
        %1439 = vmatprep.subr.bf16.mxu0 0
        %1440 = vmatpush1.bf16.msra.mxu0 0
        %1441 = vmatprep.subr.bf16.mxu0 0
        %1442 = vmatpush1.bf16.msra.mxu0 0
        %1443 = vmatprep.subr.bf16.mxu0 0
        %1444 = vmatpush1.bf16.msra.mxu0 0
        %1445 = vmatprep.subr.bf16.mxu0 0
        %1446 = vmatpush1.bf16.msra.mxu0 0
        %1447 = vmatprep.subr.bf16.mxu0 0
        %1448 = vmatpush1.bf16.msra.mxu0 0
        %1449 = vmatprep.subr.bf16.mxu0 0
        %1450 = vmatpush1.bf16.msra.mxu0 0
        %1451 = vmatprep.subr.bf16.mxu0 0
        %1452 = vmatpush1.bf16.msra.mxu0 0
        %1453 = vmatprep.subr.bf16.mxu0 0
        %1454 = vmatpush1.bf16.msra.mxu0 0
        %1455 = vmatprep.subr.bf16.mxu0 0
        %1456 = vmatpush1.bf16.msra.mxu0 0
        %1457 = vmatprep.subr.bf16.mxu0 0
        %1458 = vmatpush1.bf16.msra.mxu0 0
        %1459 = vmatprep.subr.bf16.mxu0 0
        %1460 = vmatpush1.bf16.msra.mxu0 0
        %1461 = vmatprep.subr.bf16.mxu0 0
        %1462 = vmatpush1.bf16.msra.mxu0 0
        %1463 = vmatprep.subr.bf16.mxu0 0
        %1464 = vmatpush1.bf16.msra.mxu0 0
        %1465 = vmatprep.mubr.bf16.mxu0 0
        %1466 = vmatmul.mubr.bf16.gmra.mrb[0].mxu0 %v1428
        %v1467 = vpop.f32.mrb[0].mxu0
        %v1468 = vadd.f32 0.0, %v1467
        %v1469 = vpop.f32.mrb[0].mxu0
        %v1470 = vpop.f32.mrb[0].mxu0
        %v1471 = vpop.f32.mrb[0].mxu0
        %1472 = vdwg.mxu0
        %1473 = vrot.lane.b32.xlu0 %v1127, 112
        %v1474 = vpop.permute.xlu0 %1473
        %1475 = vrot.lane.b32.xlu0 %v1241, 80
        %v1476 = vpop.permute.xlu0 %1475
        %v1478 = vsel %vm1132, %v1474, 0
        %v1481 = vsel %vm1132, %v1476, 0
        %1483 = vmatprep.subr.bf16.mxu0 0
        %1484 = vmatpush1.bf16.xpose.msra.mxu0 %v1481
        %1485 = vmatprep.subr.bf16.mxu0 0
        %1486 = vmatpush1.bf16.xpose.msra.mxu0 0
        %1487 = vmatprep.subr.bf16.mxu0 0
        %1488 = vmatpush1.bf16.xpose.msra.mxu0 0
        %1489 = vmatprep.subr.bf16.mxu0 0
        %1490 = vmatpush1.bf16.xpose.msra.mxu0 0
        %1491 = vmatprep.subr.bf16.mxu0 0
        %1492 = vmatpush1.bf16.xpose.msra.mxu0 0
        %1493 = vmatprep.subr.bf16.mxu0 0
        %1494 = vmatpush1.bf16.xpose.msra.mxu0 0
        %1495 = vmatprep.subr.bf16.mxu0 0
        %1496 = vmatpush1.bf16.xpose.msra.mxu0 0
        %1497 = vmatprep.subr.bf16.mxu0 0
        %1498 = vmatpush1.bf16.xpose.msra.mxu0 0
        %1499 = vmatprep.subr.bf16.mxu0 0
        %1500 = vmatpush1.bf16.xpose.msra.mxu0 0
        %1501 = vmatprep.subr.bf16.mxu0 0
        %1502 = vmatpush1.bf16.xpose.msra.mxu0 0
        %1503 = vmatprep.subr.bf16.mxu0 0
        %1504 = vmatpush1.bf16.xpose.msra.mxu0 0
        %1505 = vmatprep.subr.bf16.mxu0 0
        %1506 = vmatpush1.bf16.xpose.msra.mxu0 0
        %1507 = vmatprep.subr.bf16.mxu0 0
        %1508 = vmatpush1.bf16.xpose.msra.mxu0 0
        %1509 = vmatprep.subr.bf16.mxu0 0
        %1510 = vmatpush1.bf16.xpose.msra.mxu0 0
        %1511 = vmatprep.subr.bf16.mxu0 0
        %1512 = vmatpush1.bf16.xpose.msra.mxu0 0
        %1513 = vmatprep.subr.bf16.mxu0 0
        %1514 = vmatpush1.bf16.xpose.msra.mxu0 0
        %1515 = vmatprep.mubr.bf16.mxu0 0
        %1516 = vmatmul.mubr.bf16.gmra.mrb[0].mxu0 %v1478
        %v1517 = vpop.f32.mrb[0].mxu0
        %v1518 = vadd.f32 0.0, %v1517
        %v1519 = vpop.f32.mrb[0].mxu0
        %v1520 = vpop.f32.mrb[0].mxu0
        %v1521 = vpop.f32.mrb[0].mxu0
        %1522 = vdwg.mxu0
        %v1523 = vmul.f32 %v1518, 0.35355338
        %v1524 = vadd.f32 %v1523, %v1296
        %v1525 = vsel %vm1132, %v1524, -inf
        %1526 = vmax.xlane.f32.xlu0 %v1525
        %v1527 = vpop.xlane.xlu0 %1526
        %v1528 = vsub.f32 %v1524, %v1527
        %v1529 = vmul.f32 %v1528, 1.442695
        %v1530 = vpow.pop %v1529
        %v1531 = vsel %vm1132, %v1530, 0.0
        %1532 = vadd.xlane.f32.xlu0 %v1531
        %v1533 = vpop.xlane.xlu0 %1532
        %v1534 = vrcp.pop %v1533
        %v1535 = vmul.f32 %v1530, %v1534
        %v1536 = vpack.c.bf16 %v1535, %v1535
        %1537 = vrot.lane.b32.xlu0 %v1311, 48
        %v1538 = vpop.permute.xlu0 %1537
        %v1540 = vsel %vm1132, %v1536, 0
        %v1543 = vsel %vm1136, %v1538, 0
        %1545 = vmatprep.subr.bf16.mxu0 0
        %1546 = vmatpush1.bf16.msra.mxu0 %v1543
        %1547 = vmatprep.subr.bf16.mxu0 0
        %1548 = vmatpush1.bf16.msra.mxu0 0
        %1549 = vmatprep.subr.bf16.mxu0 0
        %1550 = vmatpush1.bf16.msra.mxu0 0
        %1551 = vmatprep.subr.bf16.mxu0 0
        %1552 = vmatpush1.bf16.msra.mxu0 0
        %1553 = vmatprep.subr.bf16.mxu0 0
        %1554 = vmatpush1.bf16.msra.mxu0 0
        %1555 = vmatprep.subr.bf16.mxu0 0
        %1556 = vmatpush1.bf16.msra.mxu0 0
        %1557 = vmatprep.subr.bf16.mxu0 0
        %1558 = vmatpush1.bf16.msra.mxu0 0
        %1559 = vmatprep.subr.bf16.mxu0 0
        %1560 = vmatpush1.bf16.msra.mxu0 0
        %1561 = vmatprep.subr.bf16.mxu0 0
        %1562 = vmatpush1.bf16.msra.mxu0 0
        %1563 = vmatprep.subr.bf16.mxu0 0
        %1564 = vmatpush1.bf16.msra.mxu0 0
        %1565 = vmatprep.subr.bf16.mxu0 0
        %1566 = vmatpush1.bf16.msra.mxu0 0
        %1567 = vmatprep.subr.bf16.mxu0 0
        %1568 = vmatpush1.bf16.msra.mxu0 0
        %1569 = vmatprep.subr.bf16.mxu0 0
        %1570 = vmatpush1.bf16.msra.mxu0 0
        %1571 = vmatprep.subr.bf16.mxu0 0
        %1572 = vmatpush1.bf16.msra.mxu0 0
        %1573 = vmatprep.subr.bf16.mxu0 0
        %1574 = vmatpush1.bf16.msra.mxu0 0
        %1575 = vmatprep.subr.bf16.mxu0 0
        %1576 = vmatpush1.bf16.msra.mxu0 0
        %1577 = vmatprep.mubr.bf16.mxu0 0
        %1578 = vmatmul.mubr.bf16.gmra.mrb[0].mxu0 %v1540
        %v1579 = vpop.f32.mrb[0].mxu0
        %v1580 = vadd.f32 0.0, %v1579
        %v1581 = vpop.f32.mrb[0].mxu0
        %v1582 = vpop.f32.mrb[0].mxu0
        %v1583 = vpop.f32.mrb[0].mxu0
        %1584 = vdwg.mxu0
        %1585 = vrot.lane.b32.xlu0 %v1127, 104
        %v1586 = vpop.permute.xlu0 %1585
        %1587 = vrot.lane.b32.xlu0 %v1241, 72
        %v1588 = vpop.permute.xlu0 %1587
        %v1590 = vsel %vm1132, %v1586, 0
        %v1593 = vsel %vm1132, %v1588, 0
        %1595 = vmatprep.subr.bf16.mxu0 0
        %1596 = vmatpush1.bf16.xpose.msra.mxu0 %v1593
        %1597 = vmatprep.subr.bf16.mxu0 0
        %1598 = vmatpush1.bf16.xpose.msra.mxu0 0
        %1599 = vmatprep.subr.bf16.mxu0 0
        %1600 = vmatpush1.bf16.xpose.msra.mxu0 0
        %1601 = vmatprep.subr.bf16.mxu0 0
        %1602 = vmatpush1.bf16.xpose.msra.mxu0 0
        %1603 = vmatprep.subr.bf16.mxu0 0
        %1604 = vmatpush1.bf16.xpose.msra.mxu0 0
        %1605 = vmatprep.subr.bf16.mxu0 0
        %1606 = vmatpush1.bf16.xpose.msra.mxu0 0
        %1607 = vmatprep.subr.bf16.mxu0 0
        %1608 = vmatpush1.bf16.xpose.msra.mxu0 0
        %1609 = vmatprep.subr.bf16.mxu0 0
        %1610 = vmatpush1.bf16.xpose.msra.mxu0 0
        %1611 = vmatprep.subr.bf16.mxu0 0
        %1612 = vmatpush1.bf16.xpose.msra.mxu0 0
        %1613 = vmatprep.subr.bf16.mxu0 0
        %1614 = vmatpush1.bf16.xpose.msra.mxu0 0
        %1615 = vmatprep.subr.bf16.mxu0 0
        %1616 = vmatpush1.bf16.xpose.msra.mxu0 0
        %1617 = vmatprep.subr.bf16.mxu0 0
        %1618 = vmatpush1.bf16.xpose.msra.mxu0 0
        %1619 = vmatprep.subr.bf16.mxu0 0
        %1620 = vmatpush1.bf16.xpose.msra.mxu0 0
        %1621 = vmatprep.subr.bf16.mxu0 0
        %1622 = vmatpush1.bf16.xpose.msra.mxu0 0
        %1623 = vmatprep.subr.bf16.mxu0 0
        %1624 = vmatpush1.bf16.xpose.msra.mxu0 0
        %1625 = vmatprep.subr.bf16.mxu0 0
        %1626 = vmatpush1.bf16.xpose.msra.mxu0 0
        %1627 = vmatprep.mubr.bf16.mxu0 0
        %1628 = vmatmul.mubr.bf16.gmra.mrb[0].mxu0 %v1590
        %v1629 = vpop.f32.mrb[0].mxu0
        %v1630 = vadd.f32 0.0, %v1629
        %v1631 = vpop.f32.mrb[0].mxu0
        %v1632 = vpop.f32.mrb[0].mxu0
        %v1633 = vpop.f32.mrb[0].mxu0
        %1634 = vdwg.mxu0
        %v1635 = vmul.f32 %v1630, 0.35355338
        %v1636 = vadd.f32 %v1635, %v1296
        %v1637 = vsel %vm1132, %v1636, -inf
        %1638 = vmax.xlane.f32.xlu0 %v1637
        %v1639 = vpop.xlane.xlu0 %1638
        %v1640 = vsub.f32 %v1636, %v1639
        %v1641 = vmul.f32 %v1640, 1.442695
        %v1642 = vpow.pop %v1641
        %v1643 = vsel %vm1132, %v1642, 0.0
        %1644 = vadd.xlane.f32.xlu0 %v1643
        %v1645 = vpop.xlane.xlu0 %1644
        %v1646 = vrcp.pop %v1645
        %v1647 = vmul.f32 %v1642, %v1646
        %v1648 = vpack.c.bf16 %v1647, %v1647
        %1649 = vrot.lane.b32.xlu0 %v1311, 40
        %v1650 = vpop.permute.xlu0 %1649
        %v1652 = vsel %vm1132, %v1648, 0
        %v1655 = vsel %vm1136, %v1650, 0
        %1657 = vmatprep.subr.bf16.mxu0 0
        %1658 = vmatpush1.bf16.msra.mxu0 %v1655
        %1659 = vmatprep.subr.bf16.mxu0 0
        %1660 = vmatpush1.bf16.msra.mxu0 0
        %1661 = vmatprep.subr.bf16.mxu0 0
        %1662 = vmatpush1.bf16.msra.mxu0 0
        %1663 = vmatprep.subr.bf16.mxu0 0
        %1664 = vmatpush1.bf16.msra.mxu0 0
        %1665 = vmatprep.subr.bf16.mxu0 0
        %1666 = vmatpush1.bf16.msra.mxu0 0
        %1667 = vmatprep.subr.bf16.mxu0 0
        %1668 = vmatpush1.bf16.msra.mxu0 0
        %1669 = vmatprep.subr.bf16.mxu0 0
        %1670 = vmatpush1.bf16.msra.mxu0 0
        %1671 = vmatprep.subr.bf16.mxu0 0
        %1672 = vmatpush1.bf16.msra.mxu0 0
        %1673 = vmatprep.subr.bf16.mxu0 0
        %1674 = vmatpush1.bf16.msra.mxu0 0
        %1675 = vmatprep.subr.bf16.mxu0 0
        %1676 = vmatpush1.bf16.msra.mxu0 0
        %1677 = vmatprep.subr.bf16.mxu0 0
        %1678 = vmatpush1.bf16.msra.mxu0 0
        %1679 = vmatprep.subr.bf16.mxu0 0
        %1680 = vmatpush1.bf16.msra.mxu0 0
        %1681 = vmatprep.subr.bf16.mxu0 0
        %1682 = vmatpush1.bf16.msra.mxu0 0
        %1683 = vmatprep.subr.bf16.mxu0 0
        %1684 = vmatpush1.bf16.msra.mxu0 0
        %1685 = vmatprep.subr.bf16.mxu0 0
        %1686 = vmatpush1.bf16.msra.mxu0 0
        %1687 = vmatprep.subr.bf16.mxu0 0
        %1688 = vmatpush1.bf16.msra.mxu0 0
        %1689 = vmatprep.mubr.bf16.mxu0 0
        %1690 = vmatmul.mubr.bf16.gmra.mrb[0].mxu0 %v1652
        %v1691 = vpop.f32.mrb[0].mxu0
        %v1692 = vadd.f32 0.0, %v1691
        %v1693 = vpop.f32.mrb[0].mxu0
        %v1694 = vpop.f32.mrb[0].mxu0
        %v1695 = vpop.f32.mrb[0].mxu0
        %1696 = vdwg.mxu0
        %1698 = vrot.lane.b32.xlu0 %v1468, 8
        %v1699 = vpop.permute.xlu0 %1698
        %1702 = vrot.lane.b32.xlu0 %v1580, 16
        %v1703 = vpop.permute.xlu0 %1702
        %1706 = vrot.lane.b32.xlu0 %v1692, 24
        %v1707 = vpop.permute.xlu0 %1706
        %v1709 = vsel %vm1132, %v1356, %v1699
        %v1710 = vsel %vm968, %v1709, %v1703
        %vm1711 = vcmask 195584
        %v1712 = vsel %vm1711, %v1710, %v1707
        %v1713 = vpack.c.bf16 %v1712, %v1712
        %v1714 = vld [vmem:[%s11] sm:$0xf]
        %v1715 = vld [vmem:[%s11 + $0x4] sm:$0xf]
        %v1716 = vld [vmem:[%s11 + $0x8] sm:$0xf]
        %v1717 = vld [vmem:[%s11 + $0xc] sm:$0xf]
        %v1718 = vld [vmem:[#allocation17] sm:$0x1]
        %v1720 = vlaneseq
        %v1721 = vshrl.u32 %v1720, 7
        %v1722 = vsub.s32 0, %v1721
        %v1723 = vrot.slane %v1718, %v1722
        %v1729 = vunpack.c.l.b16 %v1714
        %v1730 = vunpack.c.l.b16 %v1715
        %v1731 = vunpack.c.l.b16 %v1716
        %v1732 = vunpack.c.l.b16 %v1717
        %v1733 = vpack.c.b16 %v1730, %v1729
        %v1734 = vpack.c.b16 %v1732, %v1731
        %v1738 = vsel %vm1083, %v1713, 0
        %1740 = vmatprep.subr.bf16.mxu0 0
        %1741 = vmatpush1.bf16.msra.mxu0 %v1733
        %1742 = vmatprep.subr.bf16.mxu0 0
        %1743 = vmatpush1.bf16.msra.mxu0 %v1734
        %1744 = vmatprep.subr.bf16.mxu0 0
        %1745 = vmatpush1.bf16.msra.mxu0 0
        %1746 = vmatprep.subr.bf16.mxu0 0
        %1747 = vmatpush1.bf16.msra.mxu0 0
        %1748 = vmatprep.subr.bf16.mxu0 0
        %1749 = vmatpush1.bf16.msra.mxu0 0
        %1750 = vmatprep.subr.bf16.mxu0 0
        %1751 = vmatpush1.bf16.msra.mxu0 0
        %1752 = vmatprep.subr.bf16.mxu0 0
        %1753 = vmatpush1.bf16.msra.mxu0 0
        %1754 = vmatprep.subr.bf16.mxu0 0
        %1755 = vmatpush1.bf16.msra.mxu0 0
        %1756 = vmatprep.subr.bf16.mxu0 0
        %1757 = vmatpush1.bf16.msra.mxu0 0
        %1758 = vmatprep.subr.bf16.mxu0 0
        %1759 = vmatpush1.bf16.msra.mxu0 0
        %1760 = vmatprep.subr.bf16.mxu0 0
        %1761 = vmatpush1.bf16.msra.mxu0 0
        %1762 = vmatprep.subr.bf16.mxu0 0
        %1763 = vmatpush1.bf16.msra.mxu0 0
        %1764 = vmatprep.subr.bf16.mxu0 0
        %1765 = vmatpush1.bf16.msra.mxu0 0
        %1766 = vmatprep.subr.bf16.mxu0 0
        %1767 = vmatpush1.bf16.msra.mxu0 0
        %1768 = vmatprep.subr.bf16.mxu0 0
        %1769 = vmatpush1.bf16.msra.mxu0 0
        %1770 = vmatprep.subr.bf16.mxu0 0
        %1771 = vmatpush1.bf16.msra.mxu0 0
        %1772 = vmatprep.mubr.bf16.mxu0 0
        %1773 = vmatmul.mubr.bf16.gmra.mrb[0].mxu0 %v1738
        %v1774 = vpop.f32.mrb[0].mxu0
        %v1775 = vadd.f32 %v1723, %v1774
        %v1776 = vpop.f32.mrb[0].mxu0
        %v1777 = vpop.f32.mrb[0].mxu0
        %v1778 = vpop.f32.mrb[0].mxu0
        %1779 = vdwg.mxu0
        %v1780 = vadd.f32 %v1053, %v1775
        %v1781 = vsel %vm1083, %v1780, 0.0
        %1782 = vadd.xlane.f32.xlu0 %v1781
        %v1783 = vpop.xlane.xlu0 %1782
        %v1784 = vrcp.pop 32.0
        %v1785 = vmul.f32 %v1783, %v1784
        %v1786 = vsub.f32 %v1780, %v1785
        %v1787 = vmul.f32 %v1786, %v1786
        %v1788 = vsel %vm1083, %v1787, 0.0
        %1789 = vadd.xlane.f32.xlu0 %v1788
        %v1790 = vpop.xlane.xlu0 %1789
        %v1791 = vmul.f32 %v1790, %v1784
        %v1792 = vadd.f32 %v1791, 1e-12
        %v1793 = vrsqrt.pop %v1792
        %v1794 = vmul.f32 %v1786, %v1793
        %v1795 = vld [vmem:[#allocation19] sm:$0x1]
        %v1797 = vlaneseq
        %v1798 = vshrl.u32 %v1797, 7
        %v1799 = vsub.s32 0, %v1798
        %v1800 = vrot.slane %v1795, %v1799
        %v1802 = vmul.f32 %v1794, %v1800
        %v1803 = vld [vmem:[#allocation20] sm:$0x1]
        %v1805 = vlaneseq
        %v1806 = vshrl.u32 %v1805, 7
        %v1807 = vsub.s32 0, %v1806
        %v1808 = vrot.slane %v1803, %v1807
        %v1810 = vadd.f32 %v1802, %v1808
        %v1811 = vpack.c.bf16 %v1810, %v1810
        %v1812 = vld [vmem:[%s15] sm:$0xf]
        %v1813 = vld [vmem:[%s15 + $0x4] sm:$0xf]
        %v1814 = vld [vmem:[%s15 + $0x8] sm:$0xf]
        %v1815 = vld [vmem:[%s15 + $0xc] sm:$0xf]
        %v1816 = vld [vmem:[#allocation22] sm:$0x1]
        %v1818 = vlaneseq
        %v1819 = vshrl.u32 %v1818, 7
        %v1820 = vsub.s32 0, %v1819
        %v1821 = vrot.slane %v1816, %v1820
        %v1827 = vunpack.c.l.b16 %v1812
        %v1828 = vunpack.c.l.b16 %v1813
        %v1829 = vunpack.c.l.b16 %v1814
        %v1830 = vunpack.c.l.b16 %v1815
        %v1831 = vpack.c.b16 %v1828, %v1827
        %v1832 = vpack.c.b16 %v1830, %v1829
        %v1836 = vsel %vm1083, %v1811, 0
        %1838 = vmatprep.subr.bf16.mxu0 0
        %1839 = vmatpush1.bf16.msra.mxu0 %v1831
        %1840 = vmatprep.subr.bf16.mxu0 0
        %1841 = vmatpush1.bf16.msra.mxu0 %v1832
        %1842 = vmatprep.subr.bf16.mxu0 0
        %1843 = vmatpush1.bf16.msra.mxu0 0
        %1844 = vmatprep.subr.bf16.mxu0 0
        %1845 = vmatpush1.bf16.msra.mxu0 0
        %1846 = vmatprep.subr.bf16.mxu0 0
        %1847 = vmatpush1.bf16.msra.mxu0 0
        %1848 = vmatprep.subr.bf16.mxu0 0
        %1849 = vmatpush1.bf16.msra.mxu0 0
        %1850 = vmatprep.subr.bf16.mxu0 0
        %1851 = vmatpush1.bf16.msra.mxu0 0
        %1852 = vmatprep.subr.bf16.mxu0 0
        %1853 = vmatpush1.bf16.msra.mxu0 0
        %1854 = vmatprep.subr.bf16.mxu0 0
        %1855 = vmatpush1.bf16.msra.mxu0 0
        %1856 = vmatprep.subr.bf16.mxu0 0
        %1857 = vmatpush1.bf16.msra.mxu0 0
        %1858 = vmatprep.subr.bf16.mxu0 0
        %1859 = vmatpush1.bf16.msra.mxu0 0
        %1860 = vmatprep.subr.bf16.mxu0 0
        %1861 = vmatpush1.bf16.msra.mxu0 0
        %1862 = vmatprep.subr.bf16.mxu0 0
        %1863 = vmatpush1.bf16.msra.mxu0 0
        %1864 = vmatprep.subr.bf16.mxu0 0
        %1865 = vmatpush1.bf16.msra.mxu0 0
        %1866 = vmatprep.subr.bf16.mxu0 0
        %1867 = vmatpush1.bf16.msra.mxu0 0
        %1868 = vmatprep.subr.bf16.mxu0 0
        %1869 = vmatpush1.bf16.msra.mxu0 0
        %1870 = vmatprep.mubr.bf16.mxu0 0
        %1871 = vmatmul.mubr.bf16.gmra.mrb[0].mxu0 %v1836
        %v1872 = vpop.f32.mrb[0].mxu0
        %v1873 = vadd.f32 %v1821, %v1872
        %v1874 = vpop.f32.mrb[0].mxu0
        %v1875 = vpop.f32.mrb[0].mxu0
        %v1876 = vpop.f32.mrb[0].mxu0
        %1877 = vdwg.mxu0
        %v1878 = vmul.f32 %v1873, 0.5
        %v1879 = vmul.f32 %v1873, 0.044715
        %v1880 = vmul.f32 %v1879, %v1873
        %v1881 = vmul.f32 %v1880, %v1873
        %v1882 = vadd.f32 %v1873, %v1881
        %v1883 = vmul.f32 %v1882, 0.7978846
        %v1884 = vtanh.pop %v1883
        %v1885 = vadd.f32 %v1884, 1.0
        %v1886 = vmul.f32 %v1878, %v1885
        %v1887 = vpack.c.bf16 %v1886, %v1886
        %v1888 = vld [vmem:[%s17] sm:$0xf]
        %v1889 = vld [vmem:[%s17 + $0x4] sm:$0xf]
        %v1890 = vld [vmem:[%s17 + $0x8] sm:$0xf]
        %v1891 = vld [vmem:[%s17 + $0xc] sm:$0xf]
        %v1892 = vld [vmem:[%s17 + $0x10] sm:$0xf]
        %v1893 = vld [vmem:[%s17 + $0x14] sm:$0xf]
        %v1894 = vld [vmem:[%s17 + $0x18] sm:$0xf]
        %v1895 = vld [vmem:[%s17 + $0x1c] sm:$0xf]
        %v1896 = vld [vmem:[%s18] sm:$0x1]
        %v1898 = vlaneseq
        %v1899 = vshrl.u32 %v1898, 7
        %v1900 = vsub.s32 0, %v1899
        %v1901 = vrot.slane %v1896, %v1900
        %v1911 = vunpack.c.l.b16 %v1888
        %v1912 = vunpack.c.l.b16 %v1889
        %v1913 = vunpack.c.l.b16 %v1890
        %v1914 = vunpack.c.l.b16 %v1891
        %v1915 = vunpack.c.l.b16 %v1892
        %v1916 = vunpack.c.l.b16 %v1893
        %v1917 = vunpack.c.l.b16 %v1894
        %v1918 = vunpack.c.l.b16 %v1895
        %v1919 = vpack.c.b16 %v1912, %v1911
        %v1920 = vpack.c.b16 %v1914, %v1913
        %v1921 = vpack.c.b16 %v1916, %v1915
        %v1922 = vpack.c.b16 %v1918, %v1917
        %vm1927 = vcmask 523264
        %v1929 = vsel %vm1927, %v1887, 0
        %1931 = vmatprep.subr.bf16.mxu0 0
        %1932 = vmatpush1.bf16.msra.mxu0 %v1919
        %1933 = vmatprep.subr.bf16.mxu0 0
        %1934 = vmatpush1.bf16.msra.mxu0 %v1920
        %1935 = vmatprep.subr.bf16.mxu0 0
        %1936 = vmatpush1.bf16.msra.mxu0 %v1921
        %1937 = vmatprep.subr.bf16.mxu0 0
        %1938 = vmatpush1.bf16.msra.mxu0 %v1922
        %1939 = vmatprep.subr.bf16.mxu0 0
        %1940 = vmatpush1.bf16.msra.mxu0 0
        %1941 = vmatprep.subr.bf16.mxu0 0
        %1942 = vmatpush1.bf16.msra.mxu0 0
        %1943 = vmatprep.subr.bf16.mxu0 0
        %1944 = vmatpush1.bf16.msra.mxu0 0
        %1945 = vmatprep.subr.bf16.mxu0 0
        %1946 = vmatpush1.bf16.msra.mxu0 0
        %1947 = vmatprep.subr.bf16.mxu0 0
        %1948 = vmatpush1.bf16.msra.mxu0 0
        %1949 = vmatprep.subr.bf16.mxu0 0
        %1950 = vmatpush1.bf16.msra.mxu0 0
        %1951 = vmatprep.subr.bf16.mxu0 0
        %1952 = vmatpush1.bf16.msra.mxu0 0
        %1953 = vmatprep.subr.bf16.mxu0 0
        %1954 = vmatpush1.bf16.msra.mxu0 0
        %1955 = vmatprep.subr.bf16.mxu0 0
        %1956 = vmatpush1.bf16.msra.mxu0 0
        %1957 = vmatprep.subr.bf16.mxu0 0
        %1958 = vmatpush1.bf16.msra.mxu0 0
        %1959 = vmatprep.subr.bf16.mxu0 0
        %1960 = vmatpush1.bf16.msra.mxu0 0
        %1961 = vmatprep.subr.bf16.mxu0 0
        %1962 = vmatpush1.bf16.msra.mxu0 0
        %1963 = vmatprep.mubr.bf16.mxu0 0
        %1964 = vmatmul.mubr.bf16.gmra.mrb[0].mxu0 %v1929
        %v1965 = vpop.f32.mrb[0].mxu0
        %v1966 = vadd.f32 %v1901, %v1965
        %v1967 = vpop.f32.mrb[0].mxu0
        %v1968 = vpop.f32.mrb[0].mxu0
        %v1969 = vpop.f32.mrb[0].mxu0
        %1970 = vdwg.mxu0
        %v1971 = vadd.f32 %v1810, %v1966
        %v1972 = vsel %vm1083, %v1971, 0.0
        %1973 = vadd.xlane.f32.xlu0 %v1972
        %v1974 = vpop.xlane.xlu0 %1973
        %v1975 = vmul.f32 %v1974, %v1784
        %v1976 = vsub.f32 %v1971, %v1975
        %v1977 = vmul.f32 %v1976, %v1976
        %v1978 = vsel %vm1083, %v1977, 0.0
        %1979 = vadd.xlane.f32.xlu0 %v1978
        %v1980 = vpop.xlane.xlu0 %1979
        %v1981 = vmul.f32 %v1980, %v1784
        %v1982 = vadd.f32 %v1981, 1e-12
        %v1983 = vrsqrt.pop %v1982
        %v1984 = vmul.f32 %v1976, %v1983
        %v1985 = vld [vmem:[%s19] sm:$0x1]
        %v1987 = vlaneseq
        %v1988 = vshrl.u32 %v1987, 7
        %v1989 = vsub.s32 0, %v1988
        %v1990 = vrot.slane %v1985, %v1989
        %v1992 = vmul.f32 %v1984, %v1990
        %v1993 = vld [vmem:[%s20] sm:$0x1]
        %v1995 = vlaneseq
        %v1996 = vshrl.u32 %v1995, 7
        %v1997 = vsub.s32 0, %v1996
        %v1998 = vrot.slane %v1993, %v1997
        %v2000 = vadd.f32 %v1992, %v1998
        %v2001 = vpack.c.bf16 %v2000, %v2000
        %v2003 = vsel %vm1083, %v2001, 0
        %2005 = vmatprep.subr.bf16.mxu0 0
        %2006 = vmatpush1.bf16.msra.mxu0 %v1079
        %2007 = vmatprep.subr.bf16.mxu0 0
        %2008 = vmatpush1.bf16.msra.mxu0 %v1080
        %2009 = vmatprep.subr.bf16.mxu0 0
        %2010 = vmatpush1.bf16.msra.mxu0 0
        %2011 = vmatprep.subr.bf16.mxu0 0
        %2012 = vmatpush1.bf16.msra.mxu0 0
        %2013 = vmatprep.subr.bf16.mxu0 0
        %2014 = vmatpush1.bf16.msra.mxu0 0
        %2015 = vmatprep.subr.bf16.mxu0 0
        %2016 = vmatpush1.bf16.msra.mxu0 0
        %2017 = vmatprep.subr.bf16.mxu0 0
        %2018 = vmatpush1.bf16.msra.mxu0 0
        %2019 = vmatprep.subr.bf16.mxu0 0
        %2020 = vmatpush1.bf16.msra.mxu0 0
        %2021 = vmatprep.subr.bf16.mxu0 0
        %2022 = vmatpush1.bf16.msra.mxu0 0
        %2023 = vmatprep.subr.bf16.mxu0 0
        %2024 = vmatpush1.bf16.msra.mxu0 0
        %2025 = vmatprep.subr.bf16.mxu0 0
        %2026 = vmatpush1.bf16.msra.mxu0 0
        %2027 = vmatprep.subr.bf16.mxu0 0
        %2028 = vmatpush1.bf16.msra.mxu0 0
        %2029 = vmatprep.subr.bf16.mxu0 0
        %2030 = vmatpush1.bf16.msra.mxu0 0
        %2031 = vmatprep.subr.bf16.mxu0 0
        %2032 = vmatpush1.bf16.msra.mxu0 0
        %2033 = vmatprep.subr.bf16.mxu0 0
        %2034 = vmatpush1.bf16.msra.mxu0 0
        %2035 = vmatprep.subr.bf16.mxu0 0
        %2036 = vmatpush1.bf16.msra.mxu0 0
        %2037 = vmatprep.mubr.bf16.mxu0 0
        %2038 = vmatmul.mubr.bf16.gmra.mrb[0].mxu0 %v2003
        %v2039 = vpop.f32.mrb[0].mxu0
        %v2040 = vadd.f32 %v1069, %v2039
        %v2041 = vpop.f32.mrb[0].mxu0
        %v2042 = vpop.f32.mrb[0].mxu0
        %v2043 = vpop.f32.mrb[0].mxu0
        %2044 = vdwg.mxu0
        %v2045 = vpack.c.bf16 %v2040, %v2040
        %2047 = vrot.lane.b32.xlu0 %v2045, 32
        %v2048 = vpop.permute.xlu0 %2047
        %v2050 = vsel %vm1132, %v2048, 0
        %2052 = vmatprep.subr.bf16.mxu0 0
        %2053 = vmatpush1.bf16.msra.mxu0 %v1138
        %2054 = vmatprep.subr.bf16.mxu0 0
        %2055 = vmatpush1.bf16.msra.mxu0 0
        %2056 = vmatprep.subr.bf16.mxu0 0
        %2057 = vmatpush1.bf16.msra.mxu0 0
        %2058 = vmatprep.subr.bf16.mxu0 0
        %2059 = vmatpush1.bf16.msra.mxu0 0
        %2060 = vmatprep.subr.bf16.mxu0 0
        %2061 = vmatpush1.bf16.msra.mxu0 0
        %2062 = vmatprep.subr.bf16.mxu0 0
        %2063 = vmatpush1.bf16.msra.mxu0 0
        %2064 = vmatprep.subr.bf16.mxu0 0
        %2065 = vmatpush1.bf16.msra.mxu0 0
        %2066 = vmatprep.subr.bf16.mxu0 0
        %2067 = vmatpush1.bf16.msra.mxu0 0
        %2068 = vmatprep.subr.bf16.mxu0 0
        %2069 = vmatpush1.bf16.msra.mxu0 0
        %2070 = vmatprep.subr.bf16.mxu0 0
        %2071 = vmatpush1.bf16.msra.mxu0 0
        %2072 = vmatprep.subr.bf16.mxu0 0
        %2073 = vmatpush1.bf16.msra.mxu0 0
        %2074 = vmatprep.subr.bf16.mxu0 0
        %2075 = vmatpush1.bf16.msra.mxu0 0
        %2076 = vmatprep.subr.bf16.mxu0 0
        %2077 = vmatpush1.bf16.msra.mxu0 0
        %2078 = vmatprep.subr.bf16.mxu0 0
        %2079 = vmatpush1.bf16.msra.mxu0 0
        %2080 = vmatprep.subr.bf16.mxu0 0
        %2081 = vmatpush1.bf16.msra.mxu0 0
        %2082 = vmatprep.subr.bf16.mxu0 0
        %2083 = vmatpush1.bf16.msra.mxu0 0
        %2084 = vmatprep.mubr.bf16.mxu0 0
        %2085 = vmatmul.mubr.bf16.gmra.mrb[0].mxu0 %v2050
        %v2086 = vpop.f32.mrb[0].mxu0
        %v2087 = vadd.f32 0.0, %v2086
        %v2088 = vpop.f32.mrb[0].mxu0
        %v2089 = vpop.f32.mrb[0].mxu0
        %v2090 = vpop.f32.mrb[0].mxu0
        %2091 = vdwg.mxu0
        %v2092 = vmul.f32 %v2087, 2.828427
        %2094 = vrot.lane.b32.xlu0 %v2092, 32
        %v2095 = vpop.permute.xlu0 %2094
        %v2097 = vadd.f32 %v2040, %v2095
        %2098 = vrot.lane.b32.xlu0 %v2045, 24
        %v2099 = vpop.permute.xlu0 %2098
        %v2101 = vsel %vm1132, %v2099, 0
        %2103 = vmatprep.subr.bf16.mxu0 0
        %2104 = vmatpush1.bf16.msra.mxu0 %v1193
        %2105 = vmatprep.subr.bf16.mxu0 0
        %2106 = vmatpush1.bf16.msra.mxu0 0
        %2107 = vmatprep.subr.bf16.mxu0 0
        %2108 = vmatpush1.bf16.msra.mxu0 0
        %2109 = vmatprep.subr.bf16.mxu0 0
        %2110 = vmatpush1.bf16.msra.mxu0 0
        %2111 = vmatprep.subr.bf16.mxu0 0
        %2112 = vmatpush1.bf16.msra.mxu0 0
        %2113 = vmatprep.subr.bf16.mxu0 0
        %2114 = vmatpush1.bf16.msra.mxu0 0
        %2115 = vmatprep.subr.bf16.mxu0 0
        %2116 = vmatpush1.bf16.msra.mxu0 0
        %2117 = vmatprep.subr.bf16.mxu0 0
        %2118 = vmatpush1.bf16.msra.mxu0 0
        %2119 = vmatprep.subr.bf16.mxu0 0
        %2120 = vmatpush1.bf16.msra.mxu0 0
        %2121 = vmatprep.subr.bf16.mxu0 0
        %2122 = vmatpush1.bf16.msra.mxu0 0
        %2123 = vmatprep.subr.bf16.mxu0 0
        %2124 = vmatpush1.bf16.msra.mxu0 0
        %2125 = vmatprep.subr.bf16.mxu0 0
        %2126 = vmatpush1.bf16.msra.mxu0 0
        %2127 = vmatprep.subr.bf16.mxu0 0
        %2128 = vmatpush1.bf16.msra.mxu0 0
        %2129 = vmatprep.subr.bf16.mxu0 0
        %2130 = vmatpush1.bf16.msra.mxu0 0
        %2131 = vmatprep.subr.bf16.mxu0 0
        %2132 = vmatpush1.bf16.msra.mxu0 0
        %2133 = vmatprep.subr.bf16.mxu0 0
        %2134 = vmatpush1.bf16.msra.mxu0 0
        %2135 = vmatprep.mubr.bf16.mxu0 0
        %2136 = vmatmul.mubr.bf16.gmra.mrb[0].mxu0 %v2101
        %v2137 = vpop.f32.mrb[0].mxu0
        %v2138 = vadd.f32 0.0, %v2137
        %v2139 = vpop.f32.mrb[0].mxu0
        %v2140 = vpop.f32.mrb[0].mxu0
        %v2141 = vpop.f32.mrb[0].mxu0
        %2142 = vdwg.mxu0
        %v2143 = vmul.f32 %v2138, 2.828427
        %2145 = vrot.lane.b32.xlu0 %v2143, 64
        %v2146 = vpop.permute.xlu0 %2145
        %v2148 = vadd.f32 %v2040, %v2146
        %v2149 = vpack.c.bf16 %v2097, %v2097
        %2151 = vrot.lane.b32.xlu0 %v2149, 96
        %v2152 = vpop.permute.xlu0 %2151
        %v2154 = vsel %vm1132, %v2045, 0
        %v2157 = vsel %vm1132, %v2152, 0
        %2159 = vmatprep.subr.bf16.mxu0 0
        %2160 = vmatpush1.bf16.xpose.msra.mxu0 %v2157
        %2161 = vmatprep.subr.bf16.mxu0 0
        %2162 = vmatpush1.bf16.xpose.msra.mxu0 0
        %2163 = vmatprep.subr.bf16.mxu0 0
        %2164 = vmatpush1.bf16.xpose.msra.mxu0 0
        %2165 = vmatprep.subr.bf16.mxu0 0
        %2166 = vmatpush1.bf16.xpose.msra.mxu0 0
        %2167 = vmatprep.subr.bf16.mxu0 0
        %2168 = vmatpush1.bf16.xpose.msra.mxu0 0
        %2169 = vmatprep.subr.bf16.mxu0 0
        %2170 = vmatpush1.bf16.xpose.msra.mxu0 0
        %2171 = vmatprep.subr.bf16.mxu0 0
        %2172 = vmatpush1.bf16.xpose.msra.mxu0 0
        %2173 = vmatprep.subr.bf16.mxu0 0
        %2174 = vmatpush1.bf16.xpose.msra.mxu0 0
        %2175 = vmatprep.subr.bf16.mxu0 0
        %2176 = vmatpush1.bf16.xpose.msra.mxu0 0
        %2177 = vmatprep.subr.bf16.mxu0 0
        %2178 = vmatpush1.bf16.xpose.msra.mxu0 0
        %2179 = vmatprep.subr.bf16.mxu0 0
        %2180 = vmatpush1.bf16.xpose.msra.mxu0 0
        %2181 = vmatprep.subr.bf16.mxu0 0
        %2182 = vmatpush1.bf16.xpose.msra.mxu0 0
        %2183 = vmatprep.subr.bf16.mxu0 0
        %2184 = vmatpush1.bf16.xpose.msra.mxu0 0
        %2185 = vmatprep.subr.bf16.mxu0 0
        %2186 = vmatpush1.bf16.xpose.msra.mxu0 0
        %2187 = vmatprep.subr.bf16.mxu0 0
        %2188 = vmatpush1.bf16.xpose.msra.mxu0 0
        %2189 = vmatprep.subr.bf16.mxu0 0
        %2190 = vmatpush1.bf16.xpose.msra.mxu0 0
        %2191 = vmatprep.mubr.bf16.mxu0 0
        %2192 = vmatmul.mubr.bf16.gmra.mrb[0].mxu0 %v2154
        %v2193 = vpop.f32.mrb[0].mxu0
        %v2194 = vadd.f32 0.0, %v2193
        %v2195 = vpop.f32.mrb[0].mxu0
        %v2196 = vpop.f32.mrb[0].mxu0
        %v2197 = vpop.f32.mrb[0].mxu0
        %2198 = vdwg.mxu0
        %v2199 = vmul.f32 %v2194, 0.35355338
        %v2200 = vadd.f32 %v2199, %v1296
        %v2201 = vsel %vm1132, %v2200, -inf
        %2202 = vmax.xlane.f32.xlu0 %v2201
        %v2203 = vpop.xlane.xlu0 %2202
        %v2204 = vsub.f32 %v2200, %v2203
        %v2205 = vmul.f32 %v2204, 1.442695
        %v2206 = vpow.pop %v2205
        %v2207 = vsel %vm1132, %v2206, 0.0
        %2208 = vadd.xlane.f32.xlu0 %v2207
        %v2209 = vpop.xlane.xlu0 %2208
        %v2210 = vrcp.pop %v2209
        %v2211 = vmul.f32 %v2206, %v2210
        %v2212 = vpack.c.bf16 %v2211, %v2211
        %v2213 = vpack.c.bf16 %v2148, %v2148
        %2215 = vrot.lane.b32.xlu0 %v2213, 64
        %v2216 = vpop.permute.xlu0 %2215
        %v2218 = vsel %vm1132, %v2212, 0
        %v2221 = vsel %vm1136, %v2216, 0
        %2223 = vmatprep.subr.bf16.mxu0 0
        %2224 = vmatpush1.bf16.msra.mxu0 %v2221
        %2225 = vmatprep.subr.bf16.mxu0 0
        %2226 = vmatpush1.bf16.msra.mxu0 0
        %2227 = vmatprep.subr.bf16.mxu0 0
        %2228 = vmatpush1.bf16.msra.mxu0 0
        %2229 = vmatprep.subr.bf16.mxu0 0
        %2230 = vmatpush1.bf16.msra.mxu0 0
        %2231 = vmatprep.subr.bf16.mxu0 0
        %2232 = vmatpush1.bf16.msra.mxu0 0
        %2233 = vmatprep.subr.bf16.mxu0 0
        %2234 = vmatpush1.bf16.msra.mxu0 0
        %2235 = vmatprep.subr.bf16.mxu0 0
        %2236 = vmatpush1.bf16.msra.mxu0 0
        %2237 = vmatprep.subr.bf16.mxu0 0
        %2238 = vmatpush1.bf16.msra.mxu0 0
        %2239 = vmatprep.subr.bf16.mxu0 0
        %2240 = vmatpush1.bf16.msra.mxu0 0
        %2241 = vmatprep.subr.bf16.mxu0 0
        %2242 = vmatpush1.bf16.msra.mxu0 0
        %2243 = vmatprep.subr.bf16.mxu0 0
        %2244 = vmatpush1.bf16.msra.mxu0 0
        %2245 = vmatprep.subr.bf16.mxu0 0
        %2246 = vmatpush1.bf16.msra.mxu0 0
        %2247 = vmatprep.subr.bf16.mxu0 0
        %2248 = vmatpush1.bf16.msra.mxu0 0
        %2249 = vmatprep.subr.bf16.mxu0 0
        %2250 = vmatpush1.bf16.msra.mxu0 0
        %2251 = vmatprep.subr.bf16.mxu0 0
        %2252 = vmatpush1.bf16.msra.mxu0 0
        %2253 = vmatprep.subr.bf16.mxu0 0
        %2254 = vmatpush1.bf16.msra.mxu0 0
        %2255 = vmatprep.mubr.bf16.mxu0 0
        %2256 = vmatmul.mubr.bf16.gmra.mrb[0].mxu0 %v2218
        %v2257 = vpop.f32.mrb[0].mxu0
        %v2258 = vadd.f32 0.0, %v2257
        %v2259 = vpop.f32.mrb[0].mxu0
        %v2260 = vpop.f32.mrb[0].mxu0
        %v2261 = vpop.f32.mrb[0].mxu0
        %2262 = vdwg.mxu0
        %2263 = vrot.lane.b32.xlu0 %v2045, 120
        %v2264 = vpop.permute.xlu0 %2263
        %2265 = vrot.lane.b32.xlu0 %v2149, 88
        %v2266 = vpop.permute.xlu0 %2265
        %v2268 = vsel %vm1132, %v2264, 0
        %v2271 = vsel %vm1132, %v2266, 0
        %2273 = vmatprep.subr.bf16.mxu0 0
        %2274 = vmatpush1.bf16.xpose.msra.mxu0 %v2271
        %2275 = vmatprep.subr.bf16.mxu0 0
        %2276 = vmatpush1.bf16.xpose.msra.mxu0 0
        %2277 = vmatprep.subr.bf16.mxu0 0
        %2278 = vmatpush1.bf16.xpose.msra.mxu0 0
        %2279 = vmatprep.subr.bf16.mxu0 0
        %2280 = vmatpush1.bf16.xpose.msra.mxu0 0
        %2281 = vmatprep.subr.bf16.mxu0 0
        %2282 = vmatpush1.bf16.xpose.msra.mxu0 0
        %2283 = vmatprep.subr.bf16.mxu0 0
        %2284 = vmatpush1.bf16.xpose.msra.mxu0 0
        %2285 = vmatprep.subr.bf16.mxu0 0
        %2286 = vmatpush1.bf16.xpose.msra.mxu0 0
        %2287 = vmatprep.subr.bf16.mxu0 0
        %2288 = vmatpush1.bf16.xpose.msra.mxu0 0
        %2289 = vmatprep.subr.bf16.mxu0 0
        %2290 = vmatpush1.bf16.xpose.msra.mxu0 0
        %2291 = vmatprep.subr.bf16.mxu0 0
        %2292 = vmatpush1.bf16.xpose.msra.mxu0 0
        %2293 = vmatprep.subr.bf16.mxu0 0
        %2294 = vmatpush1.bf16.xpose.msra.mxu0 0
        %2295 = vmatprep.subr.bf16.mxu0 0
        %2296 = vmatpush1.bf16.xpose.msra.mxu0 0
        %2297 = vmatprep.subr.bf16.mxu0 0
        %2298 = vmatpush1.bf16.xpose.msra.mxu0 0
        %2299 = vmatprep.subr.bf16.mxu0 0
        %2300 = vmatpush1.bf16.xpose.msra.mxu0 0
        %2301 = vmatprep.subr.bf16.mxu0 0
        %2302 = vmatpush1.bf16.xpose.msra.mxu0 0
        %2303 = vmatprep.subr.bf16.mxu0 0
        %2304 = vmatpush1.bf16.xpose.msra.mxu0 0
        %2305 = vmatprep.mubr.bf16.mxu0 0
        %2306 = vmatmul.mubr.bf16.gmra.mrb[0].mxu0 %v2268
        %v2307 = vpop.f32.mrb[0].mxu0
        %v2308 = vadd.f32 0.0, %v2307
        %v2309 = vpop.f32.mrb[0].mxu0
        %v2310 = vpop.f32.mrb[0].mxu0
        %v2311 = vpop.f32.mrb[0].mxu0
        %2312 = vdwg.mxu0
        %v2313 = vmul.f32 %v2308, 0.35355338
        %v2314 = vadd.f32 %v2313, %v1296
        %v2315 = vsel %vm1132, %v2314, -inf
        %2316 = vmax.xlane.f32.xlu0 %v2315
        %v2317 = vpop.xlane.xlu0 %2316
        %v2318 = vsub.f32 %v2314, %v2317
        %v2319 = vmul.f32 %v2318, 1.442695
        %v2320 = vpow.pop %v2319
        %v2321 = vsel %vm1132, %v2320, 0.0
        %2322 = vadd.xlane.f32.xlu0 %v2321
        %v2323 = vpop.xlane.xlu0 %2322
        %v2324 = vrcp.pop %v2323
        %v2325 = vmul.f32 %v2320, %v2324
        %v2326 = vpack.c.bf16 %v2325, %v2325
        %2327 = vrot.lane.b32.xlu0 %v2213, 56
        %v2328 = vpop.permute.xlu0 %2327
        %v2330 = vsel %vm1132, %v2326, 0
        %v2333 = vsel %vm1136, %v2328, 0
        %2335 = vmatprep.subr.bf16.mxu0 0
        %2336 = vmatpush1.bf16.msra.mxu0 %v2333
        %2337 = vmatprep.subr.bf16.mxu0 0
        %2338 = vmatpush1.bf16.msra.mxu0 0
        %2339 = vmatprep.subr.bf16.mxu0 0
        %2340 = vmatpush1.bf16.msra.mxu0 0
        %2341 = vmatprep.subr.bf16.mxu0 0
        %2342 = vmatpush1.bf16.msra.mxu0 0
        %2343 = vmatprep.subr.bf16.mxu0 0
        %2344 = vmatpush1.bf16.msra.mxu0 0
        %2345 = vmatprep.subr.bf16.mxu0 0
        %2346 = vmatpush1.bf16.msra.mxu0 0
        %2347 = vmatprep.subr.bf16.mxu0 0
        %2348 = vmatpush1.bf16.msra.mxu0 0
        %2349 = vmatprep.subr.bf16.mxu0 0
        %2350 = vmatpush1.bf16.msra.mxu0 0
        %2351 = vmatprep.subr.bf16.mxu0 0
        %2352 = vmatpush1.bf16.msra.mxu0 0
        %2353 = vmatprep.subr.bf16.mxu0 0
        %2354 = vmatpush1.bf16.msra.mxu0 0
        %2355 = vmatprep.subr.bf16.mxu0 0
        %2356 = vmatpush1.bf16.msra.mxu0 0
        %2357 = vmatprep.subr.bf16.mxu0 0
        %2358 = vmatpush1.bf16.msra.mxu0 0
        %2359 = vmatprep.subr.bf16.mxu0 0
        %2360 = vmatpush1.bf16.msra.mxu0 0
        %2361 = vmatprep.subr.bf16.mxu0 0
        %2362 = vmatpush1.bf16.msra.mxu0 0
        %2363 = vmatprep.subr.bf16.mxu0 0
        %2364 = vmatpush1.bf16.msra.mxu0 0
        %2365 = vmatprep.subr.bf16.mxu0 0
        %2366 = vmatpush1.bf16.msra.mxu0 0
        %2367 = vmatprep.mubr.bf16.mxu0 0
        %2368 = vmatmul.mubr.bf16.gmra.mrb[0].mxu0 %v2330
        %v2369 = vpop.f32.mrb[0].mxu0
        %v2370 = vadd.f32 0.0, %v2369
        %v2371 = vpop.f32.mrb[0].mxu0
        %v2372 = vpop.f32.mrb[0].mxu0
        %v2373 = vpop.f32.mrb[0].mxu0
        %2374 = vdwg.mxu0
        %2375 = vrot.lane.b32.xlu0 %v2045, 112
        %v2376 = vpop.permute.xlu0 %2375
        %2377 = vrot.lane.b32.xlu0 %v2149, 80
        %v2378 = vpop.permute.xlu0 %2377
        %v2380 = vsel %vm1132, %v2376, 0
        %v2383 = vsel %vm1132, %v2378, 0
        %2385 = vmatprep.subr.bf16.mxu0 0
        %2386 = vmatpush1.bf16.xpose.msra.mxu0 %v2383
        %2387 = vmatprep.subr.bf16.mxu0 0
        %2388 = vmatpush1.bf16.xpose.msra.mxu0 0
        %2389 = vmatprep.subr.bf16.mxu0 0
        %2390 = vmatpush1.bf16.xpose.msra.mxu0 0
        %2391 = vmatprep.subr.bf16.mxu0 0
        %2392 = vmatpush1.bf16.xpose.msra.mxu0 0
        %2393 = vmatprep.subr.bf16.mxu0 0
        %2394 = vmatpush1.bf16.xpose.msra.mxu0 0
        %2395 = vmatprep.subr.bf16.mxu0 0
        %2396 = vmatpush1.bf16.xpose.msra.mxu0 0
        %2397 = vmatprep.subr.bf16.mxu0 0
        %2398 = vmatpush1.bf16.xpose.msra.mxu0 0
        %2399 = vmatprep.subr.bf16.mxu0 0
        %2400 = vmatpush1.bf16.xpose.msra.mxu0 0
        %2401 = vmatprep.subr.bf16.mxu0 0
        %2402 = vmatpush1.bf16.xpose.msra.mxu0 0
        %2403 = vmatprep.subr.bf16.mxu0 0
        %2404 = vmatpush1.bf16.xpose.msra.mxu0 0
        %2405 = vmatprep.subr.bf16.mxu0 0
        %2406 = vmatpush1.bf16.xpose.msra.mxu0 0
        %2407 = vmatprep.subr.bf16.mxu0 0
        %2408 = vmatpush1.bf16.xpose.msra.mxu0 0
        %2409 = vmatprep.subr.bf16.mxu0 0
        %2410 = vmatpush1.bf16.xpose.msra.mxu0 0
        %2411 = vmatprep.subr.bf16.mxu0 0
        %2412 = vmatpush1.bf16.xpose.msra.mxu0 0
        %2413 = vmatprep.subr.bf16.mxu0 0
        %2414 = vmatpush1.bf16.xpose.msra.mxu0 0
        %2415 = vmatprep.subr.bf16.mxu0 0
        %2416 = vmatpush1.bf16.xpose.msra.mxu0 0
        %2417 = vmatprep.mubr.bf16.mxu0 0
        %2418 = vmatmul.mubr.bf16.gmra.mrb[0].mxu0 %v2380
        %v2419 = vpop.f32.mrb[0].mxu0
        %v2420 = vadd.f32 0.0, %v2419
        %v2421 = vpop.f32.mrb[0].mxu0
        %v2422 = vpop.f32.mrb[0].mxu0
        %v2423 = vpop.f32.mrb[0].mxu0
        %2424 = vdwg.mxu0
        %v2425 = vmul.f32 %v2420, 0.35355338
        %v2426 = vadd.f32 %v2425, %v1296
        %v2427 = vsel %vm1132, %v2426, -inf
        %2428 = vmax.xlane.f32.xlu0 %v2427
        %v2429 = vpop.xlane.xlu0 %2428
        %v2430 = vsub.f32 %v2426, %v2429
        %v2431 = vmul.f32 %v2430, 1.442695
        %v2432 = vpow.pop %v2431
        %v2433 = vsel %vm1132, %v2432, 0.0
        %2434 = vadd.xlane.f32.xlu0 %v2433
        %v2435 = vpop.xlane.xlu0 %2434
        %v2436 = vrcp.pop %v2435
        %v2437 = vmul.f32 %v2432, %v2436
        %v2438 = vpack.c.bf16 %v2437, %v2437
        %2439 = vrot.lane.b32.xlu0 %v2213, 48
        %v2440 = vpop.permute.xlu0 %2439
        %v2442 = vsel %vm1132, %v2438, 0
        %v2445 = vsel %vm1136, %v2440, 0
        %2447 = vmatprep.subr.bf16.mxu0 0
        %2448 = vmatpush1.bf16.msra.mxu0 %v2445
        %2449 = vmatprep.subr.bf16.mxu0 0
        %2450 = vmatpush1.bf16.msra.mxu0 0
        %2451 = vmatprep.subr.bf16.mxu0 0
        %2452 = vmatpush1.bf16.msra.mxu0 0
        %2453 = vmatprep.subr.bf16.mxu0 0
        %2454 = vmatpush1.bf16.msra.mxu0 0
        %2455 = vmatprep.subr.bf16.mxu0 0
        %2456 = vmatpush1.bf16.msra.mxu0 0
        %2457 = vmatprep.subr.bf16.mxu0 0
        %2458 = vmatpush1.bf16.msra.mxu0 0
        %2459 = vmatprep.subr.bf16.mxu0 0
        %2460 = vmatpush1.bf16.msra.mxu0 0
        %2461 = vmatprep.subr.bf16.mxu0 0
        %2462 = vmatpush1.bf16.msra.mxu0 0
        %2463 = vmatprep.subr.bf16.mxu0 0
        %2464 = vmatpush1.bf16.msra.mxu0 0
        %2465 = vmatprep.subr.bf16.mxu0 0
        %2466 = vmatpush1.bf16.msra.mxu0 0
        %2467 = vmatprep.subr.bf16.mxu0 0
        %2468 = vmatpush1.bf16.msra.mxu0 0
        %2469 = vmatprep.subr.bf16.mxu0 0
        %2470 = vmatpush1.bf16.msra.mxu0 0
        %2471 = vmatprep.subr.bf16.mxu0 0
        %2472 = vmatpush1.bf16.msra.mxu0 0
        %2473 = vmatprep.subr.bf16.mxu0 0
        %2474 = vmatpush1.bf16.msra.mxu0 0
        %2475 = vmatprep.subr.bf16.mxu0 0
        %2476 = vmatpush1.bf16.msra.mxu0 0
        %2477 = vmatprep.subr.bf16.mxu0 0
        %2478 = vmatpush1.bf16.msra.mxu0 0
        %2479 = vmatprep.mubr.bf16.mxu0 0
        %2480 = vmatmul.mubr.bf16.gmra.mrb[0].mxu0 %v2442
        %v2481 = vpop.f32.mrb[0].mxu0
        %v2482 = vadd.f32 0.0, %v2481
        %v2483 = vpop.f32.mrb[0].mxu0
        %v2484 = vpop.f32.mrb[0].mxu0
        %v2485 = vpop.f32.mrb[0].mxu0
        %2486 = vdwg.mxu0
        %2487 = vrot.lane.b32.xlu0 %v2045, 104
        %v2488 = vpop.permute.xlu0 %2487
        %2489 = vrot.lane.b32.xlu0 %v2149, 72
        %v2490 = vpop.permute.xlu0 %2489
        %v2492 = vsel %vm1132, %v2488, 0
        %v2495 = vsel %vm1132, %v2490, 0
        %2497 = vmatprep.subr.bf16.mxu0 0
        %2498 = vmatpush1.bf16.xpose.msra.mxu0 %v2495
        %2499 = vmatprep.subr.bf16.mxu0 0
        %2500 = vmatpush1.bf16.xpose.msra.mxu0 0
        %2501 = vmatprep.subr.bf16.mxu0 0
        %2502 = vmatpush1.bf16.xpose.msra.mxu0 0
        %2503 = vmatprep.subr.bf16.mxu0 0
        %2504 = vmatpush1.bf16.xpose.msra.mxu0 0
        %2505 = vmatprep.subr.bf16.mxu0 0
        %2506 = vmatpush1.bf16.xpose.msra.mxu0 0
        %2507 = vmatprep.subr.bf16.mxu0 0
        %2508 = vmatpush1.bf16.xpose.msra.mxu0 0
        %2509 = vmatprep.subr.bf16.mxu0 0
        %2510 = vmatpush1.bf16.xpose.msra.mxu0 0
        %2511 = vmatprep.subr.bf16.mxu0 0
        %2512 = vmatpush1.bf16.xpose.msra.mxu0 0
        %2513 = vmatprep.subr.bf16.mxu0 0
        %2514 = vmatpush1.bf16.xpose.msra.mxu0 0
        %2515 = vmatprep.subr.bf16.mxu0 0
        %2516 = vmatpush1.bf16.xpose.msra.mxu0 0
        %2517 = vmatprep.subr.bf16.mxu0 0
        %2518 = vmatpush1.bf16.xpose.msra.mxu0 0
        %2519 = vmatprep.subr.bf16.mxu0 0
        %2520 = vmatpush1.bf16.xpose.msra.mxu0 0
        %2521 = vmatprep.subr.bf16.mxu0 0
        %2522 = vmatpush1.bf16.xpose.msra.mxu0 0
        %2523 = vmatprep.subr.bf16.mxu0 0
        %2524 = vmatpush1.bf16.xpose.msra.mxu0 0
        %2525 = vmatprep.subr.bf16.mxu0 0
        %2526 = vmatpush1.bf16.xpose.msra.mxu0 0
        %2527 = vmatprep.subr.bf16.mxu0 0
        %2528 = vmatpush1.bf16.xpose.msra.mxu0 0
        %2529 = vmatprep.mubr.bf16.mxu0 0
        %2530 = vmatmul.mubr.bf16.gmra.mrb[0].mxu0 %v2492
        %v2531 = vpop.f32.mrb[0].mxu0
        %v2532 = vadd.f32 0.0, %v2531
        %v2533 = vpop.f32.mrb[0].mxu0
        %v2534 = vpop.f32.mrb[0].mxu0
        %v2535 = vpop.f32.mrb[0].mxu0
        %2536 = vdwg.mxu0
        %v2537 = vmul.f32 %v2532, 0.35355338
        %v2538 = vadd.f32 %v2537, %v1296
        %v2539 = vsel %vm1132, %v2538, -inf
        %2540 = vmax.xlane.f32.xlu0 %v2539
        %v2541 = vpop.xlane.xlu0 %2540
        %v2542 = vsub.f32 %v2538, %v2541
        %v2543 = vmul.f32 %v2542, 1.442695
        %v2544 = vpow.pop %v2543
        %v2545 = vsel %vm1132, %v2544, 0.0
        %2546 = vadd.xlane.f32.xlu0 %v2545
        %v2547 = vpop.xlane.xlu0 %2546
        %v2548 = vrcp.pop %v2547
        %v2549 = vmul.f32 %v2544, %v2548
        %v2550 = vpack.c.bf16 %v2549, %v2549
        %2551 = vrot.lane.b32.xlu0 %v2213, 40
        %v2552 = vpop.permute.xlu0 %2551
        %v2554 = vsel %vm1132, %v2550, 0
        %v2557 = vsel %vm1136, %v2552, 0
        %2559 = vmatprep.subr.bf16.mxu0 0
        %2560 = vmatpush1.bf16.msra.mxu0 %v2557
        %2561 = vmatprep.subr.bf16.mxu0 0
        %2562 = vmatpush1.bf16.msra.mxu0 0
        %2563 = vmatprep.subr.bf16.mxu0 0
        %2564 = vmatpush1.bf16.msra.mxu0 0
        %2565 = vmatprep.subr.bf16.mxu0 0
        %2566 = vmatpush1.bf16.msra.mxu0 0
        %2567 = vmatprep.subr.bf16.mxu0 0
        %2568 = vmatpush1.bf16.msra.mxu0 0
        %2569 = vmatprep.subr.bf16.mxu0 0
        %2570 = vmatpush1.bf16.msra.mxu0 0
        %2571 = vmatprep.subr.bf16.mxu0 0
        %2572 = vmatpush1.bf16.msra.mxu0 0
        %2573 = vmatprep.subr.bf16.mxu0 0
        %2574 = vmatpush1.bf16.msra.mxu0 0
        %2575 = vmatprep.subr.bf16.mxu0 0
        %2576 = vmatpush1.bf16.msra.mxu0 0
        %2577 = vmatprep.subr.bf16.mxu0 0
        %2578 = vmatpush1.bf16.msra.mxu0 0
        %2579 = vmatprep.subr.bf16.mxu0 0
        %2580 = vmatpush1.bf16.msra.mxu0 0
        %2581 = vmatprep.subr.bf16.mxu0 0
        %2582 = vmatpush1.bf16.msra.mxu0 0
        %2583 = vmatprep.subr.bf16.mxu0 0
        %2584 = vmatpush1.bf16.msra.mxu0 0
        %2585 = vmatprep.subr.bf16.mxu0 0
        %2586 = vmatpush1.bf16.msra.mxu0 0
        %2587 = vmatprep.subr.bf16.mxu0 0
        %2588 = vmatpush1.bf16.msra.mxu0 0
        %2589 = vmatprep.subr.bf16.mxu0 0
        %2590 = vmatpush1.bf16.msra.mxu0 0
        %2591 = vmatprep.mubr.bf16.mxu0 0
        %2592 = vmatmul.mubr.bf16.gmra.mrb[0].mxu0 %v2554
        %v2593 = vpop.f32.mrb[0].mxu0
        %v2594 = vadd.f32 0.0, %v2593
        %v2595 = vpop.f32.mrb[0].mxu0
        %v2596 = vpop.f32.mrb[0].mxu0
        %v2597 = vpop.f32.mrb[0].mxu0
        %2598 = vdwg.mxu0
        %2600 = vrot.lane.b32.xlu0 %v2370, 8
        %v2601 = vpop.permute.xlu0 %2600
        %2604 = vrot.lane.b32.xlu0 %v2482, 16
        %v2605 = vpop.permute.xlu0 %2604
        %2608 = vrot.lane.b32.xlu0 %v2594, 24
        %v2609 = vpop.permute.xlu0 %2608
        %v2611 = vsel %vm1132, %v2258, %v2601
        %v2612 = vsel %vm968, %v2611, %v2605
        %v2613 = vsel %vm1711, %v2612, %v2609
        %v2614 = vpack.c.bf16 %v2613, %v2613
        %v2616 = vsel %vm1083, %v2614, 0
        %2618 = vmatprep.subr.bf16.mxu0 0
        %2619 = vmatpush1.bf16.msra.mxu0 %v1733
        %2620 = vmatprep.subr.bf16.mxu0 0
        %2621 = vmatpush1.bf16.msra.mxu0 %v1734
        %2622 = vmatprep.subr.bf16.mxu0 0
        %2623 = vmatpush1.bf16.msra.mxu0 0
        %2624 = vmatprep.subr.bf16.mxu0 0
        %2625 = vmatpush1.bf16.msra.mxu0 0
        %2626 = vmatprep.subr.bf16.mxu0 0
        %2627 = vmatpush1.bf16.msra.mxu0 0
        %2628 = vmatprep.subr.bf16.mxu0 0
        %2629 = vmatpush1.bf16.msra.mxu0 0
        %2630 = vmatprep.subr.bf16.mxu0 0
        %2631 = vmatpush1.bf16.msra.mxu0 0
        %2632 = vmatprep.subr.bf16.mxu0 0
        %2633 = vmatpush1.bf16.msra.mxu0 0
        %2634 = vmatprep.subr.bf16.mxu0 0
        %2635 = vmatpush1.bf16.msra.mxu0 0
        %2636 = vmatprep.subr.bf16.mxu0 0
        %2637 = vmatpush1.bf16.msra.mxu0 0
        %2638 = vmatprep.subr.bf16.mxu0 0
        %2639 = vmatpush1.bf16.msra.mxu0 0
        %2640 = vmatprep.subr.bf16.mxu0 0
        %2641 = vmatpush1.bf16.msra.mxu0 0
        %2642 = vmatprep.subr.bf16.mxu0 0
        %2643 = vmatpush1.bf16.msra.mxu0 0
        %2644 = vmatprep.subr.bf16.mxu0 0
        %2645 = vmatpush1.bf16.msra.mxu0 0
        %2646 = vmatprep.subr.bf16.mxu0 0
        %2647 = vmatpush1.bf16.msra.mxu0 0
        %2648 = vmatprep.subr.bf16.mxu0 0
        %2649 = vmatpush1.bf16.msra.mxu0 0
        %2650 = vmatprep.mubr.bf16.mxu0 0
        %2651 = vmatmul.mubr.bf16.gmra.mrb[0].mxu0 %v2616
        %v2652 = vpop.f32.mrb[0].mxu0
        %v2653 = vadd.f32 %v1723, %v2652
        %v2654 = vpop.f32.mrb[0].mxu0
        %v2655 = vpop.f32.mrb[0].mxu0
        %v2656 = vpop.f32.mrb[0].mxu0
        %2657 = vdwg.mxu0
        %v2658 = vadd.f32 %v2000, %v2653
        %v2659 = vsel %vm1083, %v2658, 0.0
        %2660 = vadd.xlane.f32.xlu0 %v2659
        %v2661 = vpop.xlane.xlu0 %2660
        %v2662 = vmul.f32 %v2661, %v1784
        %v2663 = vsub.f32 %v2658, %v2662
        %v2664 = vmul.f32 %v2663, %v2663
        %v2665 = vsel %vm1083, %v2664, 0.0
        %2666 = vadd.xlane.f32.xlu0 %v2665
        %v2667 = vpop.xlane.xlu0 %2666
        %v2668 = vmul.f32 %v2667, %v1784
        %v2669 = vadd.f32 %v2668, 1e-12
        %v2670 = vrsqrt.pop %v2669
        %v2671 = vmul.f32 %v2663, %v2670
        %v2672 = vmul.f32 %v2671, %v1800
        %v2673 = vadd.f32 %v2672, %v1808
        %v2674 = vpack.c.bf16 %v2673, %v2673
        %v2676 = vsel %vm1083, %v2674, 0
        %2678 = vmatprep.subr.bf16.mxu0 0
        %2679 = vmatpush1.bf16.msra.mxu0 %v1831
        %2680 = vmatprep.subr.bf16.mxu0 0
        %2681 = vmatpush1.bf16.msra.mxu0 %v1832
        %2682 = vmatprep.subr.bf16.mxu0 0
        %2683 = vmatpush1.bf16.msra.mxu0 0
        %2684 = vmatprep.subr.bf16.mxu0 0
        %2685 = vmatpush1.bf16.msra.mxu0 0
        %2686 = vmatprep.subr.bf16.mxu0 0
        %2687 = vmatpush1.bf16.msra.mxu0 0
        %2688 = vmatprep.subr.bf16.mxu0 0
        %2689 = vmatpush1.bf16.msra.mxu0 0
        %2690 = vmatprep.subr.bf16.mxu0 0
        %2691 = vmatpush1.bf16.msra.mxu0 0
        %2692 = vmatprep.subr.bf16.mxu0 0
        %2693 = vmatpush1.bf16.msra.mxu0 0
        %2694 = vmatprep.subr.bf16.mxu0 0
        %2695 = vmatpush1.bf16.msra.mxu0 0
        %2696 = vmatprep.subr.bf16.mxu0 0
        %2697 = vmatpush1.bf16.msra.mxu0 0
        %2698 = vmatprep.subr.bf16.mxu0 0
        %2699 = vmatpush1.bf16.msra.mxu0 0
        %2700 = vmatprep.subr.bf16.mxu0 0
        %2701 = vmatpush1.bf16.msra.mxu0 0
        %2702 = vmatprep.subr.bf16.mxu0 0
        %2703 = vmatpush1.bf16.msra.mxu0 0
        %2704 = vmatprep.subr.bf16.mxu0 0
        %2705 = vmatpush1.bf16.msra.mxu0 0
        %2706 = vmatprep.subr.bf16.mxu0 0
        %2707 = vmatpush1.bf16.msra.mxu0 0
        %2708 = vmatprep.subr.bf16.mxu0 0
        %2709 = vmatpush1.bf16.msra.mxu0 0
        %2710 = vmatprep.mubr.bf16.mxu0 0
        %2711 = vmatmul.mubr.bf16.gmra.mrb[0].mxu0 %v2676
        %v2712 = vpop.f32.mrb[0].mxu0
        %v2713 = vadd.f32 %v1821, %v2712
        %v2714 = vpop.f32.mrb[0].mxu0
        %v2715 = vpop.f32.mrb[0].mxu0
        %v2716 = vpop.f32.mrb[0].mxu0
        %2717 = vdwg.mxu0
        %v2718 = vmul.f32 %v2713, 0.5
        %v2719 = vmul.f32 %v2713, 0.044715
        %v2720 = vmul.f32 %v2719, %v2713
        %v2721 = vmul.f32 %v2720, %v2713
        %v2722 = vadd.f32 %v2713, %v2721
        %v2723 = vmul.f32 %v2722, 0.7978846
        %v2724 = vtanh.pop %v2723
        %v2725 = vadd.f32 %v2724, 1.0
        %v2726 = vmul.f32 %v2718, %v2725
        %v2727 = vpack.c.bf16 %v2726, %v2726
        %v2729 = vsel %vm1927, %v2727, 0
        %2731 = vmatprep.subr.bf16.mxu0 0
        %2732 = vmatpush1.bf16.msra.mxu0 %v1919
        %2733 = vmatprep.subr.bf16.mxu0 0
        %2734 = vmatpush1.bf16.msra.mxu0 %v1920
        %2735 = vmatprep.subr.bf16.mxu0 0
        %2736 = vmatpush1.bf16.msra.mxu0 %v1921
        %2737 = vmatprep.subr.bf16.mxu0 0
        %2738 = vmatpush1.bf16.msra.mxu0 %v1922
        %2739 = vmatprep.subr.bf16.mxu0 0
        %2740 = vmatpush1.bf16.msra.mxu0 0
        %2741 = vmatprep.subr.bf16.mxu0 0
        %2742 = vmatpush1.bf16.msra.mxu0 0
        %2743 = vmatprep.subr.bf16.mxu0 0
        %2744 = vmatpush1.bf16.msra.mxu0 0
        %2745 = vmatprep.subr.bf16.mxu0 0
        %2746 = vmatpush1.bf16.msra.mxu0 0
        %2747 = vmatprep.subr.bf16.mxu0 0
        %2748 = vmatpush1.bf16.msra.mxu0 0
        %2749 = vmatprep.subr.bf16.mxu0 0
        %2750 = vmatpush1.bf16.msra.mxu0 0
        %2751 = vmatprep.subr.bf16.mxu0 0
        %2752 = vmatpush1.bf16.msra.mxu0 0
        %2753 = vmatprep.subr.bf16.mxu0 0
        %2754 = vmatpush1.bf16.msra.mxu0 0
        %2755 = vmatprep.subr.bf16.mxu0 0
        %2756 = vmatpush1.bf16.msra.mxu0 0
        %2757 = vmatprep.subr.bf16.mxu0 0
        %2758 = vmatpush1.bf16.msra.mxu0 0
        %2759 = vmatprep.subr.bf16.mxu0 0
        %2760 = vmatpush1.bf16.msra.mxu0 0
        %2761 = vmatprep.subr.bf16.mxu0 0
        %2762 = vmatpush1.bf16.msra.mxu0 0
        %2763 = vmatprep.mubr.bf16.mxu0 0
        %2764 = vmatmul.mubr.bf16.gmra.mrb[0].mxu0 %v2729
        %v2765 = vpop.f32.mrb[0].mxu0
        %v2766 = vadd.f32 %v1901, %v2765
        %v2767 = vpop.f32.mrb[0].mxu0
        %v2768 = vpop.f32.mrb[0].mxu0
        %v2769 = vpop.f32.mrb[0].mxu0
        %2770 = vdwg.mxu0
        %v2771 = vadd.f32 %v2673, %v2766
        %v2772 = vsel %vm1083, %v2771, 0.0
        %2773 = vadd.xlane.f32.xlu0 %v2772
        %v2774 = vpop.xlane.xlu0 %2773
        %v2775 = vmul.f32 %v2774, %v1784
        %v2776 = vsub.f32 %v2771, %v2775
        %v2777 = vmul.f32 %v2776, %v2776
        %v2778 = vsel %vm1083, %v2777, 0.0
        %2779 = vadd.xlane.f32.xlu0 %v2778
        %v2780 = vpop.xlane.xlu0 %2779
        %v2781 = vmul.f32 %v2780, %v1784
        %v2782 = vadd.f32 %v2781, 1e-12
        %v2783 = vrsqrt.pop %v2782
        %v2784 = vmul.f32 %v2776, %v2783
        %v2785 = vmul.f32 %v2784, %v1990
        %v2786 = vadd.f32 %v2785, %v1998
        %v2787 = vpack.c.bf16 %v2786, %v2786
        %v2788 = vld [vmem:[%s21] sm:$0xf]
        %v2789 = vld [vmem:[%s21 + $0x4] sm:$0xf]
        %v2790 = vld [vmem:[%s21 + $0x8] sm:$0xf]
        %v2791 = vld [vmem:[%s21 + $0xc] sm:$0xf]
        %v2792 = vld [vmem:[%s22] sm:$0x1]
        %v2797 = vunpack.c.l.b16 %v2788
        %v2798 = vunpack.c.l.b16 %v2789
        %v2799 = vunpack.c.l.b16 %v2790
        %v2800 = vunpack.c.l.b16 %v2791
        %v2801 = vpack.c.b16 %v2798, %v2797
        %v2802 = vpack.c.b16 %v2800, %v2799
        %v2806 = vsel %vm1083, %v2787, 0
        %2808 = vmatprep.subr.bf16.mxu0 0
        %2809 = vmatpush1.bf16.msra.mxu0 %v2801
        %2810 = vmatprep.subr.bf16.mxu0 0
        %2811 = vmatpush1.bf16.msra.mxu0 %v2802
        %2812 = vmatprep.subr.bf16.mxu0 0
        %2813 = vmatpush1.bf16.msra.mxu0 0
        %2814 = vmatprep.subr.bf16.mxu0 0
        %2815 = vmatpush1.bf16.msra.mxu0 0
        %2816 = vmatprep.subr.bf16.mxu0 0
        %2817 = vmatpush1.bf16.msra.mxu0 0
        %2818 = vmatprep.subr.bf16.mxu0 0
        %2819 = vmatpush1.bf16.msra.mxu0 0
        %2820 = vmatprep.subr.bf16.mxu0 0
        %2821 = vmatpush1.bf16.msra.mxu0 0
        %2822 = vmatprep.subr.bf16.mxu0 0
        %2823 = vmatpush1.bf16.msra.mxu0 0
        %2824 = vmatprep.subr.bf16.mxu0 0
        %2825 = vmatpush1.bf16.msra.mxu0 0
        %2826 = vmatprep.subr.bf16.mxu0 0
        %2827 = vmatpush1.bf16.msra.mxu0 0
        %2828 = vmatprep.subr.bf16.mxu0 0
        %2829 = vmatpush1.bf16.msra.mxu0 0
        %2830 = vmatprep.subr.bf16.mxu0 0
        %2831 = vmatpush1.bf16.msra.mxu0 0
        %2832 = vmatprep.subr.bf16.mxu0 0
        %2833 = vmatpush1.bf16.msra.mxu0 0
        %2834 = vmatprep.subr.bf16.mxu0 0
        %2835 = vmatpush1.bf16.msra.mxu0 0
        %2836 = vmatprep.subr.bf16.mxu0 0
        %2837 = vmatpush1.bf16.msra.mxu0 0
        %2838 = vmatprep.subr.bf16.mxu0 0
        %2839 = vmatpush1.bf16.msra.mxu0 0
        %2840 = vmatprep.mubr.bf16.mxu0 0
        %2841 = vmatmul.mubr.bf16.gmra.mrb[0].mxu0 %v2806
        %v2842 = vpop.f32.mrb[0].mxu0
        %v2843 = vadd.f32 %v2792, %v2842
        %v2844 = vpop.f32.mrb[0].mxu0
        %v2845 = vpop.f32.mrb[0].mxu0
        %v2846 = vpop.f32.mrb[0].mxu0
        %2847 = vdwg.mxu0
        %v2848 = vtanh.pop %v2843
        %v2849 = vld [vmem:[%s845] sm:$0x1]
        %v2850 = vadd.f32 %v2848, %v2849
        %v2851 = vpack.c.bf16 %v2850, %v2850
        %v2852 = vld [vmem:[%s23] sm:$0xf]
        %v2853 = vld [vmem:[%s23 + $0x4] sm:$0xf]
        %v2854 = vld [vmem:[%s23 + $0x8] sm:$0xf]
        %v2855 = vld [vmem:[%s23 + $0xc] sm:$0xf]
        %v2856 = vld [vmem:[%s24] sm:$0x1]
        %v2861 = vunpack.c.l.b16 %v2852
        %v2862 = vunpack.c.l.b16 %v2853
        %v2863 = vunpack.c.l.b16 %v2854
        %v2864 = vunpack.c.l.b16 %v2855
        %v2865 = vpack.c.b16 %v2862, %v2861
        %v2866 = vpack.c.b16 %v2864, %v2863
        %v2870 = vsel %vm1083, %v2851, 0
        %2872 = vmatprep.subr.bf16.mxu0 0
        %2873 = vmatpush1.bf16.msra.mxu0 %v2865
        %2874 = vmatprep.subr.bf16.mxu0 0
        %2875 = vmatpush1.bf16.msra.mxu0 %v2866
        %2876 = vmatprep.subr.bf16.mxu0 0
        %2877 = vmatpush1.bf16.msra.mxu0 0
        %2878 = vmatprep.subr.bf16.mxu0 0
        %2879 = vmatpush1.bf16.msra.mxu0 0
        %2880 = vmatprep.subr.bf16.mxu0 0
        %2881 = vmatpush1.bf16.msra.mxu0 0
        %2882 = vmatprep.subr.bf16.mxu0 0
        %2883 = vmatpush1.bf16.msra.mxu0 0
        %2884 = vmatprep.subr.bf16.mxu0 0
        %2885 = vmatpush1.bf16.msra.mxu0 0
        %2886 = vmatprep.subr.bf16.mxu0 0
        %2887 = vmatpush1.bf16.msra.mxu0 0
        %2888 = vmatprep.subr.bf16.mxu0 0
        %2889 = vmatpush1.bf16.msra.mxu0 0
        %2890 = vmatprep.subr.bf16.mxu0 0
        %2891 = vmatpush1.bf16.msra.mxu0 0
        %2892 = vmatprep.subr.bf16.mxu0 0
        %2893 = vmatpush1.bf16.msra.mxu0 0
        %2894 = vmatprep.subr.bf16.mxu0 0
        %2895 = vmatpush1.bf16.msra.mxu0 0
        %2896 = vmatprep.subr.bf16.mxu0 0
        %2897 = vmatpush1.bf16.msra.mxu0 0
        %2898 = vmatprep.subr.bf16.mxu0 0
        %2899 = vmatpush1.bf16.msra.mxu0 0
        %2900 = vmatprep.subr.bf16.mxu0 0
        %2901 = vmatpush1.bf16.msra.mxu0 0
        %2902 = vmatprep.subr.bf16.mxu0 0
        %2903 = vmatpush1.bf16.msra.mxu0 0
        %2904 = vmatprep.mubr.bf16.mxu0 0
        %2905 = vmatmul.mubr.bf16.gmra.mrb[0].mxu0 %v2870
        %v2906 = vpop.f32.mrb[0].mxu0
        %v2907 = vadd.f32 %v2856, %v2906
        %v2908 = vpop.f32.mrb[0].mxu0
        %v2909 = vpop.f32.mrb[0].mxu0
        %v2910 = vpop.f32.mrb[0].mxu0
        %2911 = vdwg.mxu0
        %2912 = vst [vmem:[%s961] sm:$0x1] %v2907
        %s2913 = sand.u32 %s598, 1
        %s2914 = scalar_lea.sflag [#allocation4], %s2913
        %s2915 = sand.u32 %s598, 1
        %s2916 = scalar_lea.vmem [#allocation23], %s2915
        // Predicated region
        $region173: #{tpu_custom_call.1} parent=119 // pred_check
          %p2917 = pneg %p608
        $region174: #{tpu_custom_call.1} parent=119 // pred_check_branch
          %2919 = sbr.rel (%p2917) target = $region176
        $region175: #{tpu_custom_call.1} parent=119 // pred_region
          %s2921 = ssub.s32 16, 16
          %2922 = vsyncadd %s2914, %s2921
          %s2923 = smul.addr %s50, 16
          %s2924 = scalar_lea.hbm %s25, %s2923
          %s2926 = sshll.u32 %s2916, 4
          %s2927 = int_to_ptr.vmem [resolvable:$true] %s2926
          %2929 = dma.vmem_to_hbm [thread:$0]  %s2927, 16, %s2924, %s2914
        $region176: #{tpu_custom_call.1} parent=119 // pred_fallthru
          _
      $region120: #{tpu_custom_call.1} parent=5 // pred_fallthru
        _
      %p2930 = scmp.le.s32.totalorder 2, %s45
      // Predicated region
      $region177: #{tpu_custom_call.1} parent=5 // pred_check
        %p2931 = pneg %p2930
      $region178: #{tpu_custom_call.1} parent=5 // pred_check_branch
        %2933 = sbr.rel (%p2931) target = $region180
      $region179: #{tpu_custom_call.1} parent=5 // pred_region
        %s2934 = ssub.s32 %s45, 2
        // Predicated region
        $region181: #{tpu_custom_call.1} parent=179 // pred_check
          %p2935 = pneg %p614
        $region182: #{tpu_custom_call.1} parent=179 // pred_check_branch
          %2937 = sbr.rel (%p2935) target = $region184
        $region183: #{tpu_custom_call.1} parent=179 // pred_region
          %s2938 = sand.u32 %s599, 1
          %s2939 = scalar_lea.sflag [#allocation4], %s2938
          %s2940 = sand.u32 %s599, 1
          %s2941 = scalar_lea.vmem [#allocation23], %s2940
          %2942 = dma.done %s2939, 16
        $region184: #{tpu_custom_call.1} parent=179 // pred_fallthru
          _
      $region180: #{tpu_custom_call.1} parent=5 // pred_fallthru
        _
    $region6: #{tpu_custom_call.1} parent=1 // loop_footer
      %s49 = sadd.s32 1, %s45
    $region7: #{tpu_custom_call.1} parent=1 // loop_footer_branch
      %44 = sbr.rel target = $region3
    $region8: #{tpu_custom_call.1} parent=1 // loop_exit
      _
    %2943 = vsyncpa [#allocation3], 1
    %s2944 = scalar_lea.sflag [#allocation3], 1
    %2945 = vsyncpa %s2944, 1
    %2946 = vsyncpa [#allocation6], 1
    %s2947 = scalar_lea.sflag [#allocation6], 1
    %2948 = vsyncpa %s2947, 1
    %2949 = vsyncpa [#allocation9], 1
    %2950 = vsyncpa [#allocation12], 1
    %2951 = vsyncpa [#allocation15], 1
    %2952 = vsyncpa [#allocation18], 1
    %2953 = vsyncpa [#allocation21], 1
    %2954 = vsyncpa [#allocation4], 1
    %s2955 = scalar_lea.sflag [#allocation4], 1
    %2956 = vsyncpa %s2955, 1

</llo_original>
